<compile_context>
chip_gen: v7x
topology: tpu7x:2x2x1
jax: 0.10.0
libtpu: 0.0.40
codegen_flags: <defaults>
</compile_context>

<pallas_src>
import jax
import jax.numpy as jnp
from jax.experimental import pallas as pl
from jax.experimental.pallas import tpu as pltpu

LOC_EMB_DIM = 32                       # loc_emb_dim
TIM_EMB_DIM = 16                       # tim_emb_dim
POS_EMB_DIM = 16                       # pos_emb_dim
TP_DIM = TIM_EMB_DIM + POS_EMB_DIM     # 32  ([time | pos] segment)
FEAT_DIM = TP_DIM + LOC_EMB_DIM        # 64  (LayerNorm / Linear-in dim)
ACT_DIM = TP_DIM + 2 * LOC_EMB_DIM     # 96  ([time|pos|start|end])
HID_DIM = 10
OUT_DIM = 24
LL = LOC_EMB_DIM * LOC_EMB_DIM         # 1024
PBLOB_ROWS = 88                        # packed small-parameter blob rows
BATCH_TILE = 128                       # batch rows per grid step
LN_EPS = 1e-5


def gen_arrive_kernel(act_ref, wts_ref, ssel_ref, pblob_ref, out_ref):
    """One batch tile.

    act_ref  : (TB, 96)   rows = [time(16) | pos(16) | start(32) | end(32)]
    wts_ref  : (96, 2048) [Wp_pad | tile-selector_pad]; rows 32:64 hold
               Wp[i, k*32+j] = W_bi[k,i,j], rows 64:96 hold the end-tiler.
    ssel_ref : (1024, 32) group-sum selector, ssel[k*32+j, k] = 1
    pblob_ref: (88, 128)  packed b_bi / gamma / beta / b1 / b2 / w1 / w2
    out_ref  : (TB, 24)   log-softmax over arrival hours
    """
    act = act_ref[...]                                    # (TB, 96)
    pb = pblob_ref[...]                                   # (88, 128)

    # ---- nn.Bilinear(start, end) entirely on the MXU ----------------------
    big = jnp.dot(act, wts_ref[...],
                  preferred_element_type=jnp.float32)     # (TB, 2048)
    t = big[:, :LL]         # t[b, k*L+j]   = sum_i start[b,i] * W[k,i,j]
    end_t = big[:, LL:]     # end_t[b,k*L+j]= end[b, j]
    p = t * end_t                                         # (TB, 1024)
    loc = jnp.dot(p, ssel_ref[...],
                  preferred_element_type=jnp.float32)     # (TB, 32)
    loc = loc + pb[0:1, :LOC_EMB_DIM]                     # + bilinear bias

    tp = act[:, :TP_DIM]                                  # (TB, 32) [time|pos]

    # ---- LayerNorm over virtual concat [tp | loc] (never materialized) ----
    inv_d = 1.0 / FEAT_DIM
    mean = (jnp.sum(tp, axis=-1, keepdims=True)
            + jnp.sum(loc, axis=-1, keepdims=True)) * inv_d
    dtp = tp - mean
    dloc = loc - mean
    var = (jnp.sum(dtp * dtp, axis=-1, keepdims=True)
           + jnp.sum(dloc * dloc, axis=-1, keepdims=True)) * inv_d
    inv = jax.lax.rsqrt(var + LN_EPS)
    tp_n = dtp * inv * pb[1:2, :TP_DIM] + pb[3:4, :TP_DIM]
    loc_n = dloc * inv * pb[2:3, :LOC_EMB_DIM] + pb[4:5, :LOC_EMB_DIM]

    # ---- predict: Linear(64,10) -> ReLU -> Linear(10,24), split over segs --
    w1_tp = pb[8:8 + TP_DIM, :HID_DIM]                    # (32, 10)
    w1_loc = pb[8 + TP_DIM:8 + FEAT_DIM, :HID_DIM]        # (32, 10)
    h = (jnp.dot(tp_n, w1_tp, preferred_element_type=jnp.float32)
         + jnp.dot(loc_n, w1_loc, preferred_element_type=jnp.float32)
         + pb[5:6, :HID_DIM])
    h = jnp.maximum(h, 0.0)
    w2 = pb[72:72 + HID_DIM, :OUT_DIM]                    # (10, 24)
    z = jnp.dot(h, w2, preferred_element_type=jnp.float32) + pb[6:7, :OUT_DIM]

    # ---- log_softmax over the 24 logits ------------------------------------
    m = jnp.max(z, axis=-1, keepdims=True)
    zs = z - m
    lse = jnp.log(jnp.sum(jnp.exp(zs), axis=-1, keepdims=True))
    out_ref[...] = zs - lse


def init_params(key):
    """Raw parameters with PyTorch-module semantics (linears pre-transposed)."""
    ks = jax.random.split(key, 11)
    s = 0.1
    return {
        "emb_loc": s * jax.random.normal(ks[0], (2500, LOC_EMB_DIM), jnp.float32),
        "emb_tim": s * jax.random.normal(ks[1], (24, TIM_EMB_DIM), jnp.float32),
        "emb_pos": s * jax.random.normal(ks[2], (10, POS_EMB_DIM), jnp.float32),
        # nn.Bilinear(loc, loc, loc): weight (out, in1, in2), bias (out,)
        "w_bi": s * jax.random.normal(ks[3], (LOC_EMB_DIM, LOC_EMB_DIM, LOC_EMB_DIM), jnp.float32),
        "b_bi": s * jax.random.normal(ks[4], (LOC_EMB_DIM,), jnp.float32),
        # nn.LayerNorm(64) (randomized affine so the test exercises the split)
        "ln_gamma": 1.0 + s * jax.random.normal(ks[5], (FEAT_DIM,), jnp.float32),
        "ln_beta": s * jax.random.normal(ks[6], (FEAT_DIM,), jnp.float32),
        # nn.Linear stored as (in, out)
        "w1": s * jax.random.normal(ks[7], (FEAT_DIM, HID_DIM), jnp.float32),
        "b1": s * jax.random.normal(ks[8], (HID_DIM,), jnp.float32),
        "w2": s * jax.random.normal(ks[9], (HID_DIM, OUT_DIM), jnp.float32),
        "b2": s * jax.random.normal(ks[10], (OUT_DIM,), jnp.float32),
    }


def pack_params(params):
    """One-time re-layout into the lane-dense buffers the kernel consumes."""
    L = LOC_EMB_DIM

    # wp[i, k*L + j] = w_bi[k, i, j]  (lane-dense 2D relayout of the bilinear weight)
    wp = jnp.transpose(params["w_bi"], (1, 0, 2)).reshape(L, LL)
    wp_full = jnp.zeros((ACT_DIM, LL), jnp.float32).at[TP_DIM:TP_DIM + L, :].set(wp)
    # tile selector: (act @ tsel_full)[b, k*L + j] == end[b, j]
    tsel = jnp.tile(jnp.eye(L, dtype=jnp.float32), (1, L))
    tsel_full = jnp.zeros((ACT_DIM, LL), jnp.float32).at[TP_DIM + L:, :].set(tsel)
    wts = jnp.concatenate([wp_full, tsel_full], axis=1)            # (96, 2048)

    # group-sum selector: ssel[k*L + j, k] = 1
    ssel = jnp.repeat(jnp.eye(L, dtype=jnp.float32), L, axis=0)    # (1024, 32)

    pblob = jnp.zeros((PBLOB_ROWS, 128), jnp.float32)
    pblob = pblob.at[0, :L].set(params["b_bi"])
    pblob = pblob.at[1, :TP_DIM].set(params["ln_gamma"][:TP_DIM])
    pblob = pblob.at[2, :L].set(params["ln_gamma"][TP_DIM:])
    pblob = pblob.at[3, :TP_DIM].set(params["ln_beta"][:TP_DIM])
    pblob = pblob.at[4, :L].set(params["ln_beta"][TP_DIM:])
    pblob = pblob.at[5, :HID_DIM].set(params["b1"])
    pblob = pblob.at[6, :OUT_DIM].set(params["b2"])
    pblob = pblob.at[8:8 + TP_DIM, :HID_DIM].set(params["w1"][:TP_DIM])
    pblob = pblob.at[8 + TP_DIM:8 + FEAT_DIM, :HID_DIM].set(params["w1"][TP_DIM:])
    pblob = pblob.at[72:72 + HID_DIM, :OUT_DIM].set(params["w2"])

    return {
        "emb_loc": params["emb_loc"],
        "emb_tim": params["emb_tim"],
        "emb_pos": params["emb_pos"],
        "wts": wts,
        "ssel": ssel,
        "pblob": pblob,
    }


@jax.jit
def gen_arrive_forward(inp, packed):
    """inp: (B, 4) int32 rows [start_loc_id, end_loc_id, start_hour, position].

    Returns (B, 24) log-softmax over 24 arrival-hour classes (one row/query).
    """
    # glue: batched embedding gathers + activation packing (gather layout only)
    # TODO(synk): at batch>1 scattered-row gathers are left to XLA; in-kernel
    # gather would need a manual per-row DMA loop for little gain here.
    start = packed["emb_loc"][inp[:, 0]]                   # (B, 32)
    end = packed["emb_loc"][inp[:, 1]]                     # (B, 32)
    tim = packed["emb_tim"][inp[:, 2]]                     # (B, 16)
    pos = packed["emb_pos"][inp[:, 3]]                     # (B, 16)
    act = jnp.concatenate([tim, pos, start, end], axis=1)  # (B, 96)

    B = act.shape[0]
    Bp = ((B + BATCH_TILE - 1) // BATCH_TILE) * BATCH_TILE
    if Bp != B:
        act = jnp.pad(act, ((0, Bp - B), (0, 0)))

    out = pl.pallas_call(
        gen_arrive_kernel,
        out_shape=jax.ShapeDtypeStruct((Bp, OUT_DIM), jnp.float32),
        grid=(Bp // BATCH_TILE,),
        in_specs=[
            pl.BlockSpec((BATCH_TILE, ACT_DIM), lambda i: (i, 0)),
            pl.BlockSpec((ACT_DIM, 2 * LL), lambda i: (0, 0)),      # replicated
            pl.BlockSpec((LL, LOC_EMB_DIM), lambda i: (0, 0)),      # replicated
            pl.BlockSpec((PBLOB_ROWS, 128), lambda i: (0, 0)),      # replicated
        ],
        out_specs=pl.BlockSpec((BATCH_TILE, OUT_DIM), lambda i: (i, 0)),
        compiler_params=pltpu.CompilerParams(
            dimension_semantics=("parallel",)),
    )(act, packed["wts"], packed["ssel"], packed["pblob"])
    return out[:B]


def reference_forward(inp, params):
    """Pure-JAX reference matching the PyTorch forward, per query."""
    def single(row):
        start = params["emb_loc"][row[0]]
        end = params["emb_loc"][row[1]]
        tim = params["emb_tim"][row[2]]
        pos = params["emb_pos"][row[3]]
        loc = jnp.einsum("i,kij,j->k", start, params["w_bi"], end) + params["b_bi"]
        x = jnp.concatenate([tim, pos, loc], axis=0)
        mean = jnp.mean(x)
        var = jnp.mean((x - mean) ** 2)
        xn = (x - mean) * jax.lax.rsqrt(var + LN_EPS)
        xn = xn * params["ln_gamma"] + params["ln_beta"]
        h = jnp.maximum(xn @ params["w1"] + params["b1"], 0.0)
        z = h @ params["w2"] + params["b2"]
        return jax.nn.log_softmax(z)
    return jax.vmap(single)(inp)


if __name__ == "__main__":
    key = jax.random.PRNGKey(0)
    params = init_params(key)
    packed = pack_params(params)

    B = 256   # two 128-row batch tiles -> both TensorCores on v7x
    ik = jax.random.split(jax.random.PRNGKey(0), 4)
    inp = jnp.stack([
        jax.random.randint(ik[0], (B,), 0, 2500),   # start_loc_id
        jax.random.randint(ik[1], (B,), 0, 2500),   # end_loc_id
        jax.random.randint(ik[2], (B,), 0, 24),     # start hour
        jax.random.randint(ik[3], (B,), 0, 10),     # position
    ], axis=1).astype(jnp.int32)

    out = gen_arrive_forward(inp, packed)
    out = jax.block_until_ready(out)

    assert out.shape == (B, OUT_DIM)
    assert bool(jnp.all(jnp.isfinite(out)))
    # log-softmax sanity: probabilities sum to ~1 for every row
    probs = jnp.sum(jnp.exp(out), axis=-1)
    assert bool(jnp.all(jnp.abs(probs - 1.0) < 1e-3))

    # correctness vs. pure-JAX reference of the PyTorch module
    ref = reference_forward(inp, params)
    err = float(jnp.max(jnp.abs(out - ref)))
    assert err < 2e-2, f"max abs err vs reference: {err}"

    print("KERNEL_OK")
</pallas_src>

<mosaic_0001>
module attributes {stable_mosaic.version = 11 : i64} {
  func.func @gen_arrive_kernel(%arg0: i32, %arg1: memref<128x96xf32, #tpu.memory_space<vmem>>, %arg2: memref<96x2048xf32, #tpu.memory_space<vmem>>, %arg3: memref<1024x32xf32, #tpu.memory_space<vmem>>, %arg4: memref<88x128xf32, #tpu.memory_space<vmem>>, %arg5: memref<128x24xf32, #tpu.memory_space<vmem>>) attributes {dimension_semantics = [#tpu.dimension_semantics<parallel>], iteration_bounds = array<i64: 2>, scalar_prefetch = 0 : i64, scratch_operands = 0 : i64, tpu.core_type = #tpu.core_type<tc>, window_params = [{transform_indices = @transform_0, window_bounds = array<i64: 128, 96>}, {pipeline_mode = #tpu.pipeline_mode<synchronous>, transform_indices = @transform_1, window_bounds = array<i64: 96, 2048>}, {pipeline_mode = #tpu.pipeline_mode<synchronous>, transform_indices = @transform_2, window_bounds = array<i64: 1024, 32>}, {pipeline_mode = #tpu.pipeline_mode<synchronous>, transform_indices = @transform_3, window_bounds = array<i64: 88, 128>}, {transform_indices = @transform_4, window_bounds = array<i64: 128, 24>}]} {
    %c0 = arith.constant 0 : index
    %c0_0 = arith.constant 0 : index
    %0 = vector.load %arg1[%c0, %c0_0] : memref<128x96xf32, #tpu.memory_space<vmem>>, vector<128x96xf32>
    %c0_1 = arith.constant 0 : index
    %c0_2 = arith.constant 0 : index
    %1 = vector.load %arg4[%c0_1, %c0_2] : memref<88x128xf32, #tpu.memory_space<vmem>>, vector<88x128xf32>
    %c0_3 = arith.constant 0 : index
    %c0_4 = arith.constant 0 : index
    %2 = vector.load %arg2[%c0_3, %c0_4] : memref<96x2048xf32, #tpu.memory_space<vmem>>, vector<96x2048xf32>
    %cst = arith.constant dense<0.000000e+00> : vector<128x2048xf32>
    %3 = tpu.matmul %0, %2, %cst {dimension_numbers = #tpu.dot_dimension_numbers<[1], [0], [0], [1], [0, 0, 1, 1], [], []>} : vector<128x96xf32>, vector<96x2048xf32>, vector<128x2048xf32> -> vector<128x2048xf32>
    %4 = vector.extract_strided_slice %3 {offsets = [0, 0], sizes = [128, 1024], strides = [1, 1]} : vector<128x2048xf32> to vector<128x1024xf32>
    %5 = vector.extract_strided_slice %3 {offsets = [0, 1024], sizes = [128, 1024], strides = [1, 1]} : vector<128x2048xf32> to vector<128x1024xf32>
    %6 = arith.mulf %4, %5 : vector<128x1024xf32>
    %c0_5 = arith.constant 0 : index
    %c0_6 = arith.constant 0 : index
    %7 = vector.load %arg3[%c0_5, %c0_6] : memref<1024x32xf32, #tpu.memory_space<vmem>>, vector<1024x32xf32>
    %cst_7 = arith.constant dense<0.000000e+00> : vector<128x32xf32>
    %8 = tpu.matmul %6, %7, %cst_7 {dimension_numbers = #tpu.dot_dimension_numbers<[1], [0], [0], [1], [0, 0, 1, 1], [], []>} : vector<128x1024xf32>, vector<1024x32xf32>, vector<128x32xf32> -> vector<128x32xf32>
    %9 = vector.extract_strided_slice %1 {offsets = [0, 0], sizes = [1, 32], strides = [1, 1]} : vector<88x128xf32> to vector<1x32xf32>
    %10 = vector.broadcast %9 : vector<1x32xf32> to vector<128x32xf32>
    %11 = arith.addf %8, %10 : vector<128x32xf32>
    %12 = vector.extract_strided_slice %0 {offsets = [0, 0], sizes = [128, 32], strides = [1, 1]} : vector<128x96xf32> to vector<128x32xf32>
    %cst_8 = arith.constant dense<0.000000e+00> : vector<128xf32>
    %13 = vector.multi_reduction <add>, %12, %cst_8 [1] : vector<128x32xf32> to vector<128xf32>
    %14 = vector.shape_cast %13 : vector<128xf32> to vector<128x1xf32>
    %cst_9 = arith.constant dense<0.000000e+00> : vector<128xf32>
    %15 = vector.multi_reduction <add>, %11, %cst_9 [1] : vector<128x32xf32> to vector<128xf32>
    %16 = vector.shape_cast %15 : vector<128xf32> to vector<128x1xf32>
    %17 = arith.addf %14, %16 : vector<128x1xf32>
    %cst_10 = arith.constant 1.562500e-02 : f32
    %18 = vector.broadcast %cst_10 : f32 to vector<128x1xf32>
    %19 = arith.mulf %17, %18 : vector<128x1xf32>
    %20 = vector.broadcast %19 : vector<128x1xf32> to vector<128x32xf32>
    %21 = arith.subf %12, %20 : vector<128x32xf32>
    %22 = vector.broadcast %19 : vector<128x1xf32> to vector<128x32xf32>
    %23 = arith.subf %11, %22 : vector<128x32xf32>
    %24 = arith.mulf %21, %21 : vector<128x32xf32>
    %cst_11 = arith.constant dense<0.000000e+00> : vector<128xf32>
    %25 = vector.multi_reduction <add>, %24, %cst_11 [1] : vector<128x32xf32> to vector<128xf32>
    %26 = vector.shape_cast %25 : vector<128xf32> to vector<128x1xf32>
    %27 = arith.mulf %23, %23 : vector<128x32xf32>
    %cst_12 = arith.constant dense<0.000000e+00> : vector<128xf32>
    %28 = vector.multi_reduction <add>, %27, %cst_12 [1] : vector<128x32xf32> to vector<128xf32>
    %29 = vector.shape_cast %28 : vector<128xf32> to vector<128x1xf32>
    %30 = arith.addf %26, %29 : vector<128x1xf32>
    %cst_13 = arith.constant 1.562500e-02 : f32
    %31 = vector.broadcast %cst_13 : f32 to vector<128x1xf32>
    %32 = arith.mulf %30, %31 : vector<128x1xf32>
    %cst_14 = arith.constant 9.99999974E-6 : f32
    %33 = vector.broadcast %cst_14 : f32 to vector<128x1xf32>
    %34 = arith.addf %32, %33 : vector<128x1xf32>
    %35 = math.rsqrt %34 : vector<128x1xf32>
    %36 = vector.broadcast %35 : vector<128x1xf32> to vector<128x32xf32>
    %37 = arith.mulf %21, %36 : vector<128x32xf32>
    %38 = vector.extract_strided_slice %1 {offsets = [1, 0], sizes = [1, 32], strides = [1, 1]} : vector<88x128xf32> to vector<1x32xf32>
    %39 = vector.broadcast %38 : vector<1x32xf32> to vector<128x32xf32>
    %40 = arith.mulf %37, %39 : vector<128x32xf32>
    %41 = vector.extract_strided_slice %1 {offsets = [3, 0], sizes = [1, 32], strides = [1, 1]} : vector<88x128xf32> to vector<1x32xf32>
    %42 = vector.broadcast %41 : vector<1x32xf32> to vector<128x32xf32>
    %43 = arith.addf %40, %42 : vector<128x32xf32>
    %44 = vector.broadcast %35 : vector<128x1xf32> to vector<128x32xf32>
    %45 = arith.mulf %23, %44 : vector<128x32xf32>
    %46 = vector.extract_strided_slice %1 {offsets = [2, 0], sizes = [1, 32], strides = [1, 1]} : vector<88x128xf32> to vector<1x32xf32>
    %47 = vector.broadcast %46 : vector<1x32xf32> to vector<128x32xf32>
    %48 = arith.mulf %45, %47 : vector<128x32xf32>
    %49 = vector.extract_strided_slice %1 {offsets = [4, 0], sizes = [1, 32], strides = [1, 1]} : vector<88x128xf32> to vector<1x32xf32>
    %50 = vector.broadcast %49 : vector<1x32xf32> to vector<128x32xf32>
    %51 = arith.addf %48, %50 : vector<128x32xf32>
    %52 = vector.extract_strided_slice %1 {offsets = [8, 0], sizes = [32, 10], strides = [1, 1]} : vector<88x128xf32> to vector<32x10xf32>
    %53 = vector.extract_strided_slice %1 {offsets = [40, 0], sizes = [32, 10], strides = [1, 1]} : vector<88x128xf32> to vector<32x10xf32>
    %cst_15 = arith.constant dense<0.000000e+00> : vector<128x10xf32>
    %54 = tpu.matmul %43, %52, %cst_15 {dimension_numbers = #tpu.dot_dimension_numbers<[1], [0], [0], [1], [0, 0, 1, 1], [], []>} : vector<128x32xf32>, vector<32x10xf32>, vector<128x10xf32> -> vector<128x10xf32>
    %cst_16 = arith.constant dense<0.000000e+00> : vector<128x10xf32>
    %55 = tpu.matmul %51, %53, %cst_16 {dimension_numbers = #tpu.dot_dimension_numbers<[1], [0], [0], [1], [0, 0, 1, 1], [], []>} : vector<128x32xf32>, vector<32x10xf32>, vector<128x10xf32> -> vector<128x10xf32>
    %56 = arith.addf %54, %55 : vector<128x10xf32>
    %57 = vector.extract_strided_slice %1 {offsets = [5, 0], sizes = [1, 10], strides = [1, 1]} : vector<88x128xf32> to vector<1x10xf32>
    %58 = vector.broadcast %57 : vector<1x10xf32> to vector<128x10xf32>
    %59 = arith.addf %56, %58 : vector<128x10xf32>
    %cst_17 = arith.constant 0.000000e+00 : f32
    %60 = vector.broadcast %cst_17 : f32 to vector<128x10xf32>
    %61 = arith.maximumf %59, %60 : vector<128x10xf32>
    %62 = vector.extract_strided_slice %1 {offsets = [72, 0], sizes = [10, 24], strides = [1, 1]} : vector<88x128xf32> to vector<10x24xf32>
    %cst_18 = arith.constant dense<0.000000e+00> : vector<128x24xf32>
    %63 = tpu.matmul %61, %62, %cst_18 {dimension_numbers = #tpu.dot_dimension_numbers<[1], [0], [0], [1], [0, 0, 1, 1], [], []>} : vector<128x10xf32>, vector<10x24xf32>, vector<128x24xf32> -> vector<128x24xf32>
    %64 = vector.extract_strided_slice %1 {offsets = [6, 0], sizes = [1, 24], strides = [1, 1]} : vector<88x128xf32> to vector<1x24xf32>
    %65 = vector.broadcast %64 : vector<1x24xf32> to vector<128x24xf32>
    %66 = arith.addf %63, %65 : vector<128x24xf32>
    %cst_19 = arith.constant dense<0xFF800000> : vector<128xf32>
    %67 = vector.multi_reduction <maximumf>, %66, %cst_19 [1] : vector<128x24xf32> to vector<128xf32>
    %68 = vector.shape_cast %67 : vector<128xf32> to vector<128x1xf32>
    %69 = vector.broadcast %68 : vector<128x1xf32> to vector<128x24xf32>
    %70 = arith.subf %66, %69 : vector<128x24xf32>
    %71 = math.exp %70 : vector<128x24xf32>
    %cst_20 = arith.constant dense<0.000000e+00> : vector<128xf32>
    %72 = vector.multi_reduction <add>, %71, %cst_20 [1] : vector<128x24xf32> to vector<128xf32>
    %73 = vector.shape_cast %72 : vector<128xf32> to vector<128x1xf32>
    %74 = math.log %73 : vector<128x1xf32>
    %75 = vector.broadcast %74 : vector<128x1xf32> to vector<128x24xf32>
    %76 = arith.subf %70, %75 : vector<128x24xf32>
    %c0_21 = arith.constant 0 : index
    %c0_22 = arith.constant 0 : index
    %77 = vector.load %arg5[%c0_21, %c0_22] : memref<128x24xf32, #tpu.memory_space<vmem>>, vector<128x24xf32>
    tpu.vector_store %arg5[%c0_21, %c0_22], %76 {strides = array<i32>} : memref<128x24xf32, #tpu.memory_space<vmem>>, vector<128x24xf32>,
    return
  }
  func.func @transform_0(%arg0: i32) -> (i32, i32) {
    %c0_i32 = arith.constant 0 : i32
    %c0_i32_0 = arith.constant 0 : i32
    return %arg0, %c0_i32 : i32, i32
  }
  func.func @transform_1(%arg0: i32) -> (i32, i32) {
    %c0_i32 = arith.constant 0 : i32
    %c0_i32_0 = arith.constant 0 : i32
    %c0_i32_1 = arith.constant 0 : i32
    return %c0_i32, %c0_i32_0 : i32, i32
  }
  func.func @transform_2(%arg0: i32) -> (i32, i32) {
    %c0_i32 = arith.constant 0 : i32
    %c0_i32_0 = arith.constant 0 : i32
    %c0_i32_1 = arith.constant 0 : i32
    return %c0_i32, %c0_i32_0 : i32, i32
  }
  func.func @transform_3(%arg0: i32) -> (i32, i32) {
    %c0_i32 = arith.constant 0 : i32
    %c0_i32_0 = arith.constant 0 : i32
    %c0_i32_1 = arith.constant 0 : i32
    return %c0_i32, %c0_i32_0 : i32, i32
  }
  func.func @transform_4(%arg0: i32) -> (i32, i32) {
    %c0_i32 = arith.constant 0 : i32
    %c0_i32_0 = arith.constant 0 : i32
    return %arg0, %c0_i32 : i32, i32
  }
}

</mosaic_0001>

<llo_original>
// kernel: gen_arrive_forward.1
$region0: #{gen_arrive_forward.1}
  #allocation0 [shape = 'u32[]', space=smem, size = 0x4, offset = 0x4, fixed_abs, tag = 'smem constant byte address 0x4 - core index']
  #allocation1 [shape = 'u32[144,128]{1,0:T(1,128)}', space=vmem, size = 0x12000, scoped, tag = 'internal scratch']
  %s0 = inlined_call_operand.vmem [shape: f32[256,96], index: 0, kind: input, shape index: {}]
  %s1 = inlined_call_operand.vmem [shape: f32[96,2048], index: 1, kind: input, shape index: {}]
  %s2 = inlined_call_operand.vmem [shape: f32[1024,32], index: 2, kind: input, shape index: {}]
  %s3 = inlined_call_operand.vmem [shape: f32[88,128], index: 3, kind: input, shape index: {}]
  %s4 = inlined_call_operand.vmem [shape: f32[256,24], index: 4, kind: output, shape index: {}]
  %s5 = sld [smem:[#allocation0]]
  $region49: #{gen_arrive_forward.1} parent=0
    _
  %s7 = ssub.s32 1, %s5
  %s8 = scalar_select 0, %s7, %s5
  loop: start=0, step=1, limit=4
  $region2: #{gen_arrive_forward.1} parent=0 // loop_pre_header
    _
  $region3: #{gen_arrive_forward.1} parent=0 // loop_header
    %s10 = sphi 0, %s14
    %p11 = scmp.ge.s32.totalorder %s10, 4
    %s20 = sphi 0, %s22
    %s23 = sphi 0, %s20
    %s24 = sphi 0, %s23
    %s40 = sphi 0, %s24
    %s44 = sphi 0, %s44
    %s46 = sphi 0, %s44
    %s47 = sphi 0, %s46
    %s61 = sphi 0, %s47
    %s65 = sphi 0, %s65
    %s67 = sphi 0, %s65
    %s68 = sphi 0, %s67
    %s82 = sphi 0, %s68
    %s86 = sphi 0, %s86
    %s88 = sphi 0, %s86
    %s89 = sphi 0, %s88
    %s103 = sphi 0, %s89
    %s109 = sphi 0, %s111
    %s112 = sphi 0, %s109
    %s113 = sphi 0, %s112
    %s129 = sphi 0, %s113
  $region4: #{gen_arrive_forward.1} parent=0 // loop_header_branch
    %13 = sbr.rel (%p11) target = $region8
  $region5: #{gen_arrive_forward.1} parent=0 // loop_body
    %s15 = ssub.s32 %s10, 1
    %s16 = ssub.s32 %s10, 2
    %s17 = sadd.s32 %s10, 1
    %s18 = ssub.s32 %s10, %s17
    %p19 = scmp.eq.s32.totalorder %s18, 0
    %s21 = sadd.s32 %s20, 1
    %s22 = scalar_select %p19, %s20, %s21
    %p25 = pneg %p19
    %p26 = scmp.eq.s32.totalorder %s10, 1
    %p27 = por %p25, %p26
    %p28 = scmp.ne.s32.totalorder %s20, %s23
    %p29 = scmp.eq.s32.totalorder %s10, 0
    %p30 = por %p28, %p29
    %p31 = scmp.ne.s32.totalorder %s20, %s23
    %p32 = scmp.eq.s32.totalorder %s15, 1
    %p33 = por %p31, %p32
    %p34 = scmp.ne.s32.totalorder %s23, %s24
    %p35 = scmp.eq.s32.totalorder %s15, 0
    %p36 = por %p34, %p35
    %p37 = scmp.ne.s32.totalorder %s23, %s24
    %p38 = scmp.eq.s32.totalorder %s16, 1
    %p39 = por %p37, %p38
    %p41 = scmp.ne.s32.totalorder %s24, %s40
    %p42 = scmp.eq.s32.totalorder %s16, 0
    %p43 = por %p41, %p42
    %s45 = sadd.s32 %s44, 1
    %p48 = scmp.eq.s32.totalorder %s10, 1
    %p49 = scmp.ne.s32.totalorder %s44, %s46
    %p50 = scmp.eq.s32.totalorder %s10, 0
    %p51 = por %p49, %p50
    %p52 = scmp.ne.s32.totalorder %s44, %s46
    %p53 = scmp.eq.s32.totalorder %s15, 1
    %p54 = por %p52, %p53
    %p55 = scmp.ne.s32.totalorder %s46, %s47
    %p56 = scmp.eq.s32.totalorder %s15, 0
    %p57 = por %p55, %p56
    %p58 = scmp.ne.s32.totalorder %s46, %s47
    %p59 = scmp.eq.s32.totalorder %s16, 1
    %p60 = por %p58, %p59
    %p62 = scmp.ne.s32.totalorder %s47, %s61
    %p63 = scmp.eq.s32.totalorder %s16, 0
    %p64 = por %p62, %p63
    %s66 = sadd.s32 %s65, 1
    %p69 = scmp.eq.s32.totalorder %s10, 1
    %p70 = scmp.ne.s32.totalorder %s65, %s67
    %p71 = scmp.eq.s32.totalorder %s10, 0
    %p72 = por %p70, %p71
    %p73 = scmp.ne.s32.totalorder %s65, %s67
    %p74 = scmp.eq.s32.totalorder %s15, 1
    %p75 = por %p73, %p74
    %p76 = scmp.ne.s32.totalorder %s67, %s68
    %p77 = scmp.eq.s32.totalorder %s15, 0
    %p78 = por %p76, %p77
    %p79 = scmp.ne.s32.totalorder %s67, %s68
    %p80 = scmp.eq.s32.totalorder %s16, 1
    %p81 = por %p79, %p80
    %p83 = scmp.ne.s32.totalorder %s68, %s82
    %p84 = scmp.eq.s32.totalorder %s16, 0
    %p85 = por %p83, %p84
    %s87 = sadd.s32 %s86, 1
    %p90 = scmp.eq.s32.totalorder %s10, 1
    %p91 = scmp.ne.s32.totalorder %s86, %s88
    %p92 = scmp.eq.s32.totalorder %s10, 0
    %p93 = por %p91, %p92
    %p94 = scmp.ne.s32.totalorder %s86, %s88
    %p95 = scmp.eq.s32.totalorder %s15, 1
    %p96 = por %p94, %p95
    %p97 = scmp.ne.s32.totalorder %s88, %s89
    %p98 = scmp.eq.s32.totalorder %s15, 0
    %p99 = por %p97, %p98
    %p100 = scmp.ne.s32.totalorder %s88, %s89
    %p101 = scmp.eq.s32.totalorder %s16, 1
    %p102 = por %p100, %p101
    %p104 = scmp.ne.s32.totalorder %s89, %s103
    %p105 = scmp.eq.s32.totalorder %s16, 0
    %p106 = por %p104, %p105
    %s107 = ssub.s32 %s10, %s17
    %p108 = scmp.eq.s32.totalorder %s107, 0
    %s110 = sadd.s32 %s109, 1
    %s111 = scalar_select %p108, %s109, %s110
    %p114 = pneg %p108
    %p115 = scmp.eq.s32.totalorder %s10, 1
    %p116 = por %p114, %p115
    %p117 = scmp.ne.s32.totalorder %s109, %s112
    %p118 = scmp.eq.s32.totalorder %s10, 0
    %p119 = por %p117, %p118
    %p120 = scmp.ne.s32.totalorder %s109, %s112
    %p121 = scmp.eq.s32.totalorder %s15, 1
    %p122 = por %p120, %p121
    %p123 = scmp.ne.s32.totalorder %s112, %s113
    %p124 = scmp.eq.s32.totalorder %s15, 0
    %p125 = por %p123, %p124
    %p126 = scmp.ne.s32.totalorder %s112, %s113
    %p127 = scmp.eq.s32.totalorder %s16, 1
    %p128 = por %p126, %p127
    %p130 = scmp.ne.s32.totalorder %s113, %s129
    %p131 = scmp.eq.s32.totalorder %s16, 0
    %p132 = por %p130, %p131
    %p133 = scmp.le.s32.totalorder 1, %s10
    %p134 = scmp.lt.s32.totalorder %s10, 3
    %p135 = pnand %p133, %p134
    %p136 = pneg %p135
    // Predicated region
    $region9: #{gen_arrive_forward.1} parent=5 // pred_check
      _
    $region10: #{gen_arrive_forward.1} parent=5 // pred_check_branch
      %138 = sbr.rel (%p135) target = $region12
    $region11: #{gen_arrive_forward.1} parent=5 // pred_region
      %s139 = ssub.s32 %s10, 1
      // Predicated region
      $region13: #{gen_arrive_forward.1} parent=11 // pred_check
        %p140 = pneg %p57
      $region14: #{gen_arrive_forward.1} parent=11 // pred_check_branch
        %142 = sbr.rel (%p140) target = $region16
      $region15: #{gen_arrive_forward.1} parent=11 // pred_region
        _
      $region16: #{gen_arrive_forward.1} parent=11 // pred_fallthru
        _
      // Predicated region
      $region17: #{gen_arrive_forward.1} parent=11 // pred_check
        %p143 = pneg %p78
      $region18: #{gen_arrive_forward.1} parent=11 // pred_check_branch
        %145 = sbr.rel (%p143) target = $region20
      $region19: #{gen_arrive_forward.1} parent=11 // pred_region
        _
      $region20: #{gen_arrive_forward.1} parent=11 // pred_fallthru
        _
      // Predicated region
      $region21: #{gen_arrive_forward.1} parent=11 // pred_check
        %p146 = pneg %p99
      $region22: #{gen_arrive_forward.1} parent=11 // pred_check_branch
        %148 = sbr.rel (%p146) target = $region24
      $region23: #{gen_arrive_forward.1} parent=11 // pred_region
        _
      $region24: #{gen_arrive_forward.1} parent=11 // pred_fallthru
        _
    $region12: #{gen_arrive_forward.1} parent=5 // pred_fallthru
      _
    %p149 = scmp.lt.s32.totalorder %s10, 2
    // Predicated region
    $region25: #{gen_arrive_forward.1} parent=5 // pred_check
      %p150 = pneg %p149
    $region26: #{gen_arrive_forward.1} parent=5 // pred_check_branch
      %152 = sbr.rel (%p150) target = $region28
    $region27: #{gen_arrive_forward.1} parent=5 // pred_region
      // Predicated region
      $region29: #{gen_arrive_forward.1} parent=27 // pred_check
        %p153 = pneg %p30
      $region30: #{gen_arrive_forward.1} parent=27 // pred_check_branch
        %155 = sbr.rel (%p153) target = $region32
      $region31: #{gen_arrive_forward.1} parent=27 // pred_region
        %s156 = smul.u32 16, %s10
        %p157 = scmp.lt.s32.totalorder %s156, 31
        %s158 = scalar_select %p157, %s156, 31
        %s159 = smul.addr %s158, 8
        %s160 = scalar_lea.vmem %s0, %s159
        %s161 = smul.u32 16, %s10
      $region32: #{gen_arrive_forward.1} parent=27 // pred_fallthru
        _
    $region28: #{gen_arrive_forward.1} parent=5 // pred_fallthru
      _
    %p162 = scmp.le.s32.totalorder 1, %s10
    %p163 = scmp.lt.s32.totalorder %s10, 3
    %p164 = pnand %p162, %p163
    %p165 = pneg %p164
    // Predicated region
    $region33: #{gen_arrive_forward.1} parent=5 // pred_check
      _
    $region34: #{gen_arrive_forward.1} parent=5 // pred_check_branch
      %167 = sbr.rel (%p164) target = $region36
    $region35: #{gen_arrive_forward.1} parent=5 // pred_region
      %s168 = ssub.s32 %s10, 1
      %s169 = smul.u32 16, %s15
      %p170 = scmp.lt.s32.totalorder %s169, 31
      %s171 = scalar_select %p170, %s169, 31
      %s172 = smul.addr %s171, 8
      %s173 = scalar_lea.vmem %s0, %s172
      %p174 = pneg %p36
      %p175 = pneg %p33
      %p176 = pneg %p57
      %p177 = pneg %p54
      %p178 = pneg %p78
      %p179 = pneg %p75
      %p180 = pneg %p99
      %p181 = pneg %p96
      %p182 = pneg %p125
      %p183 = pneg %p122
      %s184 = smul.u32 16, %s15
      %p185 = scmp.lt.s32.totalorder %s184, 31
      %s186 = scalar_select %p185, %s184, 31
      %s187 = smul.addr %s186, 8
      %s188 = scalar_lea.vmem %s4, %s187
      %s189 = smul.u32 16, %s15
      %p190 = scmp.lt.s32.totalorder %s189, 31
      %s191 = scalar_select %p190, %s189, 31
      %s192 = smul.addr %s191, 8
      %s193 = scalar_lea.vmem %s0, %s192
      %s194 = smul.u32 16, %s15
      %s195 = smul.u32 16, %s15
      %p196 = scmp.lt.s32.totalorder %s195, 31
      %s197 = scalar_select %p196, %s195, 31
      %s198 = smul.addr %s197, 8
      %s199 = scalar_lea.vmem %s4, %s198
      %s200 = smul.u32 16, %s15
      %v201 = vld [vmem:[%s193] sm:$0xff]
      %v202 = vld [vmem:[%s193 + $0x8] sm:$0xff]
      %v203 = vld [vmem:[%s193 + $0x10] sm:$0xff]
      %v204 = vld [vmem:[%s193 + $0x18] sm:$0xff]
      %v205 = vld [vmem:[%s193 + $0x20] sm:$0xff]
      %v206 = vld [vmem:[%s193 + $0x28] sm:$0xff]
      %v207 = vld [vmem:[%s193 + $0x30] sm:$0xff]
      %v208 = vld [vmem:[%s193 + $0x38] sm:$0xff]
      %v209 = vld [vmem:[%s193 + $0x40] sm:$0xff]
      %v210 = vld [vmem:[%s193 + $0x48] sm:$0xff]
      %v211 = vld [vmem:[%s193 + $0x50] sm:$0xff]
      %v212 = vld [vmem:[%s193 + $0x58] sm:$0xff]
      %v213 = vld [vmem:[%s193 + $0x60] sm:$0xff]
      %v214 = vld [vmem:[%s193 + $0x68] sm:$0xff]
      %v215 = vld [vmem:[%s193 + $0x70] sm:$0xff]
      %v216 = vld [vmem:[%s193 + $0x78] sm:$0xff]
      %v217 = vld [vmem:[%s3] sm:$0xff]
      %v218 = vld [vmem:[%s3 + $0x8] sm:$0xff]
      %v219 = vld [vmem:[%s3 + $0x10] sm:$0xff]
      %v220 = vld [vmem:[%s3 + $0x18] sm:$0xff]
      %v221 = vld [vmem:[%s3 + $0x20] sm:$0xff]
      %v222 = vld [vmem:[%s3 + $0x28] sm:$0xff]
      %v223 = vld [vmem:[%s3 + $0x30] sm:$0xff]
      %v224 = vld [vmem:[%s3 + $0x38] sm:$0xff]
      %v225 = vld [vmem:[%s3 + $0x40] sm:$0xff]
      %v226 = vld [vmem:[%s3 + $0x48] sm:$0xff]
      %v227 = vld [vmem:[%s3 + $0x50] sm:$0xff]
      %v228 = vld [vmem:[%s1] sm:$0xff]
      %v229 = vld [vmem:[%s1 + $0x8] sm:$0xff]
      %v230 = vld [vmem:[%s1 + $0x10] sm:$0xff]
      %v231 = vld [vmem:[%s1 + $0x18] sm:$0xff]
      %v232 = vld [vmem:[%s1 + $0x20] sm:$0xff]
      %v233 = vld [vmem:[%s1 + $0x28] sm:$0xff]
      %v234 = vld [vmem:[%s1 + $0x30] sm:$0xff]
      %v235 = vld [vmem:[%s1 + $0x38] sm:$0xff]
      %v236 = vld [vmem:[%s1 + $0x40] sm:$0xff]
      %v237 = vld [vmem:[%s1 + $0x48] sm:$0xff]
      %v238 = vld [vmem:[%s1 + $0x50] sm:$0xff]
      %v239 = vld [vmem:[%s1 + $0x58] sm:$0xff]
      %v240 = vld [vmem:[%s1 + $0x60] sm:$0xff]
      %v241 = vld [vmem:[%s1 + $0x68] sm:$0xff]
      %v242 = vld [vmem:[%s1 + $0x70] sm:$0xff]
      %v243 = vld [vmem:[%s1 + $0x78] sm:$0xff]
      %v244 = vld [vmem:[%s1 + $0x80] sm:$0xff]
      %v245 = vld [vmem:[%s1 + $0x88] sm:$0xff]
      %v246 = vld [vmem:[%s1 + $0x90] sm:$0xff]
      %v247 = vld [vmem:[%s1 + $0x98] sm:$0xff]
      %v248 = vld [vmem:[%s1 + $0xa0] sm:$0xff]
      %v249 = vld [vmem:[%s1 + $0xa8] sm:$0xff]
      %v250 = vld [vmem:[%s1 + $0xb0] sm:$0xff]
      %v251 = vld [vmem:[%s1 + $0xb8] sm:$0xff]
      %v252 = vld [vmem:[%s1 + $0xc0] sm:$0xff]
      %v253 = vld [vmem:[%s1 + $0xc8] sm:$0xff]
      %v254 = vld [vmem:[%s1 + $0xd0] sm:$0xff]
      %v255 = vld [vmem:[%s1 + $0xd8] sm:$0xff]
      %v256 = vld [vmem:[%s1 + $0xe0] sm:$0xff]
      %v257 = vld [vmem:[%s1 + $0xe8] sm:$0xff]
      %v258 = vld [vmem:[%s1 + $0xf0] sm:$0xff]
      %v259 = vld [vmem:[%s1 + $0xf8] sm:$0xff]
      %v260 = vld [vmem:[%s1 + $0x100] sm:$0xff]
      %v261 = vld [vmem:[%s1 + $0x108] sm:$0xff]
      %v262 = vld [vmem:[%s1 + $0x110] sm:$0xff]
      %v263 = vld [vmem:[%s1 + $0x118] sm:$0xff]
      %v264 = vld [vmem:[%s1 + $0x120] sm:$0xff]
      %v265 = vld [vmem:[%s1 + $0x128] sm:$0xff]
      %v266 = vld [vmem:[%s1 + $0x130] sm:$0xff]
      %v267 = vld [vmem:[%s1 + $0x138] sm:$0xff]
      %v268 = vld [vmem:[%s1 + $0x140] sm:$0xff]
      %v269 = vld [vmem:[%s1 + $0x148] sm:$0xff]
      %v270 = vld [vmem:[%s1 + $0x150] sm:$0xff]
      %v271 = vld [vmem:[%s1 + $0x158] sm:$0xff]
      %v272 = vld [vmem:[%s1 + $0x160] sm:$0xff]
      %v273 = vld [vmem:[%s1 + $0x168] sm:$0xff]
      %v274 = vld [vmem:[%s1 + $0x170] sm:$0xff]
      %v275 = vld [vmem:[%s1 + $0x178] sm:$0xff]
      %v276 = vld [vmem:[%s1 + $0x180] sm:$0xff]
      %v277 = vld [vmem:[%s1 + $0x188] sm:$0xff]
      %v278 = vld [vmem:[%s1 + $0x190] sm:$0xff]
      %v279 = vld [vmem:[%s1 + $0x198] sm:$0xff]
      %v280 = vld [vmem:[%s1 + $0x1a0] sm:$0xff]
      %v281 = vld [vmem:[%s1 + $0x1a8] sm:$0xff]
      %v282 = vld [vmem:[%s1 + $0x1b0] sm:$0xff]
      %v283 = vld [vmem:[%s1 + $0x1b8] sm:$0xff]
      %v284 = vld [vmem:[%s1 + $0x1c0] sm:$0xff]
      %v285 = vld [vmem:[%s1 + $0x1c8] sm:$0xff]
      %v286 = vld [vmem:[%s1 + $0x1d0] sm:$0xff]
      %v287 = vld [vmem:[%s1 + $0x1d8] sm:$0xff]
      %v288 = vld [vmem:[%s1 + $0x1e0] sm:$0xff]
      %v289 = vld [vmem:[%s1 + $0x1e8] sm:$0xff]
      %v290 = vld [vmem:[%s1 + $0x1f0] sm:$0xff]
      %v291 = vld [vmem:[%s1 + $0x1f8] sm:$0xff]
      %v292 = vld [vmem:[%s1 + $0x200] sm:$0xff]
      %v293 = vld [vmem:[%s1 + $0x208] sm:$0xff]
      %v294 = vld [vmem:[%s1 + $0x210] sm:$0xff]
      %v295 = vld [vmem:[%s1 + $0x218] sm:$0xff]
      %v296 = vld [vmem:[%s1 + $0x220] sm:$0xff]
      %v297 = vld [vmem:[%s1 + $0x228] sm:$0xff]
      %v298 = vld [vmem:[%s1 + $0x230] sm:$0xff]
      %v299 = vld [vmem:[%s1 + $0x238] sm:$0xff]
      %v300 = vld [vmem:[%s1 + $0x240] sm:$0xff]
      %v301 = vld [vmem:[%s1 + $0x248] sm:$0xff]
      %v302 = vld [vmem:[%s1 + $0x250] sm:$0xff]
      %v303 = vld [vmem:[%s1 + $0x258] sm:$0xff]
      %v304 = vld [vmem:[%s1 + $0x260] sm:$0xff]
      %v305 = vld [vmem:[%s1 + $0x268] sm:$0xff]
      %v306 = vld [vmem:[%s1 + $0x270] sm:$0xff]
      %v307 = vld [vmem:[%s1 + $0x278] sm:$0xff]
      %v308 = vld [vmem:[%s1 + $0x280] sm:$0xff]
      %v309 = vld [vmem:[%s1 + $0x288] sm:$0xff]
      %v310 = vld [vmem:[%s1 + $0x290] sm:$0xff]
      %v311 = vld [vmem:[%s1 + $0x298] sm:$0xff]
      %v312 = vld [vmem:[%s1 + $0x2a0] sm:$0xff]
      %v313 = vld [vmem:[%s1 + $0x2a8] sm:$0xff]
      %v314 = vld [vmem:[%s1 + $0x2b0] sm:$0xff]
      %v315 = vld [vmem:[%s1 + $0x2b8] sm:$0xff]
      %v316 = vld [vmem:[%s1 + $0x2c0] sm:$0xff]
      %v317 = vld [vmem:[%s1 + $0x2c8] sm:$0xff]
      %v318 = vld [vmem:[%s1 + $0x2d0] sm:$0xff]
      %v319 = vld [vmem:[%s1 + $0x2d8] sm:$0xff]
      %v320 = vld [vmem:[%s1 + $0x2e0] sm:$0xff]
      %v321 = vld [vmem:[%s1 + $0x2e8] sm:$0xff]
      %v322 = vld [vmem:[%s1 + $0x2f0] sm:$0xff]
      %v323 = vld [vmem:[%s1 + $0x2f8] sm:$0xff]
      %v324 = vld [vmem:[%s1 + $0x300] sm:$0xff]
      %v325 = vld [vmem:[%s1 + $0x308] sm:$0xff]
      %v326 = vld [vmem:[%s1 + $0x310] sm:$0xff]
      %v327 = vld [vmem:[%s1 + $0x318] sm:$0xff]
      %v328 = vld [vmem:[%s1 + $0x320] sm:$0xff]
      %v329 = vld [vmem:[%s1 + $0x328] sm:$0xff]
      %v330 = vld [vmem:[%s1 + $0x330] sm:$0xff]
      %v331 = vld [vmem:[%s1 + $0x338] sm:$0xff]
      %v332 = vld [vmem:[%s1 + $0x340] sm:$0xff]
      %v333 = vld [vmem:[%s1 + $0x348] sm:$0xff]
      %v334 = vld [vmem:[%s1 + $0x350] sm:$0xff]
      %v335 = vld [vmem:[%s1 + $0x358] sm:$0xff]
      %v336 = vld [vmem:[%s1 + $0x360] sm:$0xff]
      %v337 = vld [vmem:[%s1 + $0x368] sm:$0xff]
      %v338 = vld [vmem:[%s1 + $0x370] sm:$0xff]
      %v339 = vld [vmem:[%s1 + $0x378] sm:$0xff]
      %v340 = vld [vmem:[%s1 + $0x380] sm:$0xff]
      %v341 = vld [vmem:[%s1 + $0x388] sm:$0xff]
      %v342 = vld [vmem:[%s1 + $0x390] sm:$0xff]
      %v343 = vld [vmem:[%s1 + $0x398] sm:$0xff]
      %v344 = vld [vmem:[%s1 + $0x3a0] sm:$0xff]
      %v345 = vld [vmem:[%s1 + $0x3a8] sm:$0xff]
      %v346 = vld [vmem:[%s1 + $0x3b0] sm:$0xff]
      %v347 = vld [vmem:[%s1 + $0x3b8] sm:$0xff]
      %v348 = vld [vmem:[%s1 + $0x3c0] sm:$0xff]
      %v349 = vld [vmem:[%s1 + $0x3c8] sm:$0xff]
      %v350 = vld [vmem:[%s1 + $0x3d0] sm:$0xff]
      %v351 = vld [vmem:[%s1 + $0x3d8] sm:$0xff]
      %v352 = vld [vmem:[%s1 + $0x3e0] sm:$0xff]
      %v353 = vld [vmem:[%s1 + $0x3e8] sm:$0xff]
      %v354 = vld [vmem:[%s1 + $0x3f0] sm:$0xff]
      %v355 = vld [vmem:[%s1 + $0x3f8] sm:$0xff]
      %v356 = vld [vmem:[%s1 + $0x400] sm:$0xff]
      %v357 = vld [vmem:[%s1 + $0x408] sm:$0xff]
      %v358 = vld [vmem:[%s1 + $0x410] sm:$0xff]
      %v359 = vld [vmem:[%s1 + $0x418] sm:$0xff]
      %v360 = vld [vmem:[%s1 + $0x420] sm:$0xff]
      %v361 = vld [vmem:[%s1 + $0x428] sm:$0xff]
      %v362 = vld [vmem:[%s1 + $0x430] sm:$0xff]
      %v363 = vld [vmem:[%s1 + $0x438] sm:$0xff]
      %v364 = vld [vmem:[%s1 + $0x440] sm:$0xff]
      %v365 = vld [vmem:[%s1 + $0x448] sm:$0xff]
      %v366 = vld [vmem:[%s1 + $0x450] sm:$0xff]
      %v367 = vld [vmem:[%s1 + $0x458] sm:$0xff]
      %v368 = vld [vmem:[%s1 + $0x460] sm:$0xff]
      %v369 = vld [vmem:[%s1 + $0x468] sm:$0xff]
      %v370 = vld [vmem:[%s1 + $0x470] sm:$0xff]
      %v371 = vld [vmem:[%s1 + $0x478] sm:$0xff]
      %v372 = vld [vmem:[%s1 + $0x480] sm:$0xff]
      %v373 = vld [vmem:[%s1 + $0x488] sm:$0xff]
      %v374 = vld [vmem:[%s1 + $0x490] sm:$0xff]
      %v375 = vld [vmem:[%s1 + $0x498] sm:$0xff]
      %v376 = vld [vmem:[%s1 + $0x4a0] sm:$0xff]
      %v377 = vld [vmem:[%s1 + $0x4a8] sm:$0xff]
      %v378 = vld [vmem:[%s1 + $0x4b0] sm:$0xff]
      %v379 = vld [vmem:[%s1 + $0x4b8] sm:$0xff]
      %v380 = vld [vmem:[%s1 + $0x4c0] sm:$0xff]
      %v381 = vld [vmem:[%s1 + $0x4c8] sm:$0xff]
      %v382 = vld [vmem:[%s1 + $0x4d0] sm:$0xff]
      %v383 = vld [vmem:[%s1 + $0x4d8] sm:$0xff]
      %v384 = vld [vmem:[%s1 + $0x4e0] sm:$0xff]
      %v385 = vld [vmem:[%s1 + $0x4e8] sm:$0xff]
      %v386 = vld [vmem:[%s1 + $0x4f0] sm:$0xff]
      %v387 = vld [vmem:[%s1 + $0x4f8] sm:$0xff]
      %v388 = vld [vmem:[%s1 + $0x500] sm:$0xff]
      %v389 = vld [vmem:[%s1 + $0x508] sm:$0xff]
      %v390 = vld [vmem:[%s1 + $0x510] sm:$0xff]
      %v391 = vld [vmem:[%s1 + $0x518] sm:$0xff]
      %v392 = vld [vmem:[%s1 + $0x520] sm:$0xff]
      %v393 = vld [vmem:[%s1 + $0x528] sm:$0xff]
      %v394 = vld [vmem:[%s1 + $0x530] sm:$0xff]
      %v395 = vld [vmem:[%s1 + $0x538] sm:$0xff]
      %v396 = vld [vmem:[%s1 + $0x540] sm:$0xff]
      %v397 = vld [vmem:[%s1 + $0x548] sm:$0xff]
      %v398 = vld [vmem:[%s1 + $0x550] sm:$0xff]
      %v399 = vld [vmem:[%s1 + $0x558] sm:$0xff]
      %v400 = vld [vmem:[%s1 + $0x560] sm:$0xff]
      %v401 = vld [vmem:[%s1 + $0x568] sm:$0xff]
      %v402 = vld [vmem:[%s1 + $0x570] sm:$0xff]
      %v403 = vld [vmem:[%s1 + $0x578] sm:$0xff]
      %v404 = vld [vmem:[%s1 + $0x580] sm:$0xff]
      %v405 = vld [vmem:[%s1 + $0x588] sm:$0xff]
      %v406 = vld [vmem:[%s1 + $0x590] sm:$0xff]
      %v407 = vld [vmem:[%s1 + $0x598] sm:$0xff]
      %v408 = vld [vmem:[%s1 + $0x5a0] sm:$0xff]
      %v409 = vld [vmem:[%s1 + $0x5a8] sm:$0xff]
      %v410 = vld [vmem:[%s1 + $0x5b0] sm:$0xff]
      %v411 = vld [vmem:[%s1 + $0x5b8] sm:$0xff]
      %v412 = vld [vmem:[%s1 + $0x5c0] sm:$0xff]
      %v413 = vld [vmem:[%s1 + $0x5c8] sm:$0xff]
      %v414 = vld [vmem:[%s1 + $0x5d0] sm:$0xff]
      %v415 = vld [vmem:[%s1 + $0x5d8] sm:$0xff]
      %v416 = vld [vmem:[%s1 + $0x5e0] sm:$0xff]
      %v417 = vld [vmem:[%s1 + $0x5e8] sm:$0xff]
      %v418 = vld [vmem:[%s1 + $0x5f0] sm:$0xff]
      %v419 = vld [vmem:[%s1 + $0x5f8] sm:$0xff]
      %vm420 = vcmask 785408
      %v422 = vsel %vm420, %v201, 0
      %v425 = vsel %vm420, %v202, 0
      %v428 = vsel %vm420, %v203, 0
      %v431 = vsel %vm420, %v204, 0
      %v434 = vsel %vm420, %v205, 0
      %v437 = vsel %vm420, %v206, 0
      %v440 = vsel %vm420, %v207, 0
      %v443 = vsel %vm420, %v208, 0
      %v446 = vsel %vm420, %v209, 0
      %v449 = vsel %vm420, %v210, 0
      %v452 = vsel %vm420, %v211, 0
      %v455 = vsel %vm420, %v212, 0
      %v458 = vsel %vm420, %v213, 0
      %v461 = vsel %vm420, %v214, 0
      %v464 = vsel %vm420, %v215, 0
      %v467 = vsel %vm420, %v216, 0
      %469 = vmatprep.subr.mxu0 %v229
      %470 = vmatpush1.msra.mxu0 %v228
      %471 = vmatprep.subr.mxu0 %v245
      %472 = vmatpush1.msra.mxu0 %v244
      %473 = vmatprep.subr.mxu0 %v261
      %474 = vmatpush1.msra.mxu0 %v260
      %475 = vmatprep.subr.mxu0 %v277
      %476 = vmatpush1.msra.mxu0 %v276
      %477 = vmatprep.subr.mxu0 %v293
      %478 = vmatpush1.msra.mxu0 %v292
      %479 = vmatprep.subr.mxu0 %v309
      %480 = vmatpush1.msra.mxu0 %v308
      %481 = vmatprep.subr.mxu0 %v325
      %482 = vmatpush1.msra.mxu0 %v324
      %483 = vmatprep.subr.mxu0 %v341
      %484 = vmatpush1.msra.mxu0 %v340
      %485 = vmatprep.subr.mxu0 %v357
      %486 = vmatpush1.msra.mxu0 %v356
      %487 = vmatprep.subr.mxu0 %v373
      %488 = vmatpush1.msra.mxu0 %v372
      %489 = vmatprep.subr.mxu0 %v389
      %490 = vmatpush1.msra.mxu0 %v388
      %491 = vmatprep.subr.mxu0 %v405
      %492 = vmatpush1.msra.mxu0 %v404
      %493 = vmatprep.subr.mxu0 0.0
      %494 = vmatpush1.msra.mxu0 0.0
      %495 = vmatprep.subr.mxu0 0.0
      %496 = vmatpush1.msra.mxu0 0.0
      %497 = vmatprep.subr.mxu0 0.0
      %498 = vmatpush1.msra.mxu0 0.0
      %499 = vmatprep.subr.mxu0 0.0
      %500 = vmatpush1.msra.mxu0 0.0
      %501 = vmatprep.subr.mxu0 0.0
      %502 = vmatpush1.msra.mxu0 0.0
      %503 = vmatprep.subr.mxu0 0.0
      %504 = vmatpush1.msra.mxu0 0.0
      %505 = vmatprep.subr.mxu0 0.0
      %506 = vmatpush1.msra.mxu0 0.0
      %507 = vmatprep.subr.mxu0 0.0
      %508 = vmatpush1.msra.mxu0 0.0
      %509 = vmatprep.subr.mxu0 0.0
      %510 = vmatpush1.msra.mxu0 0.0
      %511 = vmatprep.subr.mxu0 0.0
      %512 = vmatpush1.msra.mxu0 0.0
      %513 = vmatprep.subr.mxu0 0.0
      %514 = vmatpush1.msra.mxu0 0.0
      %515 = vmatprep.subr.mxu0 0.0
      %516 = vmatpush1.msra.mxu0 0.0
      %517 = vmatprep.subr.mxu0 0.0
      %518 = vmatpush1.msra.mxu0 0.0
      %519 = vmatprep.subr.mxu0 0.0
      %520 = vmatpush1.msra.mxu0 0.0
      %521 = vmatprep.subr.mxu0 0.0
      %522 = vmatpush1.msra.mxu0 0.0
      %523 = vmatprep.subr.mxu0 0.0
      %524 = vmatpush1.msra.mxu0 0.0
      %525 = vmatprep.subr.mxu0 0.0
      %526 = vmatpush1.msra.mxu0 0.0
      %527 = vmatprep.subr.mxu0 0.0
      %528 = vmatpush1.msra.mxu0 0.0
      %529 = vmatprep.subr.mxu0 0.0
      %530 = vmatpush1.msra.mxu0 0.0
      %531 = vmatprep.subr.mxu0 0.0
      %532 = vmatpush1.msra.mxu0 0.0
      %533 = vmatprep.mubr.f32.mxu0 0.0
      %534 = vmatmul.mubr.f32.gmra.mrb[0].mxu0 %v422
      %v535 = vpop.f32.mrb[0].mxu0
      %v536 = vadd.f32 0.0, %v535
      %v537 = vpop.f32.mrb[0].mxu0
      %v538 = vadd.f32 0.0, %v537
      %539 = vmatprep.mubr.f32.mxu0 0.0
      %540 = vmatmul.mubr.f32.gmra.mrb[0].mxu0 %v425
      %v541 = vpop.f32.mrb[0].mxu0
      %v542 = vadd.f32 0.0, %v541
      %v543 = vpop.f32.mrb[0].mxu0
      %v544 = vadd.f32 0.0, %v543
      %545 = vmatprep.mubr.f32.mxu0 0.0
      %546 = vmatmul.mubr.f32.gmra.mrb[0].mxu0 %v428
      %v547 = vpop.f32.mrb[0].mxu0
      %v548 = vadd.f32 0.0, %v547
      %v549 = vpop.f32.mrb[0].mxu0
      %v550 = vadd.f32 0.0, %v549
      %551 = vmatprep.mubr.f32.mxu0 0.0
      %552 = vmatmul.mubr.f32.gmra.mrb[0].mxu0 %v431
      %v553 = vpop.f32.mrb[0].mxu0
      %v554 = vadd.f32 0.0, %v553
      %v555 = vpop.f32.mrb[0].mxu0
      %v556 = vadd.f32 0.0, %v555
      %557 = vmatprep.mubr.f32.mxu0 0.0
      %558 = vmatmul.mubr.f32.gmra.mrb[0].mxu0 %v434
      %v559 = vpop.f32.mrb[0].mxu0
      %v560 = vadd.f32 0.0, %v559
      %v561 = vpop.f32.mrb[0].mxu0
      %v562 = vadd.f32 0.0, %v561
      %563 = vmatprep.mubr.f32.mxu0 0.0
      %564 = vmatmul.mubr.f32.gmra.mrb[0].mxu0 %v437
      %v565 = vpop.f32.mrb[0].mxu0
      %v566 = vadd.f32 0.0, %v565
      %v567 = vpop.f32.mrb[0].mxu0
      %v568 = vadd.f32 0.0, %v567
      %569 = vmatprep.mubr.f32.mxu0 0.0
      %570 = vmatmul.mubr.f32.gmra.mrb[0].mxu0 %v440
      %v571 = vpop.f32.mrb[0].mxu0
      %v572 = vadd.f32 0.0, %v571
      %v573 = vpop.f32.mrb[0].mxu0
      %v574 = vadd.f32 0.0, %v573
      %575 = vmatprep.mubr.f32.mxu0 0.0
      %576 = vmatmul.mubr.f32.gmra.mrb[0].mxu0 %v443
      %v577 = vpop.f32.mrb[0].mxu0
      %v578 = vadd.f32 0.0, %v577
      %v579 = vpop.f32.mrb[0].mxu0
      %v580 = vadd.f32 0.0, %v579
      %581 = vmatprep.mubr.f32.mxu0 0.0
      %582 = vmatmul.mubr.f32.gmra.mrb[0].mxu0 %v446
      %v583 = vpop.f32.mrb[0].mxu0
      %v584 = vadd.f32 0.0, %v583
      %v585 = vpop.f32.mrb[0].mxu0
      %v586 = vadd.f32 0.0, %v585
      %587 = vmatprep.mubr.f32.mxu0 0.0
      %588 = vmatmul.mubr.f32.gmra.mrb[0].mxu0 %v449
      %v589 = vpop.f32.mrb[0].mxu0
      %v590 = vadd.f32 0.0, %v589
      %v591 = vpop.f32.mrb[0].mxu0
      %v592 = vadd.f32 0.0, %v591
      %593 = vmatprep.mubr.f32.mxu0 0.0
      %594 = vmatmul.mubr.f32.gmra.mrb[0].mxu0 %v452
      %v595 = vpop.f32.mrb[0].mxu0
      %v596 = vadd.f32 0.0, %v595
      %v597 = vpop.f32.mrb[0].mxu0
      %v598 = vadd.f32 0.0, %v597
      %599 = vmatprep.mubr.f32.mxu0 0.0
      %600 = vmatmul.mubr.f32.gmra.mrb[0].mxu0 %v455
      %v601 = vpop.f32.mrb[0].mxu0
      %v602 = vadd.f32 0.0, %v601
      %v603 = vpop.f32.mrb[0].mxu0
      %v604 = vadd.f32 0.0, %v603
      %605 = vmatprep.mubr.f32.mxu0 0.0
      %606 = vmatmul.mubr.f32.gmra.mrb[0].mxu0 %v458
      %v607 = vpop.f32.mrb[0].mxu0
      %v608 = vadd.f32 0.0, %v607
      %v609 = vpop.f32.mrb[0].mxu0
      %v610 = vadd.f32 0.0, %v609
      %611 = vmatprep.mubr.f32.mxu0 0.0
      %612 = vmatmul.mubr.f32.gmra.mrb[0].mxu0 %v461
      %v613 = vpop.f32.mrb[0].mxu0
      %v614 = vadd.f32 0.0, %v613
      %v615 = vpop.f32.mrb[0].mxu0
      %v616 = vadd.f32 0.0, %v615
      %617 = vmatprep.mubr.f32.mxu0 0.0
      %618 = vmatmul.mubr.f32.gmra.mrb[0].mxu0 %v464
      %v619 = vpop.f32.mrb[0].mxu0
      %v620 = vadd.f32 0.0, %v619
      %v621 = vpop.f32.mrb[0].mxu0
      %v622 = vadd.f32 0.0, %v621
      %623 = vmatprep.mubr.f32.mxu0 0.0
      %624 = vmatmul.mubr.f32.gmra.mrb[0].mxu0 %v467
      %v625 = vpop.f32.mrb[0].mxu0
      %v626 = vadd.f32 0.0, %v625
      %v627 = vpop.f32.mrb[0].mxu0
      %v628 = vadd.f32 0.0, %v627
      %629 = vdwg.mxu0
      %630 = vmatprep.subr.mxu0 %v231
      %631 = vmatpush1.msra.mxu0 %v230
      %632 = vmatprep.subr.mxu0 %v247
      %633 = vmatpush1.msra.mxu0 %v246
      %634 = vmatprep.subr.mxu0 %v263
      %635 = vmatpush1.msra.mxu0 %v262
      %636 = vmatprep.subr.mxu0 %v279
      %637 = vmatpush1.msra.mxu0 %v278
      %638 = vmatprep.subr.mxu0 %v295
      %639 = vmatpush1.msra.mxu0 %v294
      %640 = vmatprep.subr.mxu0 %v311
      %641 = vmatpush1.msra.mxu0 %v310
      %642 = vmatprep.subr.mxu0 %v327
      %643 = vmatpush1.msra.mxu0 %v326
      %644 = vmatprep.subr.mxu0 %v343
      %645 = vmatpush1.msra.mxu0 %v342
      %646 = vmatprep.subr.mxu0 %v359
      %647 = vmatpush1.msra.mxu0 %v358
      %648 = vmatprep.subr.mxu0 %v375
      %649 = vmatpush1.msra.mxu0 %v374
      %650 = vmatprep.subr.mxu0 %v391
      %651 = vmatpush1.msra.mxu0 %v390
      %652 = vmatprep.subr.mxu0 %v407
      %653 = vmatpush1.msra.mxu0 %v406
      %654 = vmatprep.subr.mxu0 0.0
      %655 = vmatpush1.msra.mxu0 0.0
      %656 = vmatprep.subr.mxu0 0.0
      %657 = vmatpush1.msra.mxu0 0.0
      %658 = vmatprep.subr.mxu0 0.0
      %659 = vmatpush1.msra.mxu0 0.0
      %660 = vmatprep.subr.mxu0 0.0
      %661 = vmatpush1.msra.mxu0 0.0
      %662 = vmatprep.subr.mxu0 0.0
      %663 = vmatpush1.msra.mxu0 0.0
      %664 = vmatprep.subr.mxu0 0.0
      %665 = vmatpush1.msra.mxu0 0.0
      %666 = vmatprep.subr.mxu0 0.0
      %667 = vmatpush1.msra.mxu0 0.0
      %668 = vmatprep.subr.mxu0 0.0
      %669 = vmatpush1.msra.mxu0 0.0
      %670 = vmatprep.subr.mxu0 0.0
      %671 = vmatpush1.msra.mxu0 0.0
      %672 = vmatprep.subr.mxu0 0.0
      %673 = vmatpush1.msra.mxu0 0.0
      %674 = vmatprep.subr.mxu0 0.0
      %675 = vmatpush1.msra.mxu0 0.0
      %676 = vmatprep.subr.mxu0 0.0
      %677 = vmatpush1.msra.mxu0 0.0
      %678 = vmatprep.subr.mxu0 0.0
      %679 = vmatpush1.msra.mxu0 0.0
      %680 = vmatprep.subr.mxu0 0.0
      %681 = vmatpush1.msra.mxu0 0.0
      %682 = vmatprep.subr.mxu0 0.0
      %683 = vmatpush1.msra.mxu0 0.0
      %684 = vmatprep.subr.mxu0 0.0
      %685 = vmatpush1.msra.mxu0 0.0
      %686 = vmatprep.subr.mxu0 0.0
      %687 = vmatpush1.msra.mxu0 0.0
      %688 = vmatprep.subr.mxu0 0.0
      %689 = vmatpush1.msra.mxu0 0.0
      %690 = vmatprep.subr.mxu0 0.0
      %691 = vmatpush1.msra.mxu0 0.0
      %692 = vmatprep.subr.mxu0 0.0
      %693 = vmatpush1.msra.mxu0 0.0
      %694 = vmatprep.mubr.f32.mxu0 0.0
      %695 = vmatmul.mubr.f32.gmra.mrb[0].mxu0 %v422
      %v696 = vpop.f32.mrb[0].mxu0
      %v697 = vadd.f32 0.0, %v696
      %v698 = vpop.f32.mrb[0].mxu0
      %v699 = vadd.f32 0.0, %v698
      %700 = vmatprep.mubr.f32.mxu0 0.0
      %701 = vmatmul.mubr.f32.gmra.mrb[0].mxu0 %v425
      %v702 = vpop.f32.mrb[0].mxu0
      %v703 = vadd.f32 0.0, %v702
      %v704 = vpop.f32.mrb[0].mxu0
      %v705 = vadd.f32 0.0, %v704
      %706 = vmatprep.mubr.f32.mxu0 0.0
      %707 = vmatmul.mubr.f32.gmra.mrb[0].mxu0 %v428
      %v708 = vpop.f32.mrb[0].mxu0
      %v709 = vadd.f32 0.0, %v708
      %v710 = vpop.f32.mrb[0].mxu0
      %v711 = vadd.f32 0.0, %v710
      %712 = vmatprep.mubr.f32.mxu0 0.0
      %713 = vmatmul.mubr.f32.gmra.mrb[0].mxu0 %v431
      %v714 = vpop.f32.mrb[0].mxu0
      %v715 = vadd.f32 0.0, %v714
      %v716 = vpop.f32.mrb[0].mxu0
      %v717 = vadd.f32 0.0, %v716
      %718 = vmatprep.mubr.f32.mxu0 0.0
      %719 = vmatmul.mubr.f32.gmra.mrb[0].mxu0 %v434
      %v720 = vpop.f32.mrb[0].mxu0
      %v721 = vadd.f32 0.0, %v720
      %v722 = vpop.f32.mrb[0].mxu0
      %v723 = vadd.f32 0.0, %v722
      %724 = vmatprep.mubr.f32.mxu0 0.0
      %725 = vmatmul.mubr.f32.gmra.mrb[0].mxu0 %v437
      %v726 = vpop.f32.mrb[0].mxu0
      %v727 = vadd.f32 0.0, %v726
      %v728 = vpop.f32.mrb[0].mxu0
      %v729 = vadd.f32 0.0, %v728
      %730 = vmatprep.mubr.f32.mxu0 0.0
      %731 = vmatmul.mubr.f32.gmra.mrb[0].mxu0 %v440
      %v732 = vpop.f32.mrb[0].mxu0
      %v733 = vadd.f32 0.0, %v732
      %v734 = vpop.f32.mrb[0].mxu0
      %v735 = vadd.f32 0.0, %v734
      %736 = vmatprep.mubr.f32.mxu0 0.0
      %737 = vmatmul.mubr.f32.gmra.mrb[0].mxu0 %v443
      %v738 = vpop.f32.mrb[0].mxu0
      %v739 = vadd.f32 0.0, %v738
      %v740 = vpop.f32.mrb[0].mxu0
      %v741 = vadd.f32 0.0, %v740
      %742 = vmatprep.mubr.f32.mxu0 0.0
      %743 = vmatmul.mubr.f32.gmra.mrb[0].mxu0 %v446
      %v744 = vpop.f32.mrb[0].mxu0
      %v745 = vadd.f32 0.0, %v744
      %v746 = vpop.f32.mrb[0].mxu0
      %v747 = vadd.f32 0.0, %v746
      %748 = vmatprep.mubr.f32.mxu0 0.0
      %749 = vmatmul.mubr.f32.gmra.mrb[0].mxu0 %v449
      %v750 = vpop.f32.mrb[0].mxu0
      %v751 = vadd.f32 0.0, %v750
      %v752 = vpop.f32.mrb[0].mxu0
      %v753 = vadd.f32 0.0, %v752
      %754 = vmatprep.mubr.f32.mxu0 0.0
      %755 = vmatmul.mubr.f32.gmra.mrb[0].mxu0 %v452
      %v756 = vpop.f32.mrb[0].mxu0
      %v757 = vadd.f32 0.0, %v756
      %v758 = vpop.f32.mrb[0].mxu0
      %v759 = vadd.f32 0.0, %v758
      %760 = vmatprep.mubr.f32.mxu0 0.0
      %761 = vmatmul.mubr.f32.gmra.mrb[0].mxu0 %v455
      %v762 = vpop.f32.mrb[0].mxu0
      %v763 = vadd.f32 0.0, %v762
      %v764 = vpop.f32.mrb[0].mxu0
      %v765 = vadd.f32 0.0, %v764
      %766 = vmatprep.mubr.f32.mxu0 0.0
      %767 = vmatmul.mubr.f32.gmra.mrb[0].mxu0 %v458
      %v768 = vpop.f32.mrb[0].mxu0
      %v769 = vadd.f32 0.0, %v768
      %v770 = vpop.f32.mrb[0].mxu0
      %v771 = vadd.f32 0.0, %v770
      %772 = vmatprep.mubr.f32.mxu0 0.0
      %773 = vmatmul.mubr.f32.gmra.mrb[0].mxu0 %v461
      %v774 = vpop.f32.mrb[0].mxu0
      %v775 = vadd.f32 0.0, %v774
      %v776 = vpop.f32.mrb[0].mxu0
      %v777 = vadd.f32 0.0, %v776
      %778 = vmatprep.mubr.f32.mxu0 0.0
      %779 = vmatmul.mubr.f32.gmra.mrb[0].mxu0 %v464
      %v780 = vpop.f32.mrb[0].mxu0
      %v781 = vadd.f32 0.0, %v780
      %v782 = vpop.f32.mrb[0].mxu0
      %v783 = vadd.f32 0.0, %v782
      %784 = vmatprep.mubr.f32.mxu0 0.0
      %785 = vmatmul.mubr.f32.gmra.mrb[0].mxu0 %v467
      %v786 = vpop.f32.mrb[0].mxu0
      %v787 = vadd.f32 0.0, %v786
      %v788 = vpop.f32.mrb[0].mxu0
      %v789 = vadd.f32 0.0, %v788
      %790 = vdwg.mxu0
      %791 = vmatprep.subr.mxu0 %v233
      %792 = vmatpush1.msra.mxu0 %v232
      %793 = vmatprep.subr.mxu0 %v249
      %794 = vmatpush1.msra.mxu0 %v248
      %795 = vmatprep.subr.mxu0 %v265
      %796 = vmatpush1.msra.mxu0 %v264
      %797 = vmatprep.subr.mxu0 %v281
      %798 = vmatpush1.msra.mxu0 %v280
      %799 = vmatprep.subr.mxu0 %v297
      %800 = vmatpush1.msra.mxu0 %v296
      %801 = vmatprep.subr.mxu0 %v313
      %802 = vmatpush1.msra.mxu0 %v312
      %803 = vmatprep.subr.mxu0 %v329
      %804 = vmatpush1.msra.mxu0 %v328
      %805 = vmatprep.subr.mxu0 %v345
      %806 = vmatpush1.msra.mxu0 %v344
      %807 = vmatprep.subr.mxu0 %v361
      %808 = vmatpush1.msra.mxu0 %v360
      %809 = vmatprep.subr.mxu0 %v377
      %810 = vmatpush1.msra.mxu0 %v376
      %811 = vmatprep.subr.mxu0 %v393
      %812 = vmatpush1.msra.mxu0 %v392
      %813 = vmatprep.subr.mxu0 %v409
      %814 = vmatpush1.msra.mxu0 %v408
      %815 = vmatprep.subr.mxu0 0.0
      %816 = vmatpush1.msra.mxu0 0.0
      %817 = vmatprep.subr.mxu0 0.0
      %818 = vmatpush1.msra.mxu0 0.0
      %819 = vmatprep.subr.mxu0 0.0
      %820 = vmatpush1.msra.mxu0 0.0
      %821 = vmatprep.subr.mxu0 0.0
      %822 = vmatpush1.msra.mxu0 0.0
      %823 = vmatprep.subr.mxu0 0.0
      %824 = vmatpush1.msra.mxu0 0.0
      %825 = vmatprep.subr.mxu0 0.0
      %826 = vmatpush1.msra.mxu0 0.0
      %827 = vmatprep.subr.mxu0 0.0
      %828 = vmatpush1.msra.mxu0 0.0
      %829 = vmatprep.subr.mxu0 0.0
      %830 = vmatpush1.msra.mxu0 0.0
      %831 = vmatprep.subr.mxu0 0.0
      %832 = vmatpush1.msra.mxu0 0.0
      %833 = vmatprep.subr.mxu0 0.0
      %834 = vmatpush1.msra.mxu0 0.0
      %835 = vmatprep.subr.mxu0 0.0
      %836 = vmatpush1.msra.mxu0 0.0
      %837 = vmatprep.subr.mxu0 0.0
      %838 = vmatpush1.msra.mxu0 0.0
      %839 = vmatprep.subr.mxu0 0.0
      %840 = vmatpush1.msra.mxu0 0.0
      %841 = vmatprep.subr.mxu0 0.0
      %842 = vmatpush1.msra.mxu0 0.0
      %843 = vmatprep.subr.mxu0 0.0
      %844 = vmatpush1.msra.mxu0 0.0
      %845 = vmatprep.subr.mxu0 0.0
      %846 = vmatpush1.msra.mxu0 0.0
      %847 = vmatprep.subr.mxu0 0.0
      %848 = vmatpush1.msra.mxu0 0.0
      %849 = vmatprep.subr.mxu0 0.0
      %850 = vmatpush1.msra.mxu0 0.0
      %851 = vmatprep.subr.mxu0 0.0
      %852 = vmatpush1.msra.mxu0 0.0
      %853 = vmatprep.subr.mxu0 0.0
      %854 = vmatpush1.msra.mxu0 0.0
      %855 = vmatprep.mubr.f32.mxu0 0.0
      %856 = vmatmul.mubr.f32.gmra.mrb[0].mxu0 %v422
      %v857 = vpop.f32.mrb[0].mxu0
      %v858 = vadd.f32 0.0, %v857
      %v859 = vpop.f32.mrb[0].mxu0
      %v860 = vadd.f32 0.0, %v859
      %861 = vmatprep.mubr.f32.mxu0 0.0
      %862 = vmatmul.mubr.f32.gmra.mrb[0].mxu0 %v425
      %v863 = vpop.f32.mrb[0].mxu0
      %v864 = vadd.f32 0.0, %v863
      %v865 = vpop.f32.mrb[0].mxu0
      %v866 = vadd.f32 0.0, %v865
      %867 = vmatprep.mubr.f32.mxu0 0.0
      %868 = vmatmul.mubr.f32.gmra.mrb[0].mxu0 %v428
      %v869 = vpop.f32.mrb[0].mxu0
      %v870 = vadd.f32 0.0, %v869
      %v871 = vpop.f32.mrb[0].mxu0
      %v872 = vadd.f32 0.0, %v871
      %873 = vmatprep.mubr.f32.mxu0 0.0
      %874 = vmatmul.mubr.f32.gmra.mrb[0].mxu0 %v431
      %v875 = vpop.f32.mrb[0].mxu0
      %v876 = vadd.f32 0.0, %v875
      %v877 = vpop.f32.mrb[0].mxu0
      %v878 = vadd.f32 0.0, %v877
      %879 = vmatprep.mubr.f32.mxu0 0.0
      %880 = vmatmul.mubr.f32.gmra.mrb[0].mxu0 %v434
      %v881 = vpop.f32.mrb[0].mxu0
      %v882 = vadd.f32 0.0, %v881
      %v883 = vpop.f32.mrb[0].mxu0
      %v884 = vadd.f32 0.0, %v883
      %885 = vmatprep.mubr.f32.mxu0 0.0
      %886 = vmatmul.mubr.f32.gmra.mrb[0].mxu0 %v437
      %v887 = vpop.f32.mrb[0].mxu0
      %v888 = vadd.f32 0.0, %v887
      %v889 = vpop.f32.mrb[0].mxu0
      %v890 = vadd.f32 0.0, %v889
      %891 = vmatprep.mubr.f32.mxu0 0.0
      %892 = vmatmul.mubr.f32.gmra.mrb[0].mxu0 %v440
      %v893 = vpop.f32.mrb[0].mxu0
      %v894 = vadd.f32 0.0, %v893
      %v895 = vpop.f32.mrb[0].mxu0
      %v896 = vadd.f32 0.0, %v895
      %897 = vmatprep.mubr.f32.mxu0 0.0
      %898 = vmatmul.mubr.f32.gmra.mrb[0].mxu0 %v443
      %v899 = vpop.f32.mrb[0].mxu0
      %v900 = vadd.f32 0.0, %v899
      %v901 = vpop.f32.mrb[0].mxu0
      %v902 = vadd.f32 0.0, %v901
      %903 = vmatprep.mubr.f32.mxu0 0.0
      %904 = vmatmul.mubr.f32.gmra.mrb[0].mxu0 %v446
      %v905 = vpop.f32.mrb[0].mxu0
      %v906 = vadd.f32 0.0, %v905
      %v907 = vpop.f32.mrb[0].mxu0
      %v908 = vadd.f32 0.0, %v907
      %909 = vmatprep.mubr.f32.mxu0 0.0
      %910 = vmatmul.mubr.f32.gmra.mrb[0].mxu0 %v449
      %v911 = vpop.f32.mrb[0].mxu0
      %v912 = vadd.f32 0.0, %v911
      %v913 = vpop.f32.mrb[0].mxu0
      %v914 = vadd.f32 0.0, %v913
      %915 = vmatprep.mubr.f32.mxu0 0.0
      %916 = vmatmul.mubr.f32.gmra.mrb[0].mxu0 %v452
      %v917 = vpop.f32.mrb[0].mxu0
      %v918 = vadd.f32 0.0, %v917
      %v919 = vpop.f32.mrb[0].mxu0
      %v920 = vadd.f32 0.0, %v919
      %921 = vmatprep.mubr.f32.mxu0 0.0
      %922 = vmatmul.mubr.f32.gmra.mrb[0].mxu0 %v455
      %v923 = vpop.f32.mrb[0].mxu0
      %v924 = vadd.f32 0.0, %v923
      %v925 = vpop.f32.mrb[0].mxu0
      %v926 = vadd.f32 0.0, %v925
      %927 = vmatprep.mubr.f32.mxu0 0.0
      %928 = vmatmul.mubr.f32.gmra.mrb[0].mxu0 %v458
      %v929 = vpop.f32.mrb[0].mxu0
      %v930 = vadd.f32 0.0, %v929
      %v931 = vpop.f32.mrb[0].mxu0
      %v932 = vadd.f32 0.0, %v931
      %933 = vmatprep.mubr.f32.mxu0 0.0
      %934 = vmatmul.mubr.f32.gmra.mrb[0].mxu0 %v461
      %v935 = vpop.f32.mrb[0].mxu0
      %v936 = vadd.f32 0.0, %v935
      %v937 = vpop.f32.mrb[0].mxu0
      %v938 = vadd.f32 0.0, %v937
      %939 = vmatprep.mubr.f32.mxu0 0.0
      %940 = vmatmul.mubr.f32.gmra.mrb[0].mxu0 %v464
      %v941 = vpop.f32.mrb[0].mxu0
      %v942 = vadd.f32 0.0, %v941
      %v943 = vpop.f32.mrb[0].mxu0
      %v944 = vadd.f32 0.0, %v943
      %945 = vmatprep.mubr.f32.mxu0 0.0
      %946 = vmatmul.mubr.f32.gmra.mrb[0].mxu0 %v467
      %v947 = vpop.f32.mrb[0].mxu0
      %v948 = vadd.f32 0.0, %v947
      %v949 = vpop.f32.mrb[0].mxu0
      %v950 = vadd.f32 0.0, %v949
      %951 = vdwg.mxu0
      %952 = vmatprep.subr.mxu0 %v235
      %953 = vmatpush1.msra.mxu0 %v234
      %954 = vmatprep.subr.mxu0 %v251
      %955 = vmatpush1.msra.mxu0 %v250
      %956 = vmatprep.subr.mxu0 %v267
      %957 = vmatpush1.msra.mxu0 %v266
      %958 = vmatprep.subr.mxu0 %v283
      %959 = vmatpush1.msra.mxu0 %v282
      %960 = vmatprep.subr.mxu0 %v299
      %961 = vmatpush1.msra.mxu0 %v298
      %962 = vmatprep.subr.mxu0 %v315
      %963 = vmatpush1.msra.mxu0 %v314
      %964 = vmatprep.subr.mxu0 %v331
      %965 = vmatpush1.msra.mxu0 %v330
      %966 = vmatprep.subr.mxu0 %v347
      %967 = vmatpush1.msra.mxu0 %v346
      %968 = vmatprep.subr.mxu0 %v363
      %969 = vmatpush1.msra.mxu0 %v362
      %970 = vmatprep.subr.mxu0 %v379
      %971 = vmatpush1.msra.mxu0 %v378
      %972 = vmatprep.subr.mxu0 %v395
      %973 = vmatpush1.msra.mxu0 %v394
      %974 = vmatprep.subr.mxu0 %v411
      %975 = vmatpush1.msra.mxu0 %v410
      %976 = vmatprep.subr.mxu0 0.0
      %977 = vmatpush1.msra.mxu0 0.0
      %978 = vmatprep.subr.mxu0 0.0
      %979 = vmatpush1.msra.mxu0 0.0
      %980 = vmatprep.subr.mxu0 0.0
      %981 = vmatpush1.msra.mxu0 0.0
      %982 = vmatprep.subr.mxu0 0.0
      %983 = vmatpush1.msra.mxu0 0.0
      %984 = vmatprep.subr.mxu0 0.0
      %985 = vmatpush1.msra.mxu0 0.0
      %986 = vmatprep.subr.mxu0 0.0
      %987 = vmatpush1.msra.mxu0 0.0
      %988 = vmatprep.subr.mxu0 0.0
      %989 = vmatpush1.msra.mxu0 0.0
      %990 = vmatprep.subr.mxu0 0.0
      %991 = vmatpush1.msra.mxu0 0.0
      %992 = vmatprep.subr.mxu0 0.0
      %993 = vmatpush1.msra.mxu0 0.0
      %994 = vmatprep.subr.mxu0 0.0
      %995 = vmatpush1.msra.mxu0 0.0
      %996 = vmatprep.subr.mxu0 0.0
      %997 = vmatpush1.msra.mxu0 0.0
      %998 = vmatprep.subr.mxu0 0.0
      %999 = vmatpush1.msra.mxu0 0.0
      %1000 = vmatprep.subr.mxu0 0.0
      %1001 = vmatpush1.msra.mxu0 0.0
      %1002 = vmatprep.subr.mxu0 0.0
      %1003 = vmatpush1.msra.mxu0 0.0
      %1004 = vmatprep.subr.mxu0 0.0
      %1005 = vmatpush1.msra.mxu0 0.0
      %1006 = vmatprep.subr.mxu0 0.0
      %1007 = vmatpush1.msra.mxu0 0.0
      %1008 = vmatprep.subr.mxu0 0.0
      %1009 = vmatpush1.msra.mxu0 0.0
      %1010 = vmatprep.subr.mxu0 0.0
      %1011 = vmatpush1.msra.mxu0 0.0
      %1012 = vmatprep.subr.mxu0 0.0
      %1013 = vmatpush1.msra.mxu0 0.0
      %1014 = vmatprep.subr.mxu0 0.0
      %1015 = vmatpush1.msra.mxu0 0.0
      %1016 = vmatprep.mubr.f32.mxu0 0.0
      %1017 = vmatmul.mubr.f32.gmra.mrb[0].mxu0 %v422
      %v1018 = vpop.f32.mrb[0].mxu0
      %v1019 = vadd.f32 0.0, %v1018
      %v1020 = vpop.f32.mrb[0].mxu0
      %v1021 = vadd.f32 0.0, %v1020
      %1022 = vmatprep.mubr.f32.mxu0 0.0
      %1023 = vmatmul.mubr.f32.gmra.mrb[0].mxu0 %v425
      %v1024 = vpop.f32.mrb[0].mxu0
      %v1025 = vadd.f32 0.0, %v1024
      %v1026 = vpop.f32.mrb[0].mxu0
      %v1027 = vadd.f32 0.0, %v1026
      %1028 = vmatprep.mubr.f32.mxu0 0.0
      %1029 = vmatmul.mubr.f32.gmra.mrb[0].mxu0 %v428
      %v1030 = vpop.f32.mrb[0].mxu0
      %v1031 = vadd.f32 0.0, %v1030
      %v1032 = vpop.f32.mrb[0].mxu0
      %v1033 = vadd.f32 0.0, %v1032
      %1034 = vmatprep.mubr.f32.mxu0 0.0
      %1035 = vmatmul.mubr.f32.gmra.mrb[0].mxu0 %v431
      %v1036 = vpop.f32.mrb[0].mxu0
      %v1037 = vadd.f32 0.0, %v1036
      %v1038 = vpop.f32.mrb[0].mxu0
      %v1039 = vadd.f32 0.0, %v1038
      %1040 = vmatprep.mubr.f32.mxu0 0.0
      %1041 = vmatmul.mubr.f32.gmra.mrb[0].mxu0 %v434
      %v1042 = vpop.f32.mrb[0].mxu0
      %v1043 = vadd.f32 0.0, %v1042
      %v1044 = vpop.f32.mrb[0].mxu0
      %v1045 = vadd.f32 0.0, %v1044
      %1046 = vmatprep.mubr.f32.mxu0 0.0
      %1047 = vmatmul.mubr.f32.gmra.mrb[0].mxu0 %v437
      %v1048 = vpop.f32.mrb[0].mxu0
      %v1049 = vadd.f32 0.0, %v1048
      %v1050 = vpop.f32.mrb[0].mxu0
      %v1051 = vadd.f32 0.0, %v1050
      %1052 = vmatprep.mubr.f32.mxu0 0.0
      %1053 = vmatmul.mubr.f32.gmra.mrb[0].mxu0 %v440
      %v1054 = vpop.f32.mrb[0].mxu0
      %v1055 = vadd.f32 0.0, %v1054
      %v1056 = vpop.f32.mrb[0].mxu0
      %v1057 = vadd.f32 0.0, %v1056
      %1058 = vmatprep.mubr.f32.mxu0 0.0
      %1059 = vmatmul.mubr.f32.gmra.mrb[0].mxu0 %v443
      %v1060 = vpop.f32.mrb[0].mxu0
      %v1061 = vadd.f32 0.0, %v1060
      %v1062 = vpop.f32.mrb[0].mxu0
      %v1063 = vadd.f32 0.0, %v1062
      %1064 = vmatprep.mubr.f32.mxu0 0.0
      %1065 = vmatmul.mubr.f32.gmra.mrb[0].mxu0 %v446
      %v1066 = vpop.f32.mrb[0].mxu0
      %v1067 = vadd.f32 0.0, %v1066
      %v1068 = vpop.f32.mrb[0].mxu0
      %v1069 = vadd.f32 0.0, %v1068
      %1070 = vmatprep.mubr.f32.mxu0 0.0
      %1071 = vmatmul.mubr.f32.gmra.mrb[0].mxu0 %v449
      %v1072 = vpop.f32.mrb[0].mxu0
      %v1073 = vadd.f32 0.0, %v1072
      %v1074 = vpop.f32.mrb[0].mxu0
      %v1075 = vadd.f32 0.0, %v1074
      %1076 = vmatprep.mubr.f32.mxu0 0.0
      %1077 = vmatmul.mubr.f32.gmra.mrb[0].mxu0 %v452
      %v1078 = vpop.f32.mrb[0].mxu0
      %v1079 = vadd.f32 0.0, %v1078
      %v1080 = vpop.f32.mrb[0].mxu0
      %v1081 = vadd.f32 0.0, %v1080
      %1082 = vmatprep.mubr.f32.mxu0 0.0
      %1083 = vmatmul.mubr.f32.gmra.mrb[0].mxu0 %v455
      %v1084 = vpop.f32.mrb[0].mxu0
      %v1085 = vadd.f32 0.0, %v1084
      %v1086 = vpop.f32.mrb[0].mxu0
      %v1087 = vadd.f32 0.0, %v1086
      %1088 = vmatprep.mubr.f32.mxu0 0.0
      %1089 = vmatmul.mubr.f32.gmra.mrb[0].mxu0 %v458
      %v1090 = vpop.f32.mrb[0].mxu0
      %v1091 = vadd.f32 0.0, %v1090
      %v1092 = vpop.f32.mrb[0].mxu0
      %v1093 = vadd.f32 0.0, %v1092
      %1094 = vmatprep.mubr.f32.mxu0 0.0
      %1095 = vmatmul.mubr.f32.gmra.mrb[0].mxu0 %v461
      %v1096 = vpop.f32.mrb[0].mxu0
      %v1097 = vadd.f32 0.0, %v1096
      %v1098 = vpop.f32.mrb[0].mxu0
      %v1099 = vadd.f32 0.0, %v1098
      %1100 = vmatprep.mubr.f32.mxu0 0.0
      %1101 = vmatmul.mubr.f32.gmra.mrb[0].mxu0 %v464
      %v1102 = vpop.f32.mrb[0].mxu0
      %v1103 = vadd.f32 0.0, %v1102
      %v1104 = vpop.f32.mrb[0].mxu0
      %v1105 = vadd.f32 0.0, %v1104
      %1106 = vmatprep.mubr.f32.mxu0 0.0
      %1107 = vmatmul.mubr.f32.gmra.mrb[0].mxu0 %v467
      %v1108 = vpop.f32.mrb[0].mxu0
      %v1109 = vadd.f32 0.0, %v1108
      %v1110 = vpop.f32.mrb[0].mxu0
      %v1111 = vadd.f32 0.0, %v1110
      %1112 = vdwg.mxu0
      %1113 = vmatprep.subr.mxu0 %v237
      %1114 = vmatpush1.msra.mxu0 %v236
      %1115 = vmatprep.subr.mxu0 %v253
      %1116 = vmatpush1.msra.mxu0 %v252
      %1117 = vmatprep.subr.mxu0 %v269
      %1118 = vmatpush1.msra.mxu0 %v268
      %1119 = vmatprep.subr.mxu0 %v285
      %1120 = vmatpush1.msra.mxu0 %v284
      %1121 = vmatprep.subr.mxu0 %v301
      %1122 = vmatpush1.msra.mxu0 %v300
      %1123 = vmatprep.subr.mxu0 %v317
      %1124 = vmatpush1.msra.mxu0 %v316
      %1125 = vmatprep.subr.mxu0 %v333
      %1126 = vmatpush1.msra.mxu0 %v332
      %1127 = vmatprep.subr.mxu0 %v349
      %1128 = vmatpush1.msra.mxu0 %v348
      %1129 = vmatprep.subr.mxu0 %v365
      %1130 = vmatpush1.msra.mxu0 %v364
      %1131 = vmatprep.subr.mxu0 %v381
      %1132 = vmatpush1.msra.mxu0 %v380
      %1133 = vmatprep.subr.mxu0 %v397
      %1134 = vmatpush1.msra.mxu0 %v396
      %1135 = vmatprep.subr.mxu0 %v413
      %1136 = vmatpush1.msra.mxu0 %v412
      %1137 = vmatprep.subr.mxu0 0.0
      %1138 = vmatpush1.msra.mxu0 0.0
      %1139 = vmatprep.subr.mxu0 0.0
      %1140 = vmatpush1.msra.mxu0 0.0
      %1141 = vmatprep.subr.mxu0 0.0
      %1142 = vmatpush1.msra.mxu0 0.0
      %1143 = vmatprep.subr.mxu0 0.0
      %1144 = vmatpush1.msra.mxu0 0.0
      %1145 = vmatprep.subr.mxu0 0.0
      %1146 = vmatpush1.msra.mxu0 0.0
      %1147 = vmatprep.subr.mxu0 0.0
      %1148 = vmatpush1.msra.mxu0 0.0
      %1149 = vmatprep.subr.mxu0 0.0
      %1150 = vmatpush1.msra.mxu0 0.0
      %1151 = vmatprep.subr.mxu0 0.0
      %1152 = vmatpush1.msra.mxu0 0.0
      %1153 = vmatprep.subr.mxu0 0.0
      %1154 = vmatpush1.msra.mxu0 0.0
      %1155 = vmatprep.subr.mxu0 0.0
      %1156 = vmatpush1.msra.mxu0 0.0
      %1157 = vmatprep.subr.mxu0 0.0
      %1158 = vmatpush1.msra.mxu0 0.0
      %1159 = vmatprep.subr.mxu0 0.0
      %1160 = vmatpush1.msra.mxu0 0.0
      %1161 = vmatprep.subr.mxu0 0.0
      %1162 = vmatpush1.msra.mxu0 0.0
      %1163 = vmatprep.subr.mxu0 0.0
      %1164 = vmatpush1.msra.mxu0 0.0
      %1165 = vmatprep.subr.mxu0 0.0
      %1166 = vmatpush1.msra.mxu0 0.0
      %1167 = vmatprep.subr.mxu0 0.0
      %1168 = vmatpush1.msra.mxu0 0.0
      %1169 = vmatprep.subr.mxu0 0.0
      %1170 = vmatpush1.msra.mxu0 0.0
      %1171 = vmatprep.subr.mxu0 0.0
      %1172 = vmatpush1.msra.mxu0 0.0
      %1173 = vmatprep.subr.mxu0 0.0
      %1174 = vmatpush1.msra.mxu0 0.0
      %1175 = vmatprep.subr.mxu0 0.0
      %1176 = vmatpush1.msra.mxu0 0.0
      %1177 = vmatprep.mubr.f32.mxu0 0.0
      %1178 = vmatmul.mubr.f32.gmra.mrb[0].mxu0 %v422
      %v1179 = vpop.f32.mrb[0].mxu0
      %v1180 = vadd.f32 0.0, %v1179
      %v1181 = vpop.f32.mrb[0].mxu0
      %v1182 = vadd.f32 0.0, %v1181
      %1183 = vmatprep.mubr.f32.mxu0 0.0
      %1184 = vmatmul.mubr.f32.gmra.mrb[0].mxu0 %v425
      %v1185 = vpop.f32.mrb[0].mxu0
      %v1186 = vadd.f32 0.0, %v1185
      %v1187 = vpop.f32.mrb[0].mxu0
      %v1188 = vadd.f32 0.0, %v1187
      %1189 = vmatprep.mubr.f32.mxu0 0.0
      %1190 = vmatmul.mubr.f32.gmra.mrb[0].mxu0 %v428
      %v1191 = vpop.f32.mrb[0].mxu0
      %v1192 = vadd.f32 0.0, %v1191
      %v1193 = vpop.f32.mrb[0].mxu0
      %v1194 = vadd.f32 0.0, %v1193
      %1195 = vmatprep.mubr.f32.mxu0 0.0
      %1196 = vmatmul.mubr.f32.gmra.mrb[0].mxu0 %v431
      %v1197 = vpop.f32.mrb[0].mxu0
      %v1198 = vadd.f32 0.0, %v1197
      %v1199 = vpop.f32.mrb[0].mxu0
      %v1200 = vadd.f32 0.0, %v1199
      %1201 = vmatprep.mubr.f32.mxu0 0.0
      %1202 = vmatmul.mubr.f32.gmra.mrb[0].mxu0 %v434
      %v1203 = vpop.f32.mrb[0].mxu0
      %v1204 = vadd.f32 0.0, %v1203
      %v1205 = vpop.f32.mrb[0].mxu0
      %v1206 = vadd.f32 0.0, %v1205
      %1207 = vmatprep.mubr.f32.mxu0 0.0
      %1208 = vmatmul.mubr.f32.gmra.mrb[0].mxu0 %v437
      %v1209 = vpop.f32.mrb[0].mxu0
      %v1210 = vadd.f32 0.0, %v1209
      %v1211 = vpop.f32.mrb[0].mxu0
      %v1212 = vadd.f32 0.0, %v1211
      %1213 = vmatprep.mubr.f32.mxu0 0.0
      %1214 = vmatmul.mubr.f32.gmra.mrb[0].mxu0 %v440
      %v1215 = vpop.f32.mrb[0].mxu0
      %v1216 = vadd.f32 0.0, %v1215
      %v1217 = vpop.f32.mrb[0].mxu0
      %v1218 = vadd.f32 0.0, %v1217
      %1219 = vmatprep.mubr.f32.mxu0 0.0
      %1220 = vmatmul.mubr.f32.gmra.mrb[0].mxu0 %v443
      %v1221 = vpop.f32.mrb[0].mxu0
      %v1222 = vadd.f32 0.0, %v1221
      %v1223 = vpop.f32.mrb[0].mxu0
      %v1224 = vadd.f32 0.0, %v1223
      %1225 = vmatprep.mubr.f32.mxu0 0.0
      %1226 = vmatmul.mubr.f32.gmra.mrb[0].mxu0 %v446
      %v1227 = vpop.f32.mrb[0].mxu0
      %v1228 = vadd.f32 0.0, %v1227
      %v1229 = vpop.f32.mrb[0].mxu0
      %v1230 = vadd.f32 0.0, %v1229
      %1231 = vmatprep.mubr.f32.mxu0 0.0
      %1232 = vmatmul.mubr.f32.gmra.mrb[0].mxu0 %v449
      %v1233 = vpop.f32.mrb[0].mxu0
      %v1234 = vadd.f32 0.0, %v1233
      %v1235 = vpop.f32.mrb[0].mxu0
      %v1236 = vadd.f32 0.0, %v1235
      %1237 = vmatprep.mubr.f32.mxu0 0.0
      %1238 = vmatmul.mubr.f32.gmra.mrb[0].mxu0 %v452
      %v1239 = vpop.f32.mrb[0].mxu0
      %v1240 = vadd.f32 0.0, %v1239
      %v1241 = vpop.f32.mrb[0].mxu0
      %v1242 = vadd.f32 0.0, %v1241
      %1243 = vmatprep.mubr.f32.mxu0 0.0
      %1244 = vmatmul.mubr.f32.gmra.mrb[0].mxu0 %v455
      %v1245 = vpop.f32.mrb[0].mxu0
      %v1246 = vadd.f32 0.0, %v1245
      %v1247 = vpop.f32.mrb[0].mxu0
      %v1248 = vadd.f32 0.0, %v1247
      %1249 = vmatprep.mubr.f32.mxu0 0.0
      %1250 = vmatmul.mubr.f32.gmra.mrb[0].mxu0 %v458
      %v1251 = vpop.f32.mrb[0].mxu0
      %v1252 = vadd.f32 0.0, %v1251
      %v1253 = vpop.f32.mrb[0].mxu0
      %v1254 = vadd.f32 0.0, %v1253
      %1255 = vmatprep.mubr.f32.mxu0 0.0
      %1256 = vmatmul.mubr.f32.gmra.mrb[0].mxu0 %v461
      %v1257 = vpop.f32.mrb[0].mxu0
      %v1258 = vadd.f32 0.0, %v1257
      %v1259 = vpop.f32.mrb[0].mxu0
      %v1260 = vadd.f32 0.0, %v1259
      %1261 = vmatprep.mubr.f32.mxu0 0.0
      %1262 = vmatmul.mubr.f32.gmra.mrb[0].mxu0 %v464
      %v1263 = vpop.f32.mrb[0].mxu0
      %v1264 = vadd.f32 0.0, %v1263
      %v1265 = vpop.f32.mrb[0].mxu0
      %v1266 = vadd.f32 0.0, %v1265
      %1267 = vmatprep.mubr.f32.mxu0 0.0
      %1268 = vmatmul.mubr.f32.gmra.mrb[0].mxu0 %v467
      %v1269 = vpop.f32.mrb[0].mxu0
      %v1270 = vadd.f32 0.0, %v1269
      %v1271 = vpop.f32.mrb[0].mxu0
      %v1272 = vadd.f32 0.0, %v1271
      %1273 = vdwg.mxu0
      %1274 = vmatprep.subr.mxu0 %v239
      %1275 = vmatpush1.msra.mxu0 %v238
      %1276 = vmatprep.subr.mxu0 %v255
      %1277 = vmatpush1.msra.mxu0 %v254
      %1278 = vmatprep.subr.mxu0 %v271
      %1279 = vmatpush1.msra.mxu0 %v270
      %1280 = vmatprep.subr.mxu0 %v287
      %1281 = vmatpush1.msra.mxu0 %v286
      %1282 = vmatprep.subr.mxu0 %v303
      %1283 = vmatpush1.msra.mxu0 %v302
      %1284 = vmatprep.subr.mxu0 %v319
      %1285 = vmatpush1.msra.mxu0 %v318
      %1286 = vmatprep.subr.mxu0 %v335
      %1287 = vmatpush1.msra.mxu0 %v334
      %1288 = vmatprep.subr.mxu0 %v351
      %1289 = vmatpush1.msra.mxu0 %v350
      %1290 = vmatprep.subr.mxu0 %v367
      %1291 = vmatpush1.msra.mxu0 %v366
      %1292 = vmatprep.subr.mxu0 %v383
      %1293 = vmatpush1.msra.mxu0 %v382
      %1294 = vmatprep.subr.mxu0 %v399
      %1295 = vmatpush1.msra.mxu0 %v398
      %1296 = vmatprep.subr.mxu0 %v415
      %1297 = vmatpush1.msra.mxu0 %v414
      %1298 = vmatprep.subr.mxu0 0.0
      %1299 = vmatpush1.msra.mxu0 0.0
      %1300 = vmatprep.subr.mxu0 0.0
      %1301 = vmatpush1.msra.mxu0 0.0
      %1302 = vmatprep.subr.mxu0 0.0
      %1303 = vmatpush1.msra.mxu0 0.0
      %1304 = vmatprep.subr.mxu0 0.0
      %1305 = vmatpush1.msra.mxu0 0.0
      %1306 = vmatprep.subr.mxu0 0.0
      %1307 = vmatpush1.msra.mxu0 0.0
      %1308 = vmatprep.subr.mxu0 0.0
      %1309 = vmatpush1.msra.mxu0 0.0
      %1310 = vmatprep.subr.mxu0 0.0
      %1311 = vmatpush1.msra.mxu0 0.0
      %1312 = vmatprep.subr.mxu0 0.0
      %1313 = vmatpush1.msra.mxu0 0.0
      %1314 = vmatprep.subr.mxu0 0.0
      %1315 = vmatpush1.msra.mxu0 0.0
      %1316 = vmatprep.subr.mxu0 0.0
      %1317 = vmatpush1.msra.mxu0 0.0
      %1318 = vmatprep.subr.mxu0 0.0
      %1319 = vmatpush1.msra.mxu0 0.0
      %1320 = vmatprep.subr.mxu0 0.0
      %1321 = vmatpush1.msra.mxu0 0.0
      %1322 = vmatprep.subr.mxu0 0.0
      %1323 = vmatpush1.msra.mxu0 0.0
      %1324 = vmatprep.subr.mxu0 0.0
      %1325 = vmatpush1.msra.mxu0 0.0
      %1326 = vmatprep.subr.mxu0 0.0
      %1327 = vmatpush1.msra.mxu0 0.0
      %1328 = vmatprep.subr.mxu0 0.0
      %1329 = vmatpush1.msra.mxu0 0.0
      %1330 = vmatprep.subr.mxu0 0.0
      %1331 = vmatpush1.msra.mxu0 0.0
      %1332 = vmatprep.subr.mxu0 0.0
      %1333 = vmatpush1.msra.mxu0 0.0
      %1334 = vmatprep.subr.mxu0 0.0
      %1335 = vmatpush1.msra.mxu0 0.0
      %1336 = vmatprep.subr.mxu0 0.0
      %1337 = vmatpush1.msra.mxu0 0.0
      %1338 = vmatprep.mubr.f32.mxu0 0.0
      %1339 = vmatmul.mubr.f32.gmra.mrb[0].mxu0 %v422
      %v1340 = vpop.f32.mrb[0].mxu0
      %v1341 = vadd.f32 0.0, %v1340
      %v1342 = vpop.f32.mrb[0].mxu0
      %v1343 = vadd.f32 0.0, %v1342
      %1344 = vmatprep.mubr.f32.mxu0 0.0
      %1345 = vmatmul.mubr.f32.gmra.mrb[0].mxu0 %v425
      %v1346 = vpop.f32.mrb[0].mxu0
      %v1347 = vadd.f32 0.0, %v1346
      %v1348 = vpop.f32.mrb[0].mxu0
      %v1349 = vadd.f32 0.0, %v1348
      %1350 = vmatprep.mubr.f32.mxu0 0.0
      %1351 = vmatmul.mubr.f32.gmra.mrb[0].mxu0 %v428
      %v1352 = vpop.f32.mrb[0].mxu0
      %v1353 = vadd.f32 0.0, %v1352
      %v1354 = vpop.f32.mrb[0].mxu0
      %v1355 = vadd.f32 0.0, %v1354
      %1356 = vmatprep.mubr.f32.mxu0 0.0
      %1357 = vmatmul.mubr.f32.gmra.mrb[0].mxu0 %v431
      %v1358 = vpop.f32.mrb[0].mxu0
      %v1359 = vadd.f32 0.0, %v1358
      %v1360 = vpop.f32.mrb[0].mxu0
      %v1361 = vadd.f32 0.0, %v1360
      %1362 = vmatprep.mubr.f32.mxu0 0.0
      %1363 = vmatmul.mubr.f32.gmra.mrb[0].mxu0 %v434
      %v1364 = vpop.f32.mrb[0].mxu0
      %v1365 = vadd.f32 0.0, %v1364
      %v1366 = vpop.f32.mrb[0].mxu0
      %v1367 = vadd.f32 0.0, %v1366
      %1368 = vmatprep.mubr.f32.mxu0 0.0
      %1369 = vmatmul.mubr.f32.gmra.mrb[0].mxu0 %v437
      %v1370 = vpop.f32.mrb[0].mxu0
      %v1371 = vadd.f32 0.0, %v1370
      %v1372 = vpop.f32.mrb[0].mxu0
      %v1373 = vadd.f32 0.0, %v1372
      %1374 = vmatprep.mubr.f32.mxu0 0.0
      %1375 = vmatmul.mubr.f32.gmra.mrb[0].mxu0 %v440
      %v1376 = vpop.f32.mrb[0].mxu0
      %v1377 = vadd.f32 0.0, %v1376
      %v1378 = vpop.f32.mrb[0].mxu0
      %v1379 = vadd.f32 0.0, %v1378
      %1380 = vmatprep.mubr.f32.mxu0 0.0
      %1381 = vmatmul.mubr.f32.gmra.mrb[0].mxu0 %v443
      %v1382 = vpop.f32.mrb[0].mxu0
      %v1383 = vadd.f32 0.0, %v1382
      %v1384 = vpop.f32.mrb[0].mxu0
      %v1385 = vadd.f32 0.0, %v1384
      %1386 = vmatprep.mubr.f32.mxu0 0.0
      %1387 = vmatmul.mubr.f32.gmra.mrb[0].mxu0 %v446
      %v1388 = vpop.f32.mrb[0].mxu0
      %v1389 = vadd.f32 0.0, %v1388
      %v1390 = vpop.f32.mrb[0].mxu0
      %v1391 = vadd.f32 0.0, %v1390
      %1392 = vmatprep.mubr.f32.mxu0 0.0
      %1393 = vmatmul.mubr.f32.gmra.mrb[0].mxu0 %v449
      %v1394 = vpop.f32.mrb[0].mxu0
      %v1395 = vadd.f32 0.0, %v1394
      %v1396 = vpop.f32.mrb[0].mxu0
      %v1397 = vadd.f32 0.0, %v1396
      %1398 = vmatprep.mubr.f32.mxu0 0.0
      %1399 = vmatmul.mubr.f32.gmra.mrb[0].mxu0 %v452
      %v1400 = vpop.f32.mrb[0].mxu0
      %v1401 = vadd.f32 0.0, %v1400
      %v1402 = vpop.f32.mrb[0].mxu0
      %v1403 = vadd.f32 0.0, %v1402
      %1404 = vmatprep.mubr.f32.mxu0 0.0
      %1405 = vmatmul.mubr.f32.gmra.mrb[0].mxu0 %v455
      %v1406 = vpop.f32.mrb[0].mxu0
      %v1407 = vadd.f32 0.0, %v1406
      %v1408 = vpop.f32.mrb[0].mxu0
      %v1409 = vadd.f32 0.0, %v1408
      %1410 = vmatprep.mubr.f32.mxu0 0.0
      %1411 = vmatmul.mubr.f32.gmra.mrb[0].mxu0 %v458
      %v1412 = vpop.f32.mrb[0].mxu0
      %v1413 = vadd.f32 0.0, %v1412
      %v1414 = vpop.f32.mrb[0].mxu0
      %v1415 = vadd.f32 0.0, %v1414
      %1416 = vmatprep.mubr.f32.mxu0 0.0
      %1417 = vmatmul.mubr.f32.gmra.mrb[0].mxu0 %v461
      %v1418 = vpop.f32.mrb[0].mxu0
      %v1419 = vadd.f32 0.0, %v1418
      %v1420 = vpop.f32.mrb[0].mxu0
      %v1421 = vadd.f32 0.0, %v1420
      %1422 = vmatprep.mubr.f32.mxu0 0.0
      %1423 = vmatmul.mubr.f32.gmra.mrb[0].mxu0 %v464
      %v1424 = vpop.f32.mrb[0].mxu0
      %v1425 = vadd.f32 0.0, %v1424
      %v1426 = vpop.f32.mrb[0].mxu0
      %v1427 = vadd.f32 0.0, %v1426
      %1428 = vmatprep.mubr.f32.mxu0 0.0
      %1429 = vmatmul.mubr.f32.gmra.mrb[0].mxu0 %v467
      %v1430 = vpop.f32.mrb[0].mxu0
      %v1431 = vadd.f32 0.0, %v1430
      %v1432 = vpop.f32.mrb[0].mxu0
      %v1433 = vadd.f32 0.0, %v1432
      %1434 = vdwg.mxu0
      %1435 = vmatprep.subr.mxu0 %v241
      %1436 = vmatpush1.msra.mxu0 %v240
      %1437 = vmatprep.subr.mxu0 %v257
      %1438 = vmatpush1.msra.mxu0 %v256
      %1439 = vmatprep.subr.mxu0 %v273
      %1440 = vmatpush1.msra.mxu0 %v272
      %1441 = vmatprep.subr.mxu0 %v289
      %1442 = vmatpush1.msra.mxu0 %v288
      %1443 = vmatprep.subr.mxu0 %v305
      %1444 = vmatpush1.msra.mxu0 %v304
      %1445 = vmatprep.subr.mxu0 %v321
      %1446 = vmatpush1.msra.mxu0 %v320
      %1447 = vmatprep.subr.mxu0 %v337
      %1448 = vmatpush1.msra.mxu0 %v336
      %1449 = vmatprep.subr.mxu0 %v353
      %1450 = vmatpush1.msra.mxu0 %v352
      %1451 = vmatprep.subr.mxu0 %v369
      %1452 = vmatpush1.msra.mxu0 %v368
      %1453 = vmatprep.subr.mxu0 %v385
      %1454 = vmatpush1.msra.mxu0 %v384
      %1455 = vmatprep.subr.mxu0 %v401
      %1456 = vmatpush1.msra.mxu0 %v400
      %1457 = vmatprep.subr.mxu0 %v417
      %1458 = vmatpush1.msra.mxu0 %v416
      %1459 = vmatprep.subr.mxu0 0.0
      %1460 = vmatpush1.msra.mxu0 0.0
      %1461 = vmatprep.subr.mxu0 0.0
      %1462 = vmatpush1.msra.mxu0 0.0
      %1463 = vmatprep.subr.mxu0 0.0
      %1464 = vmatpush1.msra.mxu0 0.0
      %1465 = vmatprep.subr.mxu0 0.0
      %1466 = vmatpush1.msra.mxu0 0.0
      %1467 = vmatprep.subr.mxu0 0.0
      %1468 = vmatpush1.msra.mxu0 0.0
      %1469 = vmatprep.subr.mxu0 0.0
      %1470 = vmatpush1.msra.mxu0 0.0
      %1471 = vmatprep.subr.mxu0 0.0
      %1472 = vmatpush1.msra.mxu0 0.0
      %1473 = vmatprep.subr.mxu0 0.0
      %1474 = vmatpush1.msra.mxu0 0.0
      %1475 = vmatprep.subr.mxu0 0.0
      %1476 = vmatpush1.msra.mxu0 0.0
      %1477 = vmatprep.subr.mxu0 0.0
      %1478 = vmatpush1.msra.mxu0 0.0
      %1479 = vmatprep.subr.mxu0 0.0
      %1480 = vmatpush1.msra.mxu0 0.0
      %1481 = vmatprep.subr.mxu0 0.0
      %1482 = vmatpush1.msra.mxu0 0.0
      %1483 = vmatprep.subr.mxu0 0.0
      %1484 = vmatpush1.msra.mxu0 0.0
      %1485 = vmatprep.subr.mxu0 0.0
      %1486 = vmatpush1.msra.mxu0 0.0
      %1487 = vmatprep.subr.mxu0 0.0
      %1488 = vmatpush1.msra.mxu0 0.0
      %1489 = vmatprep.subr.mxu0 0.0
      %1490 = vmatpush1.msra.mxu0 0.0
      %1491 = vmatprep.subr.mxu0 0.0
      %1492 = vmatpush1.msra.mxu0 0.0
      %1493 = vmatprep.subr.mxu0 0.0
      %1494 = vmatpush1.msra.mxu0 0.0
      %1495 = vmatprep.subr.mxu0 0.0
      %1496 = vmatpush1.msra.mxu0 0.0
      %1497 = vmatprep.subr.mxu0 0.0
      %1498 = vmatpush1.msra.mxu0 0.0
      %1499 = vmatprep.mubr.f32.mxu0 0.0
      %1500 = vmatmul.mubr.f32.gmra.mrb[0].mxu0 %v422
      %v1501 = vpop.f32.mrb[0].mxu0
      %v1502 = vadd.f32 0.0, %v1501
      %v1503 = vpop.f32.mrb[0].mxu0
      %v1504 = vadd.f32 0.0, %v1503
      %1505 = vmatprep.mubr.f32.mxu0 0.0
      %1506 = vmatmul.mubr.f32.gmra.mrb[0].mxu0 %v425
      %v1507 = vpop.f32.mrb[0].mxu0
      %v1508 = vadd.f32 0.0, %v1507
      %v1509 = vpop.f32.mrb[0].mxu0
      %v1510 = vadd.f32 0.0, %v1509
      %1511 = vmatprep.mubr.f32.mxu0 0.0
      %1512 = vmatmul.mubr.f32.gmra.mrb[0].mxu0 %v428
      %v1513 = vpop.f32.mrb[0].mxu0
      %v1514 = vadd.f32 0.0, %v1513
      %v1515 = vpop.f32.mrb[0].mxu0
      %v1516 = vadd.f32 0.0, %v1515
      %1517 = vmatprep.mubr.f32.mxu0 0.0
      %1518 = vmatmul.mubr.f32.gmra.mrb[0].mxu0 %v431
      %v1519 = vpop.f32.mrb[0].mxu0
      %v1520 = vadd.f32 0.0, %v1519
      %v1521 = vpop.f32.mrb[0].mxu0
      %v1522 = vadd.f32 0.0, %v1521
      %1523 = vmatprep.mubr.f32.mxu0 0.0
      %1524 = vmatmul.mubr.f32.gmra.mrb[0].mxu0 %v434
      %v1525 = vpop.f32.mrb[0].mxu0
      %v1526 = vadd.f32 0.0, %v1525
      %v1527 = vpop.f32.mrb[0].mxu0
      %v1528 = vadd.f32 0.0, %v1527
      %1529 = vmatprep.mubr.f32.mxu0 0.0
      %1530 = vmatmul.mubr.f32.gmra.mrb[0].mxu0 %v437
      %v1531 = vpop.f32.mrb[0].mxu0
      %v1532 = vadd.f32 0.0, %v1531
      %v1533 = vpop.f32.mrb[0].mxu0
      %v1534 = vadd.f32 0.0, %v1533
      %1535 = vmatprep.mubr.f32.mxu0 0.0
      %1536 = vmatmul.mubr.f32.gmra.mrb[0].mxu0 %v440
      %v1537 = vpop.f32.mrb[0].mxu0
      %v1538 = vadd.f32 0.0, %v1537
      %v1539 = vpop.f32.mrb[0].mxu0
      %v1540 = vadd.f32 0.0, %v1539
      %1541 = vmatprep.mubr.f32.mxu0 0.0
      %1542 = vmatmul.mubr.f32.gmra.mrb[0].mxu0 %v443
      %v1543 = vpop.f32.mrb[0].mxu0
      %v1544 = vadd.f32 0.0, %v1543
      %v1545 = vpop.f32.mrb[0].mxu0
      %v1546 = vadd.f32 0.0, %v1545
      %1547 = vmatprep.mubr.f32.mxu0 0.0
      %1548 = vmatmul.mubr.f32.gmra.mrb[0].mxu0 %v446
      %v1549 = vpop.f32.mrb[0].mxu0
      %v1550 = vadd.f32 0.0, %v1549
      %v1551 = vpop.f32.mrb[0].mxu0
      %v1552 = vadd.f32 0.0, %v1551
      %1553 = vmatprep.mubr.f32.mxu0 0.0
      %1554 = vmatmul.mubr.f32.gmra.mrb[0].mxu0 %v449
      %v1555 = vpop.f32.mrb[0].mxu0
      %v1556 = vadd.f32 0.0, %v1555
      %v1557 = vpop.f32.mrb[0].mxu0
      %v1558 = vadd.f32 0.0, %v1557
      %1559 = vmatprep.mubr.f32.mxu0 0.0
      %1560 = vmatmul.mubr.f32.gmra.mrb[0].mxu0 %v452
      %v1561 = vpop.f32.mrb[0].mxu0
      %v1562 = vadd.f32 0.0, %v1561
      %v1563 = vpop.f32.mrb[0].mxu0
      %v1564 = vadd.f32 0.0, %v1563
      %1565 = vmatprep.mubr.f32.mxu0 0.0
      %1566 = vmatmul.mubr.f32.gmra.mrb[0].mxu0 %v455
      %v1567 = vpop.f32.mrb[0].mxu0
      %v1568 = vadd.f32 0.0, %v1567
      %v1569 = vpop.f32.mrb[0].mxu0
      %v1570 = vadd.f32 0.0, %v1569
      %1571 = vmatprep.mubr.f32.mxu0 0.0
      %1572 = vmatmul.mubr.f32.gmra.mrb[0].mxu0 %v458
      %v1573 = vpop.f32.mrb[0].mxu0
      %v1574 = vadd.f32 0.0, %v1573
      %v1575 = vpop.f32.mrb[0].mxu0
      %v1576 = vadd.f32 0.0, %v1575
      %1577 = vmatprep.mubr.f32.mxu0 0.0
      %1578 = vmatmul.mubr.f32.gmra.mrb[0].mxu0 %v461
      %v1579 = vpop.f32.mrb[0].mxu0
      %v1580 = vadd.f32 0.0, %v1579
      %v1581 = vpop.f32.mrb[0].mxu0
      %v1582 = vadd.f32 0.0, %v1581
      %1583 = vmatprep.mubr.f32.mxu0 0.0
      %1584 = vmatmul.mubr.f32.gmra.mrb[0].mxu0 %v464
      %v1585 = vpop.f32.mrb[0].mxu0
      %v1586 = vadd.f32 0.0, %v1585
      %v1587 = vpop.f32.mrb[0].mxu0
      %v1588 = vadd.f32 0.0, %v1587
      %1589 = vmatprep.mubr.f32.mxu0 0.0
      %1590 = vmatmul.mubr.f32.gmra.mrb[0].mxu0 %v467
      %v1591 = vpop.f32.mrb[0].mxu0
      %v1592 = vadd.f32 0.0, %v1591
      %v1593 = vpop.f32.mrb[0].mxu0
      %v1594 = vadd.f32 0.0, %v1593
      %1595 = vdwg.mxu0
      %1596 = vmatprep.subr.mxu0 %v243
      %1597 = vmatpush1.msra.mxu0 %v242
      %1598 = vmatprep.subr.mxu0 %v259
      %1599 = vmatpush1.msra.mxu0 %v258
      %1600 = vmatprep.subr.mxu0 %v275
      %1601 = vmatpush1.msra.mxu0 %v274
      %1602 = vmatprep.subr.mxu0 %v291
      %1603 = vmatpush1.msra.mxu0 %v290
      %1604 = vmatprep.subr.mxu0 %v307
      %1605 = vmatpush1.msra.mxu0 %v306
      %1606 = vmatprep.subr.mxu0 %v323
      %1607 = vmatpush1.msra.mxu0 %v322
      %1608 = vmatprep.subr.mxu0 %v339
      %1609 = vmatpush1.msra.mxu0 %v338
      %1610 = vmatprep.subr.mxu0 %v355
      %1611 = vmatpush1.msra.mxu0 %v354
      %1612 = vmatprep.subr.mxu0 %v371
      %1613 = vmatpush1.msra.mxu0 %v370
      %1614 = vmatprep.subr.mxu0 %v387
      %1615 = vmatpush1.msra.mxu0 %v386
      %1616 = vmatprep.subr.mxu0 %v403
      %1617 = vmatpush1.msra.mxu0 %v402
      %1618 = vmatprep.subr.mxu0 %v419
      %1619 = vmatpush1.msra.mxu0 %v418
      %1620 = vmatprep.subr.mxu0 0.0
      %1621 = vmatpush1.msra.mxu0 0.0
      %1622 = vmatprep.subr.mxu0 0.0
      %1623 = vmatpush1.msra.mxu0 0.0
      %1624 = vmatprep.subr.mxu0 0.0
      %1625 = vmatpush1.msra.mxu0 0.0
      %1626 = vmatprep.subr.mxu0 0.0
      %1627 = vmatpush1.msra.mxu0 0.0
      %1628 = vmatprep.subr.mxu0 0.0
      %1629 = vmatpush1.msra.mxu0 0.0
      %1630 = vmatprep.subr.mxu0 0.0
      %1631 = vmatpush1.msra.mxu0 0.0
      %1632 = vmatprep.subr.mxu0 0.0
      %1633 = vmatpush1.msra.mxu0 0.0
      %1634 = vmatprep.subr.mxu0 0.0
      %1635 = vmatpush1.msra.mxu0 0.0
      %1636 = vmatprep.subr.mxu0 0.0
      %1637 = vmatpush1.msra.mxu0 0.0
      %1638 = vmatprep.subr.mxu0 0.0
      %1639 = vmatpush1.msra.mxu0 0.0
      %1640 = vmatprep.subr.mxu0 0.0
      %1641 = vmatpush1.msra.mxu0 0.0
      %1642 = vmatprep.subr.mxu0 0.0
      %1643 = vmatpush1.msra.mxu0 0.0
      %1644 = vmatprep.subr.mxu0 0.0
      %1645 = vmatpush1.msra.mxu0 0.0
      %1646 = vmatprep.subr.mxu0 0.0
      %1647 = vmatpush1.msra.mxu0 0.0
      %1648 = vmatprep.subr.mxu0 0.0
      %1649 = vmatpush1.msra.mxu0 0.0
      %1650 = vmatprep.subr.mxu0 0.0
      %1651 = vmatpush1.msra.mxu0 0.0
      %1652 = vmatprep.subr.mxu0 0.0
      %1653 = vmatpush1.msra.mxu0 0.0
      %1654 = vmatprep.subr.mxu0 0.0
      %1655 = vmatpush1.msra.mxu0 0.0
      %1656 = vmatprep.subr.mxu0 0.0
      %1657 = vmatpush1.msra.mxu0 0.0
      %1658 = vmatprep.subr.mxu0 0.0
      %1659 = vmatpush1.msra.mxu0 0.0
      %1660 = vmatprep.mubr.f32.mxu0 0.0
      %1661 = vmatmul.mubr.f32.gmra.mrb[0].mxu0 %v422
      %v1662 = vpop.f32.mrb[0].mxu0
      %v1663 = vadd.f32 0.0, %v1662
      %v1664 = vpop.f32.mrb[0].mxu0
      %v1665 = vadd.f32 0.0, %v1664
      %1666 = vmatprep.mubr.f32.mxu0 0.0
      %1667 = vmatmul.mubr.f32.gmra.mrb[0].mxu0 %v425
      %v1668 = vpop.f32.mrb[0].mxu0
      %v1669 = vadd.f32 0.0, %v1668
      %v1670 = vpop.f32.mrb[0].mxu0
      %v1671 = vadd.f32 0.0, %v1670
      %1672 = vmatprep.mubr.f32.mxu0 0.0
      %1673 = vmatmul.mubr.f32.gmra.mrb[0].mxu0 %v428
      %v1674 = vpop.f32.mrb[0].mxu0
      %v1675 = vadd.f32 0.0, %v1674
      %v1676 = vpop.f32.mrb[0].mxu0
      %v1677 = vadd.f32 0.0, %v1676
      %1678 = vmatprep.mubr.f32.mxu0 0.0
      %1679 = vmatmul.mubr.f32.gmra.mrb[0].mxu0 %v431
      %v1680 = vpop.f32.mrb[0].mxu0
      %v1681 = vadd.f32 0.0, %v1680
      %v1682 = vpop.f32.mrb[0].mxu0
      %v1683 = vadd.f32 0.0, %v1682
      %1684 = vmatprep.mubr.f32.mxu0 0.0
      %1685 = vmatmul.mubr.f32.gmra.mrb[0].mxu0 %v434
      %v1686 = vpop.f32.mrb[0].mxu0
      %v1687 = vadd.f32 0.0, %v1686
      %v1688 = vpop.f32.mrb[0].mxu0
      %v1689 = vadd.f32 0.0, %v1688
      %1690 = vmatprep.mubr.f32.mxu0 0.0
      %1691 = vmatmul.mubr.f32.gmra.mrb[0].mxu0 %v437
      %v1692 = vpop.f32.mrb[0].mxu0
      %v1693 = vadd.f32 0.0, %v1692
      %v1694 = vpop.f32.mrb[0].mxu0
      %v1695 = vadd.f32 0.0, %v1694
      %1696 = vmatprep.mubr.f32.mxu0 0.0
      %1697 = vmatmul.mubr.f32.gmra.mrb[0].mxu0 %v440
      %v1698 = vpop.f32.mrb[0].mxu0
      %v1699 = vadd.f32 0.0, %v1698
      %v1700 = vpop.f32.mrb[0].mxu0
      %v1701 = vadd.f32 0.0, %v1700
      %1702 = vmatprep.mubr.f32.mxu0 0.0
      %1703 = vmatmul.mubr.f32.gmra.mrb[0].mxu0 %v443
      %v1704 = vpop.f32.mrb[0].mxu0
      %v1705 = vadd.f32 0.0, %v1704
      %v1706 = vpop.f32.mrb[0].mxu0
      %v1707 = vadd.f32 0.0, %v1706
      %1708 = vmatprep.mubr.f32.mxu0 0.0
      %1709 = vmatmul.mubr.f32.gmra.mrb[0].mxu0 %v446
      %v1710 = vpop.f32.mrb[0].mxu0
      %v1711 = vadd.f32 0.0, %v1710
      %v1712 = vpop.f32.mrb[0].mxu0
      %v1713 = vadd.f32 0.0, %v1712
      %1714 = vmatprep.mubr.f32.mxu0 0.0
      %1715 = vmatmul.mubr.f32.gmra.mrb[0].mxu0 %v449
      %v1716 = vpop.f32.mrb[0].mxu0
      %v1717 = vadd.f32 0.0, %v1716
      %v1718 = vpop.f32.mrb[0].mxu0
      %v1719 = vadd.f32 0.0, %v1718
      %1720 = vmatprep.mubr.f32.mxu0 0.0
      %1721 = vmatmul.mubr.f32.gmra.mrb[0].mxu0 %v452
      %v1722 = vpop.f32.mrb[0].mxu0
      %v1723 = vadd.f32 0.0, %v1722
      %v1724 = vpop.f32.mrb[0].mxu0
      %v1725 = vadd.f32 0.0, %v1724
      %1726 = vmatprep.mubr.f32.mxu0 0.0
      %1727 = vmatmul.mubr.f32.gmra.mrb[0].mxu0 %v455
      %v1728 = vpop.f32.mrb[0].mxu0
      %v1729 = vadd.f32 0.0, %v1728
      %v1730 = vpop.f32.mrb[0].mxu0
      %v1731 = vadd.f32 0.0, %v1730
      %1732 = vmatprep.mubr.f32.mxu0 0.0
      %1733 = vmatmul.mubr.f32.gmra.mrb[0].mxu0 %v458
      %v1734 = vpop.f32.mrb[0].mxu0
      %v1735 = vadd.f32 0.0, %v1734
      %v1736 = vpop.f32.mrb[0].mxu0
      %v1737 = vadd.f32 0.0, %v1736
      %1738 = vmatprep.mubr.f32.mxu0 0.0
      %1739 = vmatmul.mubr.f32.gmra.mrb[0].mxu0 %v461
      %v1740 = vpop.f32.mrb[0].mxu0
      %v1741 = vadd.f32 0.0, %v1740
      %v1742 = vpop.f32.mrb[0].mxu0
      %v1743 = vadd.f32 0.0, %v1742
      %1744 = vmatprep.mubr.f32.mxu0 0.0
      %1745 = vmatmul.mubr.f32.gmra.mrb[0].mxu0 %v464
      %v1746 = vpop.f32.mrb[0].mxu0
      %v1747 = vadd.f32 0.0, %v1746
      %v1748 = vpop.f32.mrb[0].mxu0
      %v1749 = vadd.f32 0.0, %v1748
      %1750 = vmatprep.mubr.f32.mxu0 0.0
      %1751 = vmatmul.mubr.f32.gmra.mrb[0].mxu0 %v467
      %v1752 = vpop.f32.mrb[0].mxu0
      %v1753 = vadd.f32 0.0, %v1752
      %v1754 = vpop.f32.mrb[0].mxu0
      %v1755 = vadd.f32 0.0, %v1754
      %1756 = vdwg.mxu0
      %v1757 = vmul.f32 %v536, %v1180
      %v1758 = vmul.f32 %v538, %v1182
      %v1759 = vmul.f32 %v697, %v1341
      %v1760 = vmul.f32 %v699, %v1343
      %v1761 = vmul.f32 %v858, %v1502
      %v1762 = vmul.f32 %v860, %v1504
      %v1763 = vmul.f32 %v1019, %v1663
      %v1764 = vmul.f32 %v1021, %v1665
      %v1765 = vmul.f32 %v542, %v1186
      %v1766 = vmul.f32 %v544, %v1188
      %v1767 = vmul.f32 %v703, %v1347
      %v1768 = vmul.f32 %v705, %v1349
      %v1769 = vmul.f32 %v864, %v1508
      %v1770 = vmul.f32 %v866, %v1510
      %v1771 = vmul.f32 %v1025, %v1669
      %v1772 = vmul.f32 %v1027, %v1671
      %v1773 = vmul.f32 %v548, %v1192
      %v1774 = vmul.f32 %v550, %v1194
      %v1775 = vmul.f32 %v709, %v1353
      %v1776 = vmul.f32 %v711, %v1355
      %v1777 = vmul.f32 %v870, %v1514
      %v1778 = vmul.f32 %v872, %v1516
      %v1779 = vmul.f32 %v1031, %v1675
      %v1780 = vmul.f32 %v1033, %v1677
      %v1781 = vmul.f32 %v554, %v1198
      %v1782 = vmul.f32 %v556, %v1200
      %v1783 = vmul.f32 %v715, %v1359
      %v1784 = vmul.f32 %v717, %v1361
      %v1785 = vmul.f32 %v876, %v1520
      %v1786 = vmul.f32 %v878, %v1522
      %v1787 = vmul.f32 %v1037, %v1681
      %v1788 = vmul.f32 %v1039, %v1683
      %v1789 = vmul.f32 %v560, %v1204
      %v1790 = vmul.f32 %v562, %v1206
      %v1791 = vmul.f32 %v721, %v1365
      %v1792 = vmul.f32 %v723, %v1367
      %v1793 = vmul.f32 %v882, %v1526
      %v1794 = vmul.f32 %v884, %v1528
      %v1795 = vmul.f32 %v1043, %v1687
      %v1796 = vmul.f32 %v1045, %v1689
      %v1797 = vmul.f32 %v566, %v1210
      %v1798 = vmul.f32 %v568, %v1212
      %v1799 = vmul.f32 %v727, %v1371
      %v1800 = vmul.f32 %v729, %v1373
      %v1801 = vmul.f32 %v888, %v1532
      %v1802 = vmul.f32 %v890, %v1534
      %v1803 = vmul.f32 %v1049, %v1693
      %v1804 = vmul.f32 %v1051, %v1695
      %v1805 = vmul.f32 %v572, %v1216
      %v1806 = vmul.f32 %v574, %v1218
      %v1807 = vmul.f32 %v733, %v1377
      %v1808 = vmul.f32 %v735, %v1379
      %v1809 = vmul.f32 %v894, %v1538
      %v1810 = vmul.f32 %v896, %v1540
      %v1811 = vmul.f32 %v1055, %v1699
      %v1812 = vmul.f32 %v1057, %v1701
      %v1813 = vmul.f32 %v578, %v1222
      %v1814 = vmul.f32 %v580, %v1224
      %v1815 = vmul.f32 %v739, %v1383
      %v1816 = vmul.f32 %v741, %v1385
      %v1817 = vmul.f32 %v900, %v1544
      %v1818 = vmul.f32 %v902, %v1546
      %v1819 = vmul.f32 %v1061, %v1705
      %v1820 = vmul.f32 %v1063, %v1707
      %v1821 = vmul.f32 %v584, %v1228
      %v1822 = vmul.f32 %v586, %v1230
      %v1823 = vmul.f32 %v745, %v1389
      %v1824 = vmul.f32 %v747, %v1391
      %v1825 = vmul.f32 %v906, %v1550
      %v1826 = vmul.f32 %v908, %v1552
      %v1827 = vmul.f32 %v1067, %v1711
      %v1828 = vmul.f32 %v1069, %v1713
      %v1829 = vmul.f32 %v590, %v1234
      %v1830 = vmul.f32 %v592, %v1236
      %v1831 = vmul.f32 %v751, %v1395
      %v1832 = vmul.f32 %v753, %v1397
      %v1833 = vmul.f32 %v912, %v1556
      %v1834 = vmul.f32 %v914, %v1558
      %v1835 = vmul.f32 %v1073, %v1717
      %v1836 = vmul.f32 %v1075, %v1719
      %v1837 = vmul.f32 %v596, %v1240
      %v1838 = vmul.f32 %v598, %v1242
      %v1839 = vmul.f32 %v757, %v1401
      %v1840 = vmul.f32 %v759, %v1403
      %v1841 = vmul.f32 %v918, %v1562
      %v1842 = vmul.f32 %v920, %v1564
      %v1843 = vmul.f32 %v1079, %v1723
      %v1844 = vmul.f32 %v1081, %v1725
      %v1845 = vmul.f32 %v602, %v1246
      %v1846 = vmul.f32 %v604, %v1248
      %v1847 = vmul.f32 %v763, %v1407
      %v1848 = vmul.f32 %v765, %v1409
      %v1849 = vmul.f32 %v924, %v1568
      %v1850 = vmul.f32 %v926, %v1570
      %v1851 = vmul.f32 %v1085, %v1729
      %v1852 = vmul.f32 %v1087, %v1731
      %v1853 = vmul.f32 %v608, %v1252
      %v1854 = vmul.f32 %v610, %v1254
      %v1855 = vmul.f32 %v769, %v1413
      %v1856 = vmul.f32 %v771, %v1415
      %v1857 = vmul.f32 %v930, %v1574
      %v1858 = vmul.f32 %v932, %v1576
      %v1859 = vmul.f32 %v1091, %v1735
      %v1860 = vmul.f32 %v1093, %v1737
      %v1861 = vmul.f32 %v614, %v1258
      %v1862 = vmul.f32 %v616, %v1260
      %v1863 = vmul.f32 %v775, %v1419
      %v1864 = vmul.f32 %v777, %v1421
      %v1865 = vmul.f32 %v936, %v1580
      %v1866 = vmul.f32 %v938, %v1582
      %v1867 = vmul.f32 %v1097, %v1741
      %v1868 = vmul.f32 %v1099, %v1743
      %v1869 = vmul.f32 %v620, %v1264
      %v1870 = vmul.f32 %v622, %v1266
      %v1871 = vmul.f32 %v781, %v1425
      %v1872 = vmul.f32 %v783, %v1427
      %v1873 = vmul.f32 %v942, %v1586
      %v1874 = vmul.f32 %v944, %v1588
      %v1875 = vmul.f32 %v1103, %v1747
      %v1876 = vmul.f32 %v1105, %v1749
      %v1877 = vmul.f32 %v626, %v1270
      %v1878 = vmul.f32 %v628, %v1272
      %v1879 = vmul.f32 %v787, %v1431
      %v1880 = vmul.f32 %v789, %v1433
      %v1881 = vmul.f32 %v948, %v1592
      %v1882 = vmul.f32 %v950, %v1594
      %v1883 = vmul.f32 %v1109, %v1753
      %v1884 = vmul.f32 %v1111, %v1755
      %v1885 = vld [vmem:[%s2] sm:$0xff]
      %v1886 = vld [vmem:[%s2 + $0x8] sm:$0xff]
      %v1887 = vld [vmem:[%s2 + $0x10] sm:$0xff]
      %v1888 = vld [vmem:[%s2 + $0x18] sm:$0xff]
      %v1889 = vld [vmem:[%s2 + $0x20] sm:$0xff]
      %v1890 = vld [vmem:[%s2 + $0x28] sm:$0xff]
      %v1891 = vld [vmem:[%s2 + $0x30] sm:$0xff]
      %v1892 = vld [vmem:[%s2 + $0x38] sm:$0xff]
      %v1893 = vld [vmem:[%s2 + $0x40] sm:$0xff]
      %v1894 = vld [vmem:[%s2 + $0x48] sm:$0xff]
      %v1895 = vld [vmem:[%s2 + $0x50] sm:$0xff]
      %v1896 = vld [vmem:[%s2 + $0x58] sm:$0xff]
      %v1897 = vld [vmem:[%s2 + $0x60] sm:$0xff]
      %v1898 = vld [vmem:[%s2 + $0x68] sm:$0xff]
      %v1899 = vld [vmem:[%s2 + $0x70] sm:$0xff]
      %v1900 = vld [vmem:[%s2 + $0x78] sm:$0xff]
      %v1901 = vld [vmem:[%s2 + $0x80] sm:$0xff]
      %v1902 = vld [vmem:[%s2 + $0x88] sm:$0xff]
      %v1903 = vld [vmem:[%s2 + $0x90] sm:$0xff]
      %v1904 = vld [vmem:[%s2 + $0x98] sm:$0xff]
      %v1905 = vld [vmem:[%s2 + $0xa0] sm:$0xff]
      %v1906 = vld [vmem:[%s2 + $0xa8] sm:$0xff]
      %v1907 = vld [vmem:[%s2 + $0xb0] sm:$0xff]
      %v1908 = vld [vmem:[%s2 + $0xb8] sm:$0xff]
      %v1909 = vld [vmem:[%s2 + $0xc0] sm:$0xff]
      %v1910 = vld [vmem:[%s2 + $0xc8] sm:$0xff]
      %v1911 = vld [vmem:[%s2 + $0xd0] sm:$0xff]
      %v1912 = vld [vmem:[%s2 + $0xd8] sm:$0xff]
      %v1913 = vld [vmem:[%s2 + $0xe0] sm:$0xff]
      %v1914 = vld [vmem:[%s2 + $0xe8] sm:$0xff]
      %v1915 = vld [vmem:[%s2 + $0xf0] sm:$0xff]
      %v1916 = vld [vmem:[%s2 + $0xf8] sm:$0xff]
      %v1917 = vld [vmem:[%s2 + $0x100] sm:$0xff]
      %v1918 = vld [vmem:[%s2 + $0x108] sm:$0xff]
      %v1919 = vld [vmem:[%s2 + $0x110] sm:$0xff]
      %v1920 = vld [vmem:[%s2 + $0x118] sm:$0xff]
      %v1921 = vld [vmem:[%s2 + $0x120] sm:$0xff]
      %v1922 = vld [vmem:[%s2 + $0x128] sm:$0xff]
      %v1923 = vld [vmem:[%s2 + $0x130] sm:$0xff]
      %v1924 = vld [vmem:[%s2 + $0x138] sm:$0xff]
      %v1925 = vld [vmem:[%s2 + $0x140] sm:$0xff]
      %v1926 = vld [vmem:[%s2 + $0x148] sm:$0xff]
      %v1927 = vld [vmem:[%s2 + $0x150] sm:$0xff]
      %v1928 = vld [vmem:[%s2 + $0x158] sm:$0xff]
      %v1929 = vld [vmem:[%s2 + $0x160] sm:$0xff]
      %v1930 = vld [vmem:[%s2 + $0x168] sm:$0xff]
      %v1931 = vld [vmem:[%s2 + $0x170] sm:$0xff]
      %v1932 = vld [vmem:[%s2 + $0x178] sm:$0xff]
      %v1933 = vld [vmem:[%s2 + $0x180] sm:$0xff]
      %v1934 = vld [vmem:[%s2 + $0x188] sm:$0xff]
      %v1935 = vld [vmem:[%s2 + $0x190] sm:$0xff]
      %v1936 = vld [vmem:[%s2 + $0x198] sm:$0xff]
      %v1937 = vld [vmem:[%s2 + $0x1a0] sm:$0xff]
      %v1938 = vld [vmem:[%s2 + $0x1a8] sm:$0xff]
      %v1939 = vld [vmem:[%s2 + $0x1b0] sm:$0xff]
      %v1940 = vld [vmem:[%s2 + $0x1b8] sm:$0xff]
      %v1941 = vld [vmem:[%s2 + $0x1c0] sm:$0xff]
      %v1942 = vld [vmem:[%s2 + $0x1c8] sm:$0xff]
      %v1943 = vld [vmem:[%s2 + $0x1d0] sm:$0xff]
      %v1944 = vld [vmem:[%s2 + $0x1d8] sm:$0xff]
      %v1945 = vld [vmem:[%s2 + $0x1e0] sm:$0xff]
      %v1946 = vld [vmem:[%s2 + $0x1e8] sm:$0xff]
      %v1947 = vld [vmem:[%s2 + $0x1f0] sm:$0xff]
      %v1948 = vld [vmem:[%s2 + $0x1f8] sm:$0xff]
      %v1949 = vld [vmem:[%s2 + $0x200] sm:$0xff]
      %v1950 = vld [vmem:[%s2 + $0x208] sm:$0xff]
      %v1951 = vld [vmem:[%s2 + $0x210] sm:$0xff]
      %v1952 = vld [vmem:[%s2 + $0x218] sm:$0xff]
      %v1953 = vld [vmem:[%s2 + $0x220] sm:$0xff]
      %v1954 = vld [vmem:[%s2 + $0x228] sm:$0xff]
      %v1955 = vld [vmem:[%s2 + $0x230] sm:$0xff]
      %v1956 = vld [vmem:[%s2 + $0x238] sm:$0xff]
      %v1957 = vld [vmem:[%s2 + $0x240] sm:$0xff]
      %v1958 = vld [vmem:[%s2 + $0x248] sm:$0xff]
      %v1959 = vld [vmem:[%s2 + $0x250] sm:$0xff]
      %v1960 = vld [vmem:[%s2 + $0x258] sm:$0xff]
      %v1961 = vld [vmem:[%s2 + $0x260] sm:$0xff]
      %v1962 = vld [vmem:[%s2 + $0x268] sm:$0xff]
      %v1963 = vld [vmem:[%s2 + $0x270] sm:$0xff]
      %v1964 = vld [vmem:[%s2 + $0x278] sm:$0xff]
      %v1965 = vld [vmem:[%s2 + $0x280] sm:$0xff]
      %v1966 = vld [vmem:[%s2 + $0x288] sm:$0xff]
      %v1967 = vld [vmem:[%s2 + $0x290] sm:$0xff]
      %v1968 = vld [vmem:[%s2 + $0x298] sm:$0xff]
      %v1969 = vld [vmem:[%s2 + $0x2a0] sm:$0xff]
      %v1970 = vld [vmem:[%s2 + $0x2a8] sm:$0xff]
      %v1971 = vld [vmem:[%s2 + $0x2b0] sm:$0xff]
      %v1972 = vld [vmem:[%s2 + $0x2b8] sm:$0xff]
      %v1973 = vld [vmem:[%s2 + $0x2c0] sm:$0xff]
      %v1974 = vld [vmem:[%s2 + $0x2c8] sm:$0xff]
      %v1975 = vld [vmem:[%s2 + $0x2d0] sm:$0xff]
      %v1976 = vld [vmem:[%s2 + $0x2d8] sm:$0xff]
      %v1977 = vld [vmem:[%s2 + $0x2e0] sm:$0xff]
      %v1978 = vld [vmem:[%s2 + $0x2e8] sm:$0xff]
      %v1979 = vld [vmem:[%s2 + $0x2f0] sm:$0xff]
      %v1980 = vld [vmem:[%s2 + $0x2f8] sm:$0xff]
      %v1981 = vld [vmem:[%s2 + $0x300] sm:$0xff]
      %v1982 = vld [vmem:[%s2 + $0x308] sm:$0xff]
      %v1983 = vld [vmem:[%s2 + $0x310] sm:$0xff]
      %v1984 = vld [vmem:[%s2 + $0x318] sm:$0xff]
      %v1985 = vld [vmem:[%s2 + $0x320] sm:$0xff]
      %v1986 = vld [vmem:[%s2 + $0x328] sm:$0xff]
      %v1987 = vld [vmem:[%s2 + $0x330] sm:$0xff]
      %v1988 = vld [vmem:[%s2 + $0x338] sm:$0xff]
      %v1989 = vld [vmem:[%s2 + $0x340] sm:$0xff]
      %v1990 = vld [vmem:[%s2 + $0x348] sm:$0xff]
      %v1991 = vld [vmem:[%s2 + $0x350] sm:$0xff]
      %v1992 = vld [vmem:[%s2 + $0x358] sm:$0xff]
      %v1993 = vld [vmem:[%s2 + $0x360] sm:$0xff]
      %v1994 = vld [vmem:[%s2 + $0x368] sm:$0xff]
      %v1995 = vld [vmem:[%s2 + $0x370] sm:$0xff]
      %v1996 = vld [vmem:[%s2 + $0x378] sm:$0xff]
      %v1997 = vld [vmem:[%s2 + $0x380] sm:$0xff]
      %v1998 = vld [vmem:[%s2 + $0x388] sm:$0xff]
      %v1999 = vld [vmem:[%s2 + $0x390] sm:$0xff]
      %v2000 = vld [vmem:[%s2 + $0x398] sm:$0xff]
      %v2001 = vld [vmem:[%s2 + $0x3a0] sm:$0xff]
      %v2002 = vld [vmem:[%s2 + $0x3a8] sm:$0xff]
      %v2003 = vld [vmem:[%s2 + $0x3b0] sm:$0xff]
      %v2004 = vld [vmem:[%s2 + $0x3b8] sm:$0xff]
      %v2005 = vld [vmem:[%s2 + $0x3c0] sm:$0xff]
      %v2006 = vld [vmem:[%s2 + $0x3c8] sm:$0xff]
      %v2007 = vld [vmem:[%s2 + $0x3d0] sm:$0xff]
      %v2008 = vld [vmem:[%s2 + $0x3d8] sm:$0xff]
      %v2009 = vld [vmem:[%s2 + $0x3e0] sm:$0xff]
      %v2010 = vld [vmem:[%s2 + $0x3e8] sm:$0xff]
      %v2011 = vld [vmem:[%s2 + $0x3f0] sm:$0xff]
      %v2012 = vld [vmem:[%s2 + $0x3f8] sm:$0xff]
      %v2013 = vlaneseq
      %v2014 = vshrl.u32 %v2013, 7
      %v2015 = vsub.s32 0, %v2014
      %v2016 = vrot.slane %v217, %v2015
      %2017 = vmatprep.subr.mxu0 0.0
      %2018 = vmatpush1.msra.mxu0 %v1885
      %2019 = vmatprep.subr.mxu0 0.0
      %2020 = vmatpush1.msra.mxu0 %v1886
      %2021 = vmatprep.subr.mxu0 0.0
      %2022 = vmatpush1.msra.mxu0 %v1887
      %2023 = vmatprep.subr.mxu0 0.0
      %2024 = vmatpush1.msra.mxu0 %v1888
      %2025 = vmatprep.subr.mxu0 0.0
      %2026 = vmatpush1.msra.mxu0 %v1889
      %2027 = vmatprep.subr.mxu0 0.0
      %2028 = vmatpush1.msra.mxu0 %v1890
      %2029 = vmatprep.subr.mxu0 0.0
      %2030 = vmatpush1.msra.mxu0 %v1891
      %2031 = vmatprep.subr.mxu0 0.0
      %2032 = vmatpush1.msra.mxu0 %v1892
      %2033 = vmatprep.subr.mxu0 0.0
      %2034 = vmatpush1.msra.mxu0 %v1893
      %2035 = vmatprep.subr.mxu0 0.0
      %2036 = vmatpush1.msra.mxu0 %v1894
      %2037 = vmatprep.subr.mxu0 0.0
      %2038 = vmatpush1.msra.mxu0 %v1895
      %2039 = vmatprep.subr.mxu0 0.0
      %2040 = vmatpush1.msra.mxu0 %v1896
      %2041 = vmatprep.subr.mxu0 0.0
      %2042 = vmatpush1.msra.mxu0 %v1897
      %2043 = vmatprep.subr.mxu0 0.0
      %2044 = vmatpush1.msra.mxu0 %v1898
      %2045 = vmatprep.subr.mxu0 0.0
      %2046 = vmatpush1.msra.mxu0 %v1899
      %2047 = vmatprep.subr.mxu0 0.0
      %2048 = vmatpush1.msra.mxu0 %v1900
      %2049 = vmatprep.subr.mxu0 0.0
      %2050 = vmatpush1.msra.mxu0 %v1901
      %2051 = vmatprep.subr.mxu0 0.0
      %2052 = vmatpush1.msra.mxu0 %v1902
      %2053 = vmatprep.subr.mxu0 0.0
      %2054 = vmatpush1.msra.mxu0 %v1903
      %2055 = vmatprep.subr.mxu0 0.0
      %2056 = vmatpush1.msra.mxu0 %v1904
      %2057 = vmatprep.subr.mxu0 0.0
      %2058 = vmatpush1.msra.mxu0 %v1905
      %2059 = vmatprep.subr.mxu0 0.0
      %2060 = vmatpush1.msra.mxu0 %v1906
      %2061 = vmatprep.subr.mxu0 0.0
      %2062 = vmatpush1.msra.mxu0 %v1907
      %2063 = vmatprep.subr.mxu0 0.0
      %2064 = vmatpush1.msra.mxu0 %v1908
      %2065 = vmatprep.subr.mxu0 0.0
      %2066 = vmatpush1.msra.mxu0 %v1909
      %2067 = vmatprep.subr.mxu0 0.0
      %2068 = vmatpush1.msra.mxu0 %v1910
      %2069 = vmatprep.subr.mxu0 0.0
      %2070 = vmatpush1.msra.mxu0 %v1911
      %2071 = vmatprep.subr.mxu0 0.0
      %2072 = vmatpush1.msra.mxu0 %v1912
      %2073 = vmatprep.subr.mxu0 0.0
      %2074 = vmatpush1.msra.mxu0 %v1913
      %2075 = vmatprep.subr.mxu0 0.0
      %2076 = vmatpush1.msra.mxu0 %v1914
      %2077 = vmatprep.subr.mxu0 0.0
      %2078 = vmatpush1.msra.mxu0 %v1915
      %2079 = vmatprep.subr.mxu0 0.0
      %2080 = vmatpush1.msra.mxu0 %v1916
      %2081 = vmatprep.mubr.f32.mxu0 %v1758
      %2082 = vmatmul.mubr.f32.gmra.mrb[0].mxu0 %v1757
      %v2083 = vpop.f32.mrb[0].mxu0
      %v2084 = vadd.f32 %v2016, %v2083
      %v2085 = vpop.f32.mrb[0].mxu0
      %2086 = vmatprep.mubr.f32.mxu0 %v1766
      %2087 = vmatmul.mubr.f32.gmra.mrb[0].mxu0 %v1765
      %v2088 = vpop.f32.mrb[0].mxu0
      %v2089 = vadd.f32 %v2016, %v2088
      %v2090 = vpop.f32.mrb[0].mxu0
      %2091 = vmatprep.mubr.f32.mxu0 %v1774
      %2092 = vmatmul.mubr.f32.gmra.mrb[0].mxu0 %v1773
      %v2093 = vpop.f32.mrb[0].mxu0
      %v2094 = vadd.f32 %v2016, %v2093
      %v2095 = vpop.f32.mrb[0].mxu0
      %2096 = vmatprep.mubr.f32.mxu0 %v1782
      %2097 = vmatmul.mubr.f32.gmra.mrb[0].mxu0 %v1781
      %v2098 = vpop.f32.mrb[0].mxu0
      %v2099 = vadd.f32 %v2016, %v2098
      %v2100 = vpop.f32.mrb[0].mxu0
      %2101 = vmatprep.mubr.f32.mxu0 %v1790
      %2102 = vmatmul.mubr.f32.gmra.mrb[0].mxu0 %v1789
      %v2103 = vpop.f32.mrb[0].mxu0
      %v2104 = vadd.f32 %v2016, %v2103
      %v2105 = vpop.f32.mrb[0].mxu0
      %2106 = vmatprep.mubr.f32.mxu0 %v1798
      %2107 = vmatmul.mubr.f32.gmra.mrb[0].mxu0 %v1797
      %v2108 = vpop.f32.mrb[0].mxu0
      %v2109 = vadd.f32 %v2016, %v2108
      %v2110 = vpop.f32.mrb[0].mxu0
      %2111 = vmatprep.mubr.f32.mxu0 %v1806
      %2112 = vmatmul.mubr.f32.gmra.mrb[0].mxu0 %v1805
      %v2113 = vpop.f32.mrb[0].mxu0
      %v2114 = vadd.f32 %v2016, %v2113
      %v2115 = vpop.f32.mrb[0].mxu0
      %2116 = vmatprep.mubr.f32.mxu0 %v1814
      %2117 = vmatmul.mubr.f32.gmra.mrb[0].mxu0 %v1813
      %v2118 = vpop.f32.mrb[0].mxu0
      %v2119 = vadd.f32 %v2016, %v2118
      %v2120 = vpop.f32.mrb[0].mxu0
      %2121 = vmatprep.mubr.f32.mxu0 %v1822
      %2122 = vmatmul.mubr.f32.gmra.mrb[0].mxu0 %v1821
      %v2123 = vpop.f32.mrb[0].mxu0
      %v2124 = vadd.f32 %v2016, %v2123
      %v2125 = vpop.f32.mrb[0].mxu0
      %2126 = vmatprep.mubr.f32.mxu0 %v1830
      %2127 = vmatmul.mubr.f32.gmra.mrb[0].mxu0 %v1829
      %v2128 = vpop.f32.mrb[0].mxu0
      %v2129 = vadd.f32 %v2016, %v2128
      %v2130 = vpop.f32.mrb[0].mxu0
      %2131 = vmatprep.mubr.f32.mxu0 %v1838
      %2132 = vmatmul.mubr.f32.gmra.mrb[0].mxu0 %v1837
      %v2133 = vpop.f32.mrb[0].mxu0
      %v2134 = vadd.f32 %v2016, %v2133
      %v2135 = vpop.f32.mrb[0].mxu0
      %2136 = vmatprep.mubr.f32.mxu0 %v1846
      %2137 = vmatmul.mubr.f32.gmra.mrb[0].mxu0 %v1845
      %v2138 = vpop.f32.mrb[0].mxu0
      %v2139 = vadd.f32 %v2016, %v2138
      %v2140 = vpop.f32.mrb[0].mxu0
      %2141 = vmatprep.mubr.f32.mxu0 %v1854
      %2142 = vmatmul.mubr.f32.gmra.mrb[0].mxu0 %v1853
      %v2143 = vpop.f32.mrb[0].mxu0
      %v2144 = vadd.f32 %v2016, %v2143
      %v2145 = vpop.f32.mrb[0].mxu0
      %2146 = vmatprep.mubr.f32.mxu0 %v1862
      %2147 = vmatmul.mubr.f32.gmra.mrb[0].mxu0 %v1861
      %v2148 = vpop.f32.mrb[0].mxu0
      %v2149 = vadd.f32 %v2016, %v2148
      %v2150 = vpop.f32.mrb[0].mxu0
      %2151 = vmatprep.mubr.f32.mxu0 %v1870
      %2152 = vmatmul.mubr.f32.gmra.mrb[0].mxu0 %v1869
      %v2153 = vpop.f32.mrb[0].mxu0
      %v2154 = vadd.f32 %v2016, %v2153
      %v2155 = vpop.f32.mrb[0].mxu0
      %2156 = vmatprep.mubr.f32.mxu0 %v1878
      %2157 = vmatmul.mubr.f32.gmra.mrb[0].mxu0 %v1877
      %v2158 = vpop.f32.mrb[0].mxu0
      %v2159 = vadd.f32 %v2016, %v2158
      %v2160 = vpop.f32.mrb[0].mxu0
      %2161 = vdwg.mxu0
      %2162 = vmatprep.subr.mxu0 0.0
      %2163 = vmatpush1.msra.mxu0 %v1917
      %2164 = vmatprep.subr.mxu0 0.0
      %2165 = vmatpush1.msra.mxu0 %v1918
      %2166 = vmatprep.subr.mxu0 0.0
      %2167 = vmatpush1.msra.mxu0 %v1919
      %2168 = vmatprep.subr.mxu0 0.0
      %2169 = vmatpush1.msra.mxu0 %v1920
      %2170 = vmatprep.subr.mxu0 0.0
      %2171 = vmatpush1.msra.mxu0 %v1921
      %2172 = vmatprep.subr.mxu0 0.0
      %2173 = vmatpush1.msra.mxu0 %v1922
      %2174 = vmatprep.subr.mxu0 0.0
      %2175 = vmatpush1.msra.mxu0 %v1923
      %2176 = vmatprep.subr.mxu0 0.0
      %2177 = vmatpush1.msra.mxu0 %v1924
      %2178 = vmatprep.subr.mxu0 0.0
      %2179 = vmatpush1.msra.mxu0 %v1925
      %2180 = vmatprep.subr.mxu0 0.0
      %2181 = vmatpush1.msra.mxu0 %v1926
      %2182 = vmatprep.subr.mxu0 0.0
      %2183 = vmatpush1.msra.mxu0 %v1927
      %2184 = vmatprep.subr.mxu0 0.0
      %2185 = vmatpush1.msra.mxu0 %v1928
      %2186 = vmatprep.subr.mxu0 0.0
      %2187 = vmatpush1.msra.mxu0 %v1929
      %2188 = vmatprep.subr.mxu0 0.0
      %2189 = vmatpush1.msra.mxu0 %v1930
      %2190 = vmatprep.subr.mxu0 0.0
      %2191 = vmatpush1.msra.mxu0 %v1931
      %2192 = vmatprep.subr.mxu0 0.0
      %2193 = vmatpush1.msra.mxu0 %v1932
      %2194 = vmatprep.subr.mxu0 0.0
      %2195 = vmatpush1.msra.mxu0 %v1933
      %2196 = vmatprep.subr.mxu0 0.0
      %2197 = vmatpush1.msra.mxu0 %v1934
      %2198 = vmatprep.subr.mxu0 0.0
      %2199 = vmatpush1.msra.mxu0 %v1935
      %2200 = vmatprep.subr.mxu0 0.0
      %2201 = vmatpush1.msra.mxu0 %v1936
      %2202 = vmatprep.subr.mxu0 0.0
      %2203 = vmatpush1.msra.mxu0 %v1937
      %2204 = vmatprep.subr.mxu0 0.0
      %2205 = vmatpush1.msra.mxu0 %v1938
      %2206 = vmatprep.subr.mxu0 0.0
      %2207 = vmatpush1.msra.mxu0 %v1939
      %2208 = vmatprep.subr.mxu0 0.0
      %2209 = vmatpush1.msra.mxu0 %v1940
      %2210 = vmatprep.subr.mxu0 0.0
      %2211 = vmatpush1.msra.mxu0 %v1941
      %2212 = vmatprep.subr.mxu0 0.0
      %2213 = vmatpush1.msra.mxu0 %v1942
      %2214 = vmatprep.subr.mxu0 0.0
      %2215 = vmatpush1.msra.mxu0 %v1943
      %2216 = vmatprep.subr.mxu0 0.0
      %2217 = vmatpush1.msra.mxu0 %v1944
      %2218 = vmatprep.subr.mxu0 0.0
      %2219 = vmatpush1.msra.mxu0 %v1945
      %2220 = vmatprep.subr.mxu0 0.0
      %2221 = vmatpush1.msra.mxu0 %v1946
      %2222 = vmatprep.subr.mxu0 0.0
      %2223 = vmatpush1.msra.mxu0 %v1947
      %2224 = vmatprep.subr.mxu0 0.0
      %2225 = vmatpush1.msra.mxu0 %v1948
      %2226 = vmatprep.mubr.f32.mxu0 %v1760
      %2227 = vmatmul.mubr.f32.gmra.mrb[0].mxu0 %v1759
      %v2228 = vpop.f32.mrb[0].mxu0
      %v2229 = vadd.f32 %v2084, %v2228
      %v2230 = vpop.f32.mrb[0].mxu0
      %2231 = vmatprep.mubr.f32.mxu0 %v1768
      %2232 = vmatmul.mubr.f32.gmra.mrb[0].mxu0 %v1767
      %v2233 = vpop.f32.mrb[0].mxu0
      %v2234 = vadd.f32 %v2089, %v2233
      %v2235 = vpop.f32.mrb[0].mxu0
      %2236 = vmatprep.mubr.f32.mxu0 %v1776
      %2237 = vmatmul.mubr.f32.gmra.mrb[0].mxu0 %v1775
      %v2238 = vpop.f32.mrb[0].mxu0
      %v2239 = vadd.f32 %v2094, %v2238
      %v2240 = vpop.f32.mrb[0].mxu0
      %2241 = vmatprep.mubr.f32.mxu0 %v1784
      %2242 = vmatmul.mubr.f32.gmra.mrb[0].mxu0 %v1783
      %v2243 = vpop.f32.mrb[0].mxu0
      %v2244 = vadd.f32 %v2099, %v2243
      %v2245 = vpop.f32.mrb[0].mxu0
      %2246 = vmatprep.mubr.f32.mxu0 %v1792
      %2247 = vmatmul.mubr.f32.gmra.mrb[0].mxu0 %v1791
      %v2248 = vpop.f32.mrb[0].mxu0
      %v2249 = vadd.f32 %v2104, %v2248
      %v2250 = vpop.f32.mrb[0].mxu0
      %2251 = vmatprep.mubr.f32.mxu0 %v1800
      %2252 = vmatmul.mubr.f32.gmra.mrb[0].mxu0 %v1799
      %v2253 = vpop.f32.mrb[0].mxu0
      %v2254 = vadd.f32 %v2109, %v2253
      %v2255 = vpop.f32.mrb[0].mxu0
      %2256 = vmatprep.mubr.f32.mxu0 %v1808
      %2257 = vmatmul.mubr.f32.gmra.mrb[0].mxu0 %v1807
      %v2258 = vpop.f32.mrb[0].mxu0
      %v2259 = vadd.f32 %v2114, %v2258
      %v2260 = vpop.f32.mrb[0].mxu0
      %2261 = vmatprep.mubr.f32.mxu0 %v1816
      %2262 = vmatmul.mubr.f32.gmra.mrb[0].mxu0 %v1815
      %v2263 = vpop.f32.mrb[0].mxu0
      %v2264 = vadd.f32 %v2119, %v2263
      %v2265 = vpop.f32.mrb[0].mxu0
      %2266 = vmatprep.mubr.f32.mxu0 %v1824
      %2267 = vmatmul.mubr.f32.gmra.mrb[0].mxu0 %v1823
      %v2268 = vpop.f32.mrb[0].mxu0
      %v2269 = vadd.f32 %v2124, %v2268
      %v2270 = vpop.f32.mrb[0].mxu0
      %2271 = vmatprep.mubr.f32.mxu0 %v1832
      %2272 = vmatmul.mubr.f32.gmra.mrb[0].mxu0 %v1831
      %v2273 = vpop.f32.mrb[0].mxu0
      %v2274 = vadd.f32 %v2129, %v2273
      %v2275 = vpop.f32.mrb[0].mxu0
      %2276 = vmatprep.mubr.f32.mxu0 %v1840
      %2277 = vmatmul.mubr.f32.gmra.mrb[0].mxu0 %v1839
      %v2278 = vpop.f32.mrb[0].mxu0
      %v2279 = vadd.f32 %v2134, %v2278
      %v2280 = vpop.f32.mrb[0].mxu0
      %2281 = vmatprep.mubr.f32.mxu0 %v1848
      %2282 = vmatmul.mubr.f32.gmra.mrb[0].mxu0 %v1847
      %v2283 = vpop.f32.mrb[0].mxu0
      %v2284 = vadd.f32 %v2139, %v2283
      %v2285 = vpop.f32.mrb[0].mxu0
      %2286 = vmatprep.mubr.f32.mxu0 %v1856
      %2287 = vmatmul.mubr.f32.gmra.mrb[0].mxu0 %v1855
      %v2288 = vpop.f32.mrb[0].mxu0
      %v2289 = vadd.f32 %v2144, %v2288
      %v2290 = vpop.f32.mrb[0].mxu0
      %2291 = vmatprep.mubr.f32.mxu0 %v1864
      %2292 = vmatmul.mubr.f32.gmra.mrb[0].mxu0 %v1863
      %v2293 = vpop.f32.mrb[0].mxu0
      %v2294 = vadd.f32 %v2149, %v2293
      %v2295 = vpop.f32.mrb[0].mxu0
      %2296 = vmatprep.mubr.f32.mxu0 %v1872
      %2297 = vmatmul.mubr.f32.gmra.mrb[0].mxu0 %v1871
      %v2298 = vpop.f32.mrb[0].mxu0
      %v2299 = vadd.f32 %v2154, %v2298
      %v2300 = vpop.f32.mrb[0].mxu0
      %2301 = vmatprep.mubr.f32.mxu0 %v1880
      %2302 = vmatmul.mubr.f32.gmra.mrb[0].mxu0 %v1879
      %v2303 = vpop.f32.mrb[0].mxu0
      %v2304 = vadd.f32 %v2159, %v2303
      %v2305 = vpop.f32.mrb[0].mxu0
      %2306 = vdwg.mxu0
      %2307 = vmatprep.subr.mxu0 0.0
      %2308 = vmatpush1.msra.mxu0 %v1949
      %2309 = vmatprep.subr.mxu0 0.0
      %2310 = vmatpush1.msra.mxu0 %v1950
      %2311 = vmatprep.subr.mxu0 0.0
      %2312 = vmatpush1.msra.mxu0 %v1951
      %2313 = vmatprep.subr.mxu0 0.0
      %2314 = vmatpush1.msra.mxu0 %v1952
      %2315 = vmatprep.subr.mxu0 0.0
      %2316 = vmatpush1.msra.mxu0 %v1953
      %2317 = vmatprep.subr.mxu0 0.0
      %2318 = vmatpush1.msra.mxu0 %v1954
      %2319 = vmatprep.subr.mxu0 0.0
      %2320 = vmatpush1.msra.mxu0 %v1955
      %2321 = vmatprep.subr.mxu0 0.0
      %2322 = vmatpush1.msra.mxu0 %v1956
      %2323 = vmatprep.subr.mxu0 0.0
      %2324 = vmatpush1.msra.mxu0 %v1957
      %2325 = vmatprep.subr.mxu0 0.0
      %2326 = vmatpush1.msra.mxu0 %v1958
      %2327 = vmatprep.subr.mxu0 0.0
      %2328 = vmatpush1.msra.mxu0 %v1959
      %2329 = vmatprep.subr.mxu0 0.0
      %2330 = vmatpush1.msra.mxu0 %v1960
      %2331 = vmatprep.subr.mxu0 0.0
      %2332 = vmatpush1.msra.mxu0 %v1961
      %2333 = vmatprep.subr.mxu0 0.0
      %2334 = vmatpush1.msra.mxu0 %v1962
      %2335 = vmatprep.subr.mxu0 0.0
      %2336 = vmatpush1.msra.mxu0 %v1963
      %2337 = vmatprep.subr.mxu0 0.0
      %2338 = vmatpush1.msra.mxu0 %v1964
      %2339 = vmatprep.subr.mxu0 0.0
      %2340 = vmatpush1.msra.mxu0 %v1965
      %2341 = vmatprep.subr.mxu0 0.0
      %2342 = vmatpush1.msra.mxu0 %v1966
      %2343 = vmatprep.subr.mxu0 0.0
      %2344 = vmatpush1.msra.mxu0 %v1967
      %2345 = vmatprep.subr.mxu0 0.0
      %2346 = vmatpush1.msra.mxu0 %v1968
      %2347 = vmatprep.subr.mxu0 0.0
      %2348 = vmatpush1.msra.mxu0 %v1969
      %2349 = vmatprep.subr.mxu0 0.0
      %2350 = vmatpush1.msra.mxu0 %v1970
      %2351 = vmatprep.subr.mxu0 0.0
      %2352 = vmatpush1.msra.mxu0 %v1971
      %2353 = vmatprep.subr.mxu0 0.0
      %2354 = vmatpush1.msra.mxu0 %v1972
      %2355 = vmatprep.subr.mxu0 0.0
      %2356 = vmatpush1.msra.mxu0 %v1973
      %2357 = vmatprep.subr.mxu0 0.0
      %2358 = vmatpush1.msra.mxu0 %v1974
      %2359 = vmatprep.subr.mxu0 0.0
      %2360 = vmatpush1.msra.mxu0 %v1975
      %2361 = vmatprep.subr.mxu0 0.0
      %2362 = vmatpush1.msra.mxu0 %v1976
      %2363 = vmatprep.subr.mxu0 0.0
      %2364 = vmatpush1.msra.mxu0 %v1977
      %2365 = vmatprep.subr.mxu0 0.0
      %2366 = vmatpush1.msra.mxu0 %v1978
      %2367 = vmatprep.subr.mxu0 0.0
      %2368 = vmatpush1.msra.mxu0 %v1979
      %2369 = vmatprep.subr.mxu0 0.0
      %2370 = vmatpush1.msra.mxu0 %v1980
      %2371 = vmatprep.mubr.f32.mxu0 %v1762
      %2372 = vmatmul.mubr.f32.gmra.mrb[0].mxu0 %v1761
      %v2373 = vpop.f32.mrb[0].mxu0
      %v2374 = vadd.f32 %v2229, %v2373
      %v2375 = vpop.f32.mrb[0].mxu0
      %2376 = vmatprep.mubr.f32.mxu0 %v1770
      %2377 = vmatmul.mubr.f32.gmra.mrb[0].mxu0 %v1769
      %v2378 = vpop.f32.mrb[0].mxu0
      %v2379 = vadd.f32 %v2234, %v2378
      %v2380 = vpop.f32.mrb[0].mxu0
      %2381 = vmatprep.mubr.f32.mxu0 %v1778
      %2382 = vmatmul.mubr.f32.gmra.mrb[0].mxu0 %v1777
      %v2383 = vpop.f32.mrb[0].mxu0
      %v2384 = vadd.f32 %v2239, %v2383
      %v2385 = vpop.f32.mrb[0].mxu0
      %2386 = vmatprep.mubr.f32.mxu0 %v1786
      %2387 = vmatmul.mubr.f32.gmra.mrb[0].mxu0 %v1785
      %v2388 = vpop.f32.mrb[0].mxu0
      %v2389 = vadd.f32 %v2244, %v2388
      %v2390 = vpop.f32.mrb[0].mxu0
      %2391 = vmatprep.mubr.f32.mxu0 %v1794
      %2392 = vmatmul.mubr.f32.gmra.mrb[0].mxu0 %v1793
      %v2393 = vpop.f32.mrb[0].mxu0
      %v2394 = vadd.f32 %v2249, %v2393
      %v2395 = vpop.f32.mrb[0].mxu0
      %2396 = vmatprep.mubr.f32.mxu0 %v1802
      %2397 = vmatmul.mubr.f32.gmra.mrb[0].mxu0 %v1801
      %v2398 = vpop.f32.mrb[0].mxu0
      %v2399 = vadd.f32 %v2254, %v2398
      %v2400 = vpop.f32.mrb[0].mxu0
      %2401 = vmatprep.mubr.f32.mxu0 %v1810
      %2402 = vmatmul.mubr.f32.gmra.mrb[0].mxu0 %v1809
      %v2403 = vpop.f32.mrb[0].mxu0
      %v2404 = vadd.f32 %v2259, %v2403
      %v2405 = vpop.f32.mrb[0].mxu0
      %2406 = vmatprep.mubr.f32.mxu0 %v1818
      %2407 = vmatmul.mubr.f32.gmra.mrb[0].mxu0 %v1817
      %v2408 = vpop.f32.mrb[0].mxu0
      %v2409 = vadd.f32 %v2264, %v2408
      %v2410 = vpop.f32.mrb[0].mxu0
      %2411 = vmatprep.mubr.f32.mxu0 %v1826
      %2412 = vmatmul.mubr.f32.gmra.mrb[0].mxu0 %v1825
      %v2413 = vpop.f32.mrb[0].mxu0
      %v2414 = vadd.f32 %v2269, %v2413
      %v2415 = vpop.f32.mrb[0].mxu0
      %2416 = vmatprep.mubr.f32.mxu0 %v1834
      %2417 = vmatmul.mubr.f32.gmra.mrb[0].mxu0 %v1833
      %v2418 = vpop.f32.mrb[0].mxu0
      %v2419 = vadd.f32 %v2274, %v2418
      %v2420 = vpop.f32.mrb[0].mxu0
      %2421 = vmatprep.mubr.f32.mxu0 %v1842
      %2422 = vmatmul.mubr.f32.gmra.mrb[0].mxu0 %v1841
      %v2423 = vpop.f32.mrb[0].mxu0
      %v2424 = vadd.f32 %v2279, %v2423
      %v2425 = vpop.f32.mrb[0].mxu0
      %2426 = vmatprep.mubr.f32.mxu0 %v1850
      %2427 = vmatmul.mubr.f32.gmra.mrb[0].mxu0 %v1849
      %v2428 = vpop.f32.mrb[0].mxu0
      %v2429 = vadd.f32 %v2284, %v2428
      %v2430 = vpop.f32.mrb[0].mxu0
      %2431 = vmatprep.mubr.f32.mxu0 %v1858
      %2432 = vmatmul.mubr.f32.gmra.mrb[0].mxu0 %v1857
      %v2433 = vpop.f32.mrb[0].mxu0
      %v2434 = vadd.f32 %v2289, %v2433
      %v2435 = vpop.f32.mrb[0].mxu0
      %2436 = vmatprep.mubr.f32.mxu0 %v1866
      %2437 = vmatmul.mubr.f32.gmra.mrb[0].mxu0 %v1865
      %v2438 = vpop.f32.mrb[0].mxu0
      %v2439 = vadd.f32 %v2294, %v2438
      %v2440 = vpop.f32.mrb[0].mxu0
      %2441 = vmatprep.mubr.f32.mxu0 %v1874
      %2442 = vmatmul.mubr.f32.gmra.mrb[0].mxu0 %v1873
      %v2443 = vpop.f32.mrb[0].mxu0
      %v2444 = vadd.f32 %v2299, %v2443
      %v2445 = vpop.f32.mrb[0].mxu0
      %2446 = vmatprep.mubr.f32.mxu0 %v1882
      %2447 = vmatmul.mubr.f32.gmra.mrb[0].mxu0 %v1881
      %v2448 = vpop.f32.mrb[0].mxu0
      %v2449 = vadd.f32 %v2304, %v2448
      %v2450 = vpop.f32.mrb[0].mxu0
      %2451 = vdwg.mxu0
      %2452 = vmatprep.subr.mxu0 0.0
      %2453 = vmatpush1.msra.mxu0 %v1981
      %2454 = vmatprep.subr.mxu0 0.0
      %2455 = vmatpush1.msra.mxu0 %v1982
      %2456 = vmatprep.subr.mxu0 0.0
      %2457 = vmatpush1.msra.mxu0 %v1983
      %2458 = vmatprep.subr.mxu0 0.0
      %2459 = vmatpush1.msra.mxu0 %v1984
      %2460 = vmatprep.subr.mxu0 0.0
      %2461 = vmatpush1.msra.mxu0 %v1985
      %2462 = vmatprep.subr.mxu0 0.0
      %2463 = vmatpush1.msra.mxu0 %v1986
      %2464 = vmatprep.subr.mxu0 0.0
      %2465 = vmatpush1.msra.mxu0 %v1987
      %2466 = vmatprep.subr.mxu0 0.0
      %2467 = vmatpush1.msra.mxu0 %v1988
      %2468 = vmatprep.subr.mxu0 0.0
      %2469 = vmatpush1.msra.mxu0 %v1989
      %2470 = vmatprep.subr.mxu0 0.0
      %2471 = vmatpush1.msra.mxu0 %v1990
      %2472 = vmatprep.subr.mxu0 0.0
      %2473 = vmatpush1.msra.mxu0 %v1991
      %2474 = vmatprep.subr.mxu0 0.0
      %2475 = vmatpush1.msra.mxu0 %v1992
      %2476 = vmatprep.subr.mxu0 0.0
      %2477 = vmatpush1.msra.mxu0 %v1993
      %2478 = vmatprep.subr.mxu0 0.0
      %2479 = vmatpush1.msra.mxu0 %v1994
      %2480 = vmatprep.subr.mxu0 0.0
      %2481 = vmatpush1.msra.mxu0 %v1995
      %2482 = vmatprep.subr.mxu0 0.0
      %2483 = vmatpush1.msra.mxu0 %v1996
      %2484 = vmatprep.subr.mxu0 0.0
      %2485 = vmatpush1.msra.mxu0 %v1997
      %2486 = vmatprep.subr.mxu0 0.0
      %2487 = vmatpush1.msra.mxu0 %v1998
      %2488 = vmatprep.subr.mxu0 0.0
      %2489 = vmatpush1.msra.mxu0 %v1999
      %2490 = vmatprep.subr.mxu0 0.0
      %2491 = vmatpush1.msra.mxu0 %v2000
      %2492 = vmatprep.subr.mxu0 0.0
      %2493 = vmatpush1.msra.mxu0 %v2001
      %2494 = vmatprep.subr.mxu0 0.0
      %2495 = vmatpush1.msra.mxu0 %v2002
      %2496 = vmatprep.subr.mxu0 0.0
      %2497 = vmatpush1.msra.mxu0 %v2003
      %2498 = vmatprep.subr.mxu0 0.0
      %2499 = vmatpush1.msra.mxu0 %v2004
      %2500 = vmatprep.subr.mxu0 0.0
      %2501 = vmatpush1.msra.mxu0 %v2005
      %2502 = vmatprep.subr.mxu0 0.0
      %2503 = vmatpush1.msra.mxu0 %v2006
      %2504 = vmatprep.subr.mxu0 0.0
      %2505 = vmatpush1.msra.mxu0 %v2007
      %2506 = vmatprep.subr.mxu0 0.0
      %2507 = vmatpush1.msra.mxu0 %v2008
      %2508 = vmatprep.subr.mxu0 0.0
      %2509 = vmatpush1.msra.mxu0 %v2009
      %2510 = vmatprep.subr.mxu0 0.0
      %2511 = vmatpush1.msra.mxu0 %v2010
      %2512 = vmatprep.subr.mxu0 0.0
      %2513 = vmatpush1.msra.mxu0 %v2011
      %2514 = vmatprep.subr.mxu0 0.0
      %2515 = vmatpush1.msra.mxu0 %v2012
      %2516 = vmatprep.mubr.f32.mxu0 %v1764
      %2517 = vmatmul.mubr.f32.gmra.mrb[0].mxu0 %v1763
      %v2518 = vpop.f32.mrb[0].mxu0
      %v2519 = vadd.f32 %v2374, %v2518
      %v2520 = vpop.f32.mrb[0].mxu0
      %2521 = vmatprep.mubr.f32.mxu0 %v1772
      %2522 = vmatmul.mubr.f32.gmra.mrb[0].mxu0 %v1771
      %v2523 = vpop.f32.mrb[0].mxu0
      %v2524 = vadd.f32 %v2379, %v2523
      %v2525 = vpop.f32.mrb[0].mxu0
      %2526 = vmatprep.mubr.f32.mxu0 %v1780
      %2527 = vmatmul.mubr.f32.gmra.mrb[0].mxu0 %v1779
      %v2528 = vpop.f32.mrb[0].mxu0
      %v2529 = vadd.f32 %v2384, %v2528
      %v2530 = vpop.f32.mrb[0].mxu0
      %2531 = vmatprep.mubr.f32.mxu0 %v1788
      %2532 = vmatmul.mubr.f32.gmra.mrb[0].mxu0 %v1787
      %v2533 = vpop.f32.mrb[0].mxu0
      %v2534 = vadd.f32 %v2389, %v2533
      %v2535 = vpop.f32.mrb[0].mxu0
      %2536 = vmatprep.mubr.f32.mxu0 %v1796
      %2537 = vmatmul.mubr.f32.gmra.mrb[0].mxu0 %v1795
      %v2538 = vpop.f32.mrb[0].mxu0
      %v2539 = vadd.f32 %v2394, %v2538
      %v2540 = vpop.f32.mrb[0].mxu0
      %2541 = vmatprep.mubr.f32.mxu0 %v1804
      %2542 = vmatmul.mubr.f32.gmra.mrb[0].mxu0 %v1803
      %v2543 = vpop.f32.mrb[0].mxu0
      %v2544 = vadd.f32 %v2399, %v2543
      %v2545 = vpop.f32.mrb[0].mxu0
      %2546 = vmatprep.mubr.f32.mxu0 %v1812
      %2547 = vmatmul.mubr.f32.gmra.mrb[0].mxu0 %v1811
      %v2548 = vpop.f32.mrb[0].mxu0
      %v2549 = vadd.f32 %v2404, %v2548
      %v2550 = vpop.f32.mrb[0].mxu0
      %2551 = vmatprep.mubr.f32.mxu0 %v1820
      %2552 = vmatmul.mubr.f32.gmra.mrb[0].mxu0 %v1819
      %v2553 = vpop.f32.mrb[0].mxu0
      %v2554 = vadd.f32 %v2409, %v2553
      %v2555 = vpop.f32.mrb[0].mxu0
      %2556 = vmatprep.mubr.f32.mxu0 %v1828
      %2557 = vmatmul.mubr.f32.gmra.mrb[0].mxu0 %v1827
      %v2558 = vpop.f32.mrb[0].mxu0
      %v2559 = vadd.f32 %v2414, %v2558
      %v2560 = vpop.f32.mrb[0].mxu0
      %2561 = vmatprep.mubr.f32.mxu0 %v1836
      %2562 = vmatmul.mubr.f32.gmra.mrb[0].mxu0 %v1835
      %v2563 = vpop.f32.mrb[0].mxu0
      %v2564 = vadd.f32 %v2419, %v2563
      %v2565 = vpop.f32.mrb[0].mxu0
      %2566 = vmatprep.mubr.f32.mxu0 %v1844
      %2567 = vmatmul.mubr.f32.gmra.mrb[0].mxu0 %v1843
      %v2568 = vpop.f32.mrb[0].mxu0
      %v2569 = vadd.f32 %v2424, %v2568
      %v2570 = vpop.f32.mrb[0].mxu0
      %2571 = vmatprep.mubr.f32.mxu0 %v1852
      %2572 = vmatmul.mubr.f32.gmra.mrb[0].mxu0 %v1851
      %v2573 = vpop.f32.mrb[0].mxu0
      %v2574 = vadd.f32 %v2429, %v2573
      %v2575 = vpop.f32.mrb[0].mxu0
      %2576 = vmatprep.mubr.f32.mxu0 %v1860
      %2577 = vmatmul.mubr.f32.gmra.mrb[0].mxu0 %v1859
      %v2578 = vpop.f32.mrb[0].mxu0
      %v2579 = vadd.f32 %v2434, %v2578
      %v2580 = vpop.f32.mrb[0].mxu0
      %2581 = vmatprep.mubr.f32.mxu0 %v1868
      %2582 = vmatmul.mubr.f32.gmra.mrb[0].mxu0 %v1867
      %v2583 = vpop.f32.mrb[0].mxu0
      %v2584 = vadd.f32 %v2439, %v2583
      %v2585 = vpop.f32.mrb[0].mxu0
      %2586 = vmatprep.mubr.f32.mxu0 %v1876
      %2587 = vmatmul.mubr.f32.gmra.mrb[0].mxu0 %v1875
      %v2588 = vpop.f32.mrb[0].mxu0
      %v2589 = vadd.f32 %v2444, %v2588
      %v2590 = vpop.f32.mrb[0].mxu0
      %2591 = vmatprep.mubr.f32.mxu0 %v1884
      %2592 = vmatmul.mubr.f32.gmra.mrb[0].mxu0 %v1883
      %v2593 = vpop.f32.mrb[0].mxu0
      %v2594 = vadd.f32 %v2449, %v2593
      %v2595 = vpop.f32.mrb[0].mxu0
      %2596 = vdwg.mxu0
      %vm2597 = vcmask 261120
      %v2598 = vsel %vm2597, %v201, 0.0
      %2599 = vadd.xlane.f32.xlu0 %v2598
      %v2600 = vpop.xlane.xlu0 %2599
      %v2601 = vsel %vm2597, %v202, 0.0
      %2602 = vadd.xlane.f32.xlu0 %v2601
      %v2603 = vpop.xlane.xlu0 %2602
      %v2604 = vsel %vm2597, %v203, 0.0
      %2605 = vadd.xlane.f32.xlu0 %v2604
      %v2606 = vpop.xlane.xlu0 %2605
      %v2607 = vsel %vm2597, %v204, 0.0
      %2608 = vadd.xlane.f32.xlu0 %v2607
      %v2609 = vpop.xlane.xlu0 %2608
      %v2610 = vsel %vm2597, %v205, 0.0
      %2611 = vadd.xlane.f32.xlu0 %v2610
      %v2612 = vpop.xlane.xlu0 %2611
      %v2613 = vsel %vm2597, %v206, 0.0
      %2614 = vadd.xlane.f32.xlu0 %v2613
      %v2615 = vpop.xlane.xlu0 %2614
      %v2616 = vsel %vm2597, %v207, 0.0
      %2617 = vadd.xlane.f32.xlu0 %v2616
      %v2618 = vpop.xlane.xlu0 %2617
      %v2619 = vsel %vm2597, %v208, 0.0
      %2620 = vadd.xlane.f32.xlu0 %v2619
      %v2621 = vpop.xlane.xlu0 %2620
      %v2622 = vsel %vm2597, %v209, 0.0
      %2623 = vadd.xlane.f32.xlu0 %v2622
      %v2624 = vpop.xlane.xlu0 %2623
      %v2625 = vsel %vm2597, %v210, 0.0
      %2626 = vadd.xlane.f32.xlu0 %v2625
      %v2627 = vpop.xlane.xlu0 %2626
      %v2628 = vsel %vm2597, %v211, 0.0
      %2629 = vadd.xlane.f32.xlu0 %v2628
      %v2630 = vpop.xlane.xlu0 %2629
      %v2631 = vsel %vm2597, %v212, 0.0
      %2632 = vadd.xlane.f32.xlu0 %v2631
      %v2633 = vpop.xlane.xlu0 %2632
      %v2634 = vsel %vm2597, %v213, 0.0
      %2635 = vadd.xlane.f32.xlu0 %v2634
      %v2636 = vpop.xlane.xlu0 %2635
      %v2637 = vsel %vm2597, %v214, 0.0
      %2638 = vadd.xlane.f32.xlu0 %v2637
      %v2639 = vpop.xlane.xlu0 %2638
      %v2640 = vsel %vm2597, %v215, 0.0
      %2641 = vadd.xlane.f32.xlu0 %v2640
      %v2642 = vpop.xlane.xlu0 %2641
      %v2643 = vsel %vm2597, %v216, 0.0
      %2644 = vadd.xlane.f32.xlu0 %v2643
      %v2645 = vpop.xlane.xlu0 %2644
      %v2646 = vsel %vm2597, %v2519, 0.0
      %2647 = vadd.xlane.f32.xlu0 %v2646
      %v2648 = vpop.xlane.xlu0 %2647
      %v2649 = vsel %vm2597, %v2524, 0.0
      %2650 = vadd.xlane.f32.xlu0 %v2649
      %v2651 = vpop.xlane.xlu0 %2650
      %v2652 = vsel %vm2597, %v2529, 0.0
      %2653 = vadd.xlane.f32.xlu0 %v2652
      %v2654 = vpop.xlane.xlu0 %2653
      %v2655 = vsel %vm2597, %v2534, 0.0
      %2656 = vadd.xlane.f32.xlu0 %v2655
      %v2657 = vpop.xlane.xlu0 %2656
      %v2658 = vsel %vm2597, %v2539, 0.0
      %2659 = vadd.xlane.f32.xlu0 %v2658
      %v2660 = vpop.xlane.xlu0 %2659
      %v2661 = vsel %vm2597, %v2544, 0.0
      %2662 = vadd.xlane.f32.xlu0 %v2661
      %v2663 = vpop.xlane.xlu0 %2662
      %v2664 = vsel %vm2597, %v2549, 0.0
      %2665 = vadd.xlane.f32.xlu0 %v2664
      %v2666 = vpop.xlane.xlu0 %2665
      %v2667 = vsel %vm2597, %v2554, 0.0
      %2668 = vadd.xlane.f32.xlu0 %v2667
      %v2669 = vpop.xlane.xlu0 %2668
      %v2670 = vsel %vm2597, %v2559, 0.0
      %2671 = vadd.xlane.f32.xlu0 %v2670
      %v2672 = vpop.xlane.xlu0 %2671
      %v2673 = vsel %vm2597, %v2564, 0.0
      %2674 = vadd.xlane.f32.xlu0 %v2673
      %v2675 = vpop.xlane.xlu0 %2674
      %v2676 = vsel %vm2597, %v2569, 0.0
      %2677 = vadd.xlane.f32.xlu0 %v2676
      %v2678 = vpop.xlane.xlu0 %2677
      %v2679 = vsel %vm2597, %v2574, 0.0
      %2680 = vadd.xlane.f32.xlu0 %v2679
      %v2681 = vpop.xlane.xlu0 %2680
      %v2682 = vsel %vm2597, %v2579, 0.0
      %2683 = vadd.xlane.f32.xlu0 %v2682
      %v2684 = vpop.xlane.xlu0 %2683
      %v2685 = vsel %vm2597, %v2584, 0.0
      %2686 = vadd.xlane.f32.xlu0 %v2685
      %v2687 = vpop.xlane.xlu0 %2686
      %v2688 = vsel %vm2597, %v2589, 0.0
      %2689 = vadd.xlane.f32.xlu0 %v2688
      %v2690 = vpop.xlane.xlu0 %2689
      %v2691 = vsel %vm2597, %v2594, 0.0
      %2692 = vadd.xlane.f32.xlu0 %v2691
      %v2693 = vpop.xlane.xlu0 %2692
      %v2694 = vadd.f32 %v2600, %v2648
      %v2695 = vadd.f32 %v2603, %v2651
      %v2696 = vadd.f32 %v2606, %v2654
      %v2697 = vadd.f32 %v2609, %v2657
      %v2698 = vadd.f32 %v2612, %v2660
      %v2699 = vadd.f32 %v2615, %v2663
      %v2700 = vadd.f32 %v2618, %v2666
      %v2701 = vadd.f32 %v2621, %v2669
      %v2702 = vadd.f32 %v2624, %v2672
      %v2703 = vadd.f32 %v2627, %v2675
      %v2704 = vadd.f32 %v2630, %v2678
      %v2705 = vadd.f32 %v2633, %v2681
      %v2706 = vadd.f32 %v2636, %v2684
      %v2707 = vadd.f32 %v2639, %v2687
      %v2708 = vadd.f32 %v2642, %v2690
      %v2709 = vadd.f32 %v2645, %v2693
      %v2710 = vmul.f32 %v2694, 0.015625
      %v2711 = vmul.f32 %v2695, 0.015625
      %v2712 = vmul.f32 %v2696, 0.015625
      %v2713 = vmul.f32 %v2697, 0.015625
      %v2714 = vmul.f32 %v2698, 0.015625
      %v2715 = vmul.f32 %v2699, 0.015625
      %v2716 = vmul.f32 %v2700, 0.015625
      %v2717 = vmul.f32 %v2701, 0.015625
      %v2718 = vmul.f32 %v2702, 0.015625
      %v2719 = vmul.f32 %v2703, 0.015625
      %v2720 = vmul.f32 %v2704, 0.015625
      %v2721 = vmul.f32 %v2705, 0.015625
      %v2722 = vmul.f32 %v2706, 0.015625
      %v2723 = vmul.f32 %v2707, 0.015625
      %v2724 = vmul.f32 %v2708, 0.015625
      %v2725 = vmul.f32 %v2709, 0.015625
      %v2726 = vsub.f32 %v201, %v2710
      %v2727 = vsub.f32 %v202, %v2711
      %v2728 = vsub.f32 %v203, %v2712
      %v2729 = vsub.f32 %v204, %v2713
      %v2730 = vsub.f32 %v205, %v2714
      %v2731 = vsub.f32 %v206, %v2715
      %v2732 = vsub.f32 %v207, %v2716
      %v2733 = vsub.f32 %v208, %v2717
      %v2734 = vsub.f32 %v209, %v2718
      %v2735 = vsub.f32 %v210, %v2719
      %v2736 = vsub.f32 %v211, %v2720
      %v2737 = vsub.f32 %v212, %v2721
      %v2738 = vsub.f32 %v213, %v2722
      %v2739 = vsub.f32 %v214, %v2723
      %v2740 = vsub.f32 %v215, %v2724
      %v2741 = vsub.f32 %v216, %v2725
      %v2742 = vsub.f32 %v2519, %v2710
      %v2743 = vsub.f32 %v2524, %v2711
      %v2744 = vsub.f32 %v2529, %v2712
      %v2745 = vsub.f32 %v2534, %v2713
      %v2746 = vsub.f32 %v2539, %v2714
      %v2747 = vsub.f32 %v2544, %v2715
      %v2748 = vsub.f32 %v2549, %v2716
      %v2749 = vsub.f32 %v2554, %v2717
      %v2750 = vsub.f32 %v2559, %v2718
      %v2751 = vsub.f32 %v2564, %v2719
      %v2752 = vsub.f32 %v2569, %v2720
      %v2753 = vsub.f32 %v2574, %v2721
      %v2754 = vsub.f32 %v2579, %v2722
      %v2755 = vsub.f32 %v2584, %v2723
      %v2756 = vsub.f32 %v2589, %v2724
      %v2757 = vsub.f32 %v2594, %v2725
      %v2758 = vmul.f32 %v2726, %v2726
      %v2759 = vmul.f32 %v2727, %v2727
      %v2760 = vmul.f32 %v2728, %v2728
      %v2761 = vmul.f32 %v2729, %v2729
      %v2762 = vmul.f32 %v2730, %v2730
      %v2763 = vmul.f32 %v2731, %v2731
      %v2764 = vmul.f32 %v2732, %v2732
      %v2765 = vmul.f32 %v2733, %v2733
      %v2766 = vmul.f32 %v2734, %v2734
      %v2767 = vmul.f32 %v2735, %v2735
      %v2768 = vmul.f32 %v2736, %v2736
      %v2769 = vmul.f32 %v2737, %v2737
      %v2770 = vmul.f32 %v2738, %v2738
      %v2771 = vmul.f32 %v2739, %v2739
      %v2772 = vmul.f32 %v2740, %v2740
      %v2773 = vmul.f32 %v2741, %v2741
      %v2774 = vsel %vm2597, %v2758, 0.0
      %2775 = vadd.xlane.f32.xlu0 %v2774
      %v2776 = vpop.xlane.xlu0 %2775
      %v2777 = vsel %vm2597, %v2759, 0.0
      %2778 = vadd.xlane.f32.xlu0 %v2777
      %v2779 = vpop.xlane.xlu0 %2778
      %v2780 = vsel %vm2597, %v2760, 0.0
      %2781 = vadd.xlane.f32.xlu0 %v2780
      %v2782 = vpop.xlane.xlu0 %2781
      %v2783 = vsel %vm2597, %v2761, 0.0
      %2784 = vadd.xlane.f32.xlu0 %v2783
      %v2785 = vpop.xlane.xlu0 %2784
      %v2786 = vsel %vm2597, %v2762, 0.0
      %2787 = vadd.xlane.f32.xlu0 %v2786
      %v2788 = vpop.xlane.xlu0 %2787
      %v2789 = vsel %vm2597, %v2763, 0.0
      %2790 = vadd.xlane.f32.xlu0 %v2789
      %v2791 = vpop.xlane.xlu0 %2790
      %v2792 = vsel %vm2597, %v2764, 0.0
      %2793 = vadd.xlane.f32.xlu0 %v2792
      %v2794 = vpop.xlane.xlu0 %2793
      %v2795 = vsel %vm2597, %v2765, 0.0
      %2796 = vadd.xlane.f32.xlu0 %v2795
      %v2797 = vpop.xlane.xlu0 %2796
      %v2798 = vsel %vm2597, %v2766, 0.0
      %2799 = vadd.xlane.f32.xlu0 %v2798
      %v2800 = vpop.xlane.xlu0 %2799
      %v2801 = vsel %vm2597, %v2767, 0.0
      %2802 = vadd.xlane.f32.xlu0 %v2801
      %v2803 = vpop.xlane.xlu0 %2802
      %v2804 = vsel %vm2597, %v2768, 0.0
      %2805 = vadd.xlane.f32.xlu0 %v2804
      %v2806 = vpop.xlane.xlu0 %2805
      %v2807 = vsel %vm2597, %v2769, 0.0
      %2808 = vadd.xlane.f32.xlu0 %v2807
      %v2809 = vpop.xlane.xlu0 %2808
      %v2810 = vsel %vm2597, %v2770, 0.0
      %2811 = vadd.xlane.f32.xlu0 %v2810
      %v2812 = vpop.xlane.xlu0 %2811
      %v2813 = vsel %vm2597, %v2771, 0.0
      %2814 = vadd.xlane.f32.xlu0 %v2813
      %v2815 = vpop.xlane.xlu0 %2814
      %v2816 = vsel %vm2597, %v2772, 0.0
      %2817 = vadd.xlane.f32.xlu0 %v2816
      %v2818 = vpop.xlane.xlu0 %2817
      %v2819 = vsel %vm2597, %v2773, 0.0
      %2820 = vadd.xlane.f32.xlu0 %v2819
      %v2821 = vpop.xlane.xlu0 %2820
      %v2822 = vmul.f32 %v2742, %v2742
      %v2823 = vmul.f32 %v2743, %v2743
      %v2824 = vmul.f32 %v2744, %v2744
      %v2825 = vmul.f32 %v2745, %v2745
      %v2826 = vmul.f32 %v2746, %v2746
      %v2827 = vmul.f32 %v2747, %v2747
      %v2828 = vmul.f32 %v2748, %v2748
      %v2829 = vmul.f32 %v2749, %v2749
      %v2830 = vmul.f32 %v2750, %v2750
      %v2831 = vmul.f32 %v2751, %v2751
      %v2832 = vmul.f32 %v2752, %v2752
      %v2833 = vmul.f32 %v2753, %v2753
      %v2834 = vmul.f32 %v2754, %v2754
      %v2835 = vmul.f32 %v2755, %v2755
      %v2836 = vmul.f32 %v2756, %v2756
      %v2837 = vmul.f32 %v2757, %v2757
      %v2838 = vsel %vm2597, %v2822, 0.0
      %2839 = vadd.xlane.f32.xlu0 %v2838
      %v2840 = vpop.xlane.xlu0 %2839
      %v2841 = vsel %vm2597, %v2823, 0.0
      %2842 = vadd.xlane.f32.xlu0 %v2841
      %v2843 = vpop.xlane.xlu0 %2842
      %v2844 = vsel %vm2597, %v2824, 0.0
      %2845 = vadd.xlane.f32.xlu0 %v2844
      %v2846 = vpop.xlane.xlu0 %2845
      %v2847 = vsel %vm2597, %v2825, 0.0
      %2848 = vadd.xlane.f32.xlu0 %v2847
      %v2849 = vpop.xlane.xlu0 %2848
      %v2850 = vsel %vm2597, %v2826, 0.0
      %2851 = vadd.xlane.f32.xlu0 %v2850
      %v2852 = vpop.xlane.xlu0 %2851
      %v2853 = vsel %vm2597, %v2827, 0.0
      %2854 = vadd.xlane.f32.xlu0 %v2853
      %v2855 = vpop.xlane.xlu0 %2854
      %v2856 = vsel %vm2597, %v2828, 0.0
      %2857 = vadd.xlane.f32.xlu0 %v2856
      %v2858 = vpop.xlane.xlu0 %2857
      %v2859 = vsel %vm2597, %v2829, 0.0
      %2860 = vadd.xlane.f32.xlu0 %v2859
      %v2861 = vpop.xlane.xlu0 %2860
      %v2862 = vsel %vm2597, %v2830, 0.0
      %2863 = vadd.xlane.f32.xlu0 %v2862
      %v2864 = vpop.xlane.xlu0 %2863
      %v2865 = vsel %vm2597, %v2831, 0.0
      %2866 = vadd.xlane.f32.xlu0 %v2865
      %v2867 = vpop.xlane.xlu0 %2866
      %v2868 = vsel %vm2597, %v2832, 0.0
      %2869 = vadd.xlane.f32.xlu0 %v2868
      %v2870 = vpop.xlane.xlu0 %2869
      %v2871 = vsel %vm2597, %v2833, 0.0
      %2872 = vadd.xlane.f32.xlu0 %v2871
      %v2873 = vpop.xlane.xlu0 %2872
      %v2874 = vsel %vm2597, %v2834, 0.0
      %2875 = vadd.xlane.f32.xlu0 %v2874
      %v2876 = vpop.xlane.xlu0 %2875
      %v2877 = vsel %vm2597, %v2835, 0.0
      %2878 = vadd.xlane.f32.xlu0 %v2877
      %v2879 = vpop.xlane.xlu0 %2878
      %v2880 = vsel %vm2597, %v2836, 0.0
      %2881 = vadd.xlane.f32.xlu0 %v2880
      %v2882 = vpop.xlane.xlu0 %2881
      %v2883 = vsel %vm2597, %v2837, 0.0
      %2884 = vadd.xlane.f32.xlu0 %v2883
      %v2885 = vpop.xlane.xlu0 %2884
      %v2886 = vadd.f32 %v2776, %v2840
      %v2887 = vadd.f32 %v2779, %v2843
      %v2888 = vadd.f32 %v2782, %v2846
      %v2889 = vadd.f32 %v2785, %v2849
      %v2890 = vadd.f32 %v2788, %v2852
      %v2891 = vadd.f32 %v2791, %v2855
      %v2892 = vadd.f32 %v2794, %v2858
      %v2893 = vadd.f32 %v2797, %v2861
      %v2894 = vadd.f32 %v2800, %v2864
      %v2895 = vadd.f32 %v2803, %v2867
      %v2896 = vadd.f32 %v2806, %v2870
      %v2897 = vadd.f32 %v2809, %v2873
      %v2898 = vadd.f32 %v2812, %v2876
      %v2899 = vadd.f32 %v2815, %v2879
      %v2900 = vadd.f32 %v2818, %v2882
      %v2901 = vadd.f32 %v2821, %v2885
      %v2902 = vmul.f32 %v2886, 0.015625
      %v2903 = vmul.f32 %v2887, 0.015625
      %v2904 = vmul.f32 %v2888, 0.015625
      %v2905 = vmul.f32 %v2889, 0.015625
      %v2906 = vmul.f32 %v2890, 0.015625
      %v2907 = vmul.f32 %v2891, 0.015625
      %v2908 = vmul.f32 %v2892, 0.015625
      %v2909 = vmul.f32 %v2893, 0.015625
      %v2910 = vmul.f32 %v2894, 0.015625
      %v2911 = vmul.f32 %v2895, 0.015625
      %v2912 = vmul.f32 %v2896, 0.015625
      %v2913 = vmul.f32 %v2897, 0.015625
      %v2914 = vmul.f32 %v2898, 0.015625
      %v2915 = vmul.f32 %v2899, 0.015625
      %v2916 = vmul.f32 %v2900, 0.015625
      %v2917 = vmul.f32 %v2901, 0.015625
      %v2918 = vadd.f32 %v2902, 1e-05
      %v2919 = vadd.f32 %v2903, 1e-05
      %v2920 = vadd.f32 %v2904, 1e-05
      %v2921 = vadd.f32 %v2905, 1e-05
      %v2922 = vadd.f32 %v2906, 1e-05
      %v2923 = vadd.f32 %v2907, 1e-05
      %v2924 = vadd.f32 %v2908, 1e-05
      %v2925 = vadd.f32 %v2909, 1e-05
      %v2926 = vadd.f32 %v2910, 1e-05
      %v2927 = vadd.f32 %v2911, 1e-05
      %v2928 = vadd.f32 %v2912, 1e-05
      %v2929 = vadd.f32 %v2913, 1e-05
      %v2930 = vadd.f32 %v2914, 1e-05
      %v2931 = vadd.f32 %v2915, 1e-05
      %v2932 = vadd.f32 %v2916, 1e-05
      %v2933 = vadd.f32 %v2917, 1e-05
      %v2934 = vrsqrt.pop %v2918
      %v2935 = vrsqrt.pop %v2919
      %v2936 = vrsqrt.pop %v2920
      %v2937 = vrsqrt.pop %v2921
      %v2938 = vrsqrt.pop %v2922
      %v2939 = vrsqrt.pop %v2923
      %v2940 = vrsqrt.pop %v2924
      %v2941 = vrsqrt.pop %v2925
      %v2942 = vrsqrt.pop %v2926
      %v2943 = vrsqrt.pop %v2927
      %v2944 = vrsqrt.pop %v2928
      %v2945 = vrsqrt.pop %v2929
      %v2946 = vrsqrt.pop %v2930
      %v2947 = vrsqrt.pop %v2931
      %v2948 = vrsqrt.pop %v2932
      %v2949 = vrsqrt.pop %v2933
      %v2950 = vmul.f32 %v2726, %v2934
      %v2951 = vmul.f32 %v2727, %v2935
      %v2952 = vmul.f32 %v2728, %v2936
      %v2953 = vmul.f32 %v2729, %v2937
      %v2954 = vmul.f32 %v2730, %v2938
      %v2955 = vmul.f32 %v2731, %v2939
      %v2956 = vmul.f32 %v2732, %v2940
      %v2957 = vmul.f32 %v2733, %v2941
      %v2958 = vmul.f32 %v2734, %v2942
      %v2959 = vmul.f32 %v2735, %v2943
      %v2960 = vmul.f32 %v2736, %v2944
      %v2961 = vmul.f32 %v2737, %v2945
      %v2962 = vmul.f32 %v2738, %v2946
      %v2963 = vmul.f32 %v2739, %v2947
      %v2964 = vmul.f32 %v2740, %v2948
      %v2965 = vmul.f32 %v2741, %v2949
      %v2966 = vlaneseq
      %v2967 = vshrl.u32 %v2966, 7
      %v2968 = vsub.s32 1, %v2967
      %v2969 = vrot.slane %v217, %v2968
      %v2970 = vmul.f32 %v2950, %v2969
      %v2971 = vmul.f32 %v2951, %v2969
      %v2972 = vmul.f32 %v2952, %v2969
      %v2973 = vmul.f32 %v2953, %v2969
      %v2974 = vmul.f32 %v2954, %v2969
      %v2975 = vmul.f32 %v2955, %v2969
      %v2976 = vmul.f32 %v2956, %v2969
      %v2977 = vmul.f32 %v2957, %v2969
      %v2978 = vmul.f32 %v2958, %v2969
      %v2979 = vmul.f32 %v2959, %v2969
      %v2980 = vmul.f32 %v2960, %v2969
      %v2981 = vmul.f32 %v2961, %v2969
      %v2982 = vmul.f32 %v2962, %v2969
      %v2983 = vmul.f32 %v2963, %v2969
      %v2984 = vmul.f32 %v2964, %v2969
      %v2985 = vmul.f32 %v2965, %v2969
      %v2986 = vlaneseq
      %v2987 = vshrl.u32 %v2986, 7
      %v2988 = vsub.s32 3, %v2987
      %v2989 = vrot.slane %v217, %v2988
      %v2990 = vadd.f32 %v2970, %v2989
      %v2991 = vadd.f32 %v2971, %v2989
      %v2992 = vadd.f32 %v2972, %v2989
      %v2993 = vadd.f32 %v2973, %v2989
      %v2994 = vadd.f32 %v2974, %v2989
      %v2995 = vadd.f32 %v2975, %v2989
      %v2996 = vadd.f32 %v2976, %v2989
      %v2997 = vadd.f32 %v2977, %v2989
      %v2998 = vadd.f32 %v2978, %v2989
      %v2999 = vadd.f32 %v2979, %v2989
      %v3000 = vadd.f32 %v2980, %v2989
      %v3001 = vadd.f32 %v2981, %v2989
      %v3002 = vadd.f32 %v2982, %v2989
      %v3003 = vadd.f32 %v2983, %v2989
      %v3004 = vadd.f32 %v2984, %v2989
      %v3005 = vadd.f32 %v2985, %v2989
      %v3006 = vmul.f32 %v2742, %v2934
      %v3007 = vmul.f32 %v2743, %v2935
      %v3008 = vmul.f32 %v2744, %v2936
      %v3009 = vmul.f32 %v2745, %v2937
      %v3010 = vmul.f32 %v2746, %v2938
      %v3011 = vmul.f32 %v2747, %v2939
      %v3012 = vmul.f32 %v2748, %v2940
      %v3013 = vmul.f32 %v2749, %v2941
      %v3014 = vmul.f32 %v2750, %v2942
      %v3015 = vmul.f32 %v2751, %v2943
      %v3016 = vmul.f32 %v2752, %v2944
      %v3017 = vmul.f32 %v2753, %v2945
      %v3018 = vmul.f32 %v2754, %v2946
      %v3019 = vmul.f32 %v2755, %v2947
      %v3020 = vmul.f32 %v2756, %v2948
      %v3021 = vmul.f32 %v2757, %v2949
      %v3022 = vlaneseq
      %v3023 = vshrl.u32 %v3022, 7
      %v3024 = vsub.s32 2, %v3023
      %v3025 = vrot.slane %v217, %v3024
      %v3026 = vmul.f32 %v3006, %v3025
      %v3027 = vmul.f32 %v3007, %v3025
      %v3028 = vmul.f32 %v3008, %v3025
      %v3029 = vmul.f32 %v3009, %v3025
      %v3030 = vmul.f32 %v3010, %v3025
      %v3031 = vmul.f32 %v3011, %v3025
      %v3032 = vmul.f32 %v3012, %v3025
      %v3033 = vmul.f32 %v3013, %v3025
      %v3034 = vmul.f32 %v3014, %v3025
      %v3035 = vmul.f32 %v3015, %v3025
      %v3036 = vmul.f32 %v3016, %v3025
      %v3037 = vmul.f32 %v3017, %v3025
      %v3038 = vmul.f32 %v3018, %v3025
      %v3039 = vmul.f32 %v3019, %v3025
      %v3040 = vmul.f32 %v3020, %v3025
      %v3041 = vmul.f32 %v3021, %v3025
      %v3042 = vlaneseq
      %v3043 = vshrl.u32 %v3042, 7
      %v3044 = vsub.s32 4, %v3043
      %v3045 = vrot.slane %v217, %v3044
      %v3046 = vadd.f32 %v3026, %v3045
      %v3047 = vadd.f32 %v3027, %v3045
      %v3048 = vadd.f32 %v3028, %v3045
      %v3049 = vadd.f32 %v3029, %v3045
      %v3050 = vadd.f32 %v3030, %v3045
      %v3051 = vadd.f32 %v3031, %v3045
      %v3052 = vadd.f32 %v3032, %v3045
      %v3053 = vadd.f32 %v3033, %v3045
      %v3054 = vadd.f32 %v3034, %v3045
      %v3055 = vadd.f32 %v3035, %v3045
      %v3056 = vadd.f32 %v3036, %v3045
      %v3057 = vadd.f32 %v3037, %v3045
      %v3058 = vadd.f32 %v3038, %v3045
      %v3059 = vadd.f32 %v3039, %v3045
      %v3060 = vadd.f32 %v3040, %v3045
      %v3061 = vadd.f32 %v3041, %v3045
      %v3063 = vsel %vm2597, %v3046, 0
      %v3066 = vsel %vm2597, %v3047, 0
      %v3069 = vsel %vm2597, %v3048, 0
      %v3072 = vsel %vm2597, %v3049, 0
      %v3075 = vsel %vm2597, %v3050, 0
      %v3078 = vsel %vm2597, %v3051, 0
      %v3081 = vsel %vm2597, %v3052, 0
      %v3084 = vsel %vm2597, %v3053, 0
      %v3087 = vsel %vm2597, %v3054, 0
      %v3090 = vsel %vm2597, %v3055, 0
      %v3093 = vsel %vm2597, %v3056, 0
      %v3096 = vsel %vm2597, %v3057, 0
      %v3099 = vsel %vm2597, %v3058, 0
      %v3102 = vsel %vm2597, %v3059, 0
      %v3105 = vsel %vm2597, %v3060, 0
      %v3108 = vsel %vm2597, %v3061, 0
      %3110 = vmatprep.subr.mxu0 0.0
      %3111 = vmatpush1.msra.mxu0 %v222
      %3112 = vmatprep.subr.mxu0 0.0
      %3113 = vmatpush1.msra.mxu0 %v223
      %3114 = vmatprep.subr.mxu0 0.0
      %3115 = vmatpush1.msra.mxu0 %v224
      %3116 = vmatprep.subr.mxu0 0.0
      %3117 = vmatpush1.msra.mxu0 %v225
      %3118 = vmatprep.subr.mxu0 0.0
      %3119 = vmatpush1.msra.mxu0 0.0
      %3120 = vmatprep.subr.mxu0 0.0
      %3121 = vmatpush1.msra.mxu0 0.0
      %3122 = vmatprep.subr.mxu0 0.0
      %3123 = vmatpush1.msra.mxu0 0.0
      %3124 = vmatprep.subr.mxu0 0.0
      %3125 = vmatpush1.msra.mxu0 0.0
      %3126 = vmatprep.subr.mxu0 0.0
      %3127 = vmatpush1.msra.mxu0 0.0
      %3128 = vmatprep.subr.mxu0 0.0
      %3129 = vmatpush1.msra.mxu0 0.0
      %3130 = vmatprep.subr.mxu0 0.0
      %3131 = vmatpush1.msra.mxu0 0.0
      %3132 = vmatprep.subr.mxu0 0.0
      %3133 = vmatpush1.msra.mxu0 0.0
      %3134 = vmatprep.subr.mxu0 0.0
      %3135 = vmatpush1.msra.mxu0 0.0
      %3136 = vmatprep.subr.mxu0 0.0
      %3137 = vmatpush1.msra.mxu0 0.0
      %3138 = vmatprep.subr.mxu0 0.0
      %3139 = vmatpush1.msra.mxu0 0.0
      %3140 = vmatprep.subr.mxu0 0.0
      %3141 = vmatpush1.msra.mxu0 0.0
      %3142 = vmatprep.subr.mxu0 0.0
      %3143 = vmatpush1.msra.mxu0 0.0
      %3144 = vmatprep.subr.mxu0 0.0
      %3145 = vmatpush1.msra.mxu0 0.0
      %3146 = vmatprep.subr.mxu0 0.0
      %3147 = vmatpush1.msra.mxu0 0.0
      %3148 = vmatprep.subr.mxu0 0.0
      %3149 = vmatpush1.msra.mxu0 0.0
      %3150 = vmatprep.subr.mxu0 0.0
      %3151 = vmatpush1.msra.mxu0 0.0
      %3152 = vmatprep.subr.mxu0 0.0
      %3153 = vmatpush1.msra.mxu0 0.0
      %3154 = vmatprep.subr.mxu0 0.0
      %3155 = vmatpush1.msra.mxu0 0.0
      %3156 = vmatprep.subr.mxu0 0.0
      %3157 = vmatpush1.msra.mxu0 0.0
      %3158 = vmatprep.subr.mxu0 0.0
      %3159 = vmatpush1.msra.mxu0 0.0
      %3160 = vmatprep.subr.mxu0 0.0
      %3161 = vmatpush1.msra.mxu0 0.0
      %3162 = vmatprep.subr.mxu0 0.0
      %3163 = vmatpush1.msra.mxu0 0.0
      %3164 = vmatprep.subr.mxu0 0.0
      %3165 = vmatpush1.msra.mxu0 0.0
      %3166 = vmatprep.subr.mxu0 0.0
      %3167 = vmatpush1.msra.mxu0 0.0
      %3168 = vmatprep.subr.mxu0 0.0
      %3169 = vmatpush1.msra.mxu0 0.0
      %3170 = vmatprep.subr.mxu0 0.0
      %3171 = vmatpush1.msra.mxu0 0.0
      %3172 = vmatprep.subr.mxu0 0.0
      %3173 = vmatpush1.msra.mxu0 0.0
      %3174 = vmatprep.mubr.f32.mxu0 0.0
      %3175 = vmatmul.mubr.f32.gmra.mrb[0].mxu0 %v3063
      %v3176 = vpop.f32.mrb[0].mxu0
      %v3177 = vadd.f32 0.0, %v3176
      %v3178 = vpop.f32.mrb[0].mxu0
      %3179 = vmatprep.mubr.f32.mxu0 0.0
      %3180 = vmatmul.mubr.f32.gmra.mrb[0].mxu0 %v3066
      %v3181 = vpop.f32.mrb[0].mxu0
      %v3182 = vadd.f32 0.0, %v3181
      %v3183 = vpop.f32.mrb[0].mxu0
      %3184 = vmatprep.mubr.f32.mxu0 0.0
      %3185 = vmatmul.mubr.f32.gmra.mrb[0].mxu0 %v3069
      %v3186 = vpop.f32.mrb[0].mxu0
      %v3187 = vadd.f32 0.0, %v3186
      %v3188 = vpop.f32.mrb[0].mxu0
      %3189 = vmatprep.mubr.f32.mxu0 0.0
      %3190 = vmatmul.mubr.f32.gmra.mrb[0].mxu0 %v3072
      %v3191 = vpop.f32.mrb[0].mxu0
      %v3192 = vadd.f32 0.0, %v3191
      %v3193 = vpop.f32.mrb[0].mxu0
      %3194 = vmatprep.mubr.f32.mxu0 0.0
      %3195 = vmatmul.mubr.f32.gmra.mrb[0].mxu0 %v3075
      %v3196 = vpop.f32.mrb[0].mxu0
      %v3197 = vadd.f32 0.0, %v3196
      %v3198 = vpop.f32.mrb[0].mxu0
      %3199 = vmatprep.mubr.f32.mxu0 0.0
      %3200 = vmatmul.mubr.f32.gmra.mrb[0].mxu0 %v3078
      %v3201 = vpop.f32.mrb[0].mxu0
      %v3202 = vadd.f32 0.0, %v3201
      %v3203 = vpop.f32.mrb[0].mxu0
      %3204 = vmatprep.mubr.f32.mxu0 0.0
      %3205 = vmatmul.mubr.f32.gmra.mrb[0].mxu0 %v3081
      %v3206 = vpop.f32.mrb[0].mxu0
      %v3207 = vadd.f32 0.0, %v3206
      %v3208 = vpop.f32.mrb[0].mxu0
      %3209 = vmatprep.mubr.f32.mxu0 0.0
      %3210 = vmatmul.mubr.f32.gmra.mrb[0].mxu0 %v3084
      %v3211 = vpop.f32.mrb[0].mxu0
      %v3212 = vadd.f32 0.0, %v3211
      %v3213 = vpop.f32.mrb[0].mxu0
      %3214 = vmatprep.mubr.f32.mxu0 0.0
      %3215 = vmatmul.mubr.f32.gmra.mrb[0].mxu0 %v3087
      %v3216 = vpop.f32.mrb[0].mxu0
      %v3217 = vadd.f32 0.0, %v3216
      %v3218 = vpop.f32.mrb[0].mxu0
      %3219 = vmatprep.mubr.f32.mxu0 0.0
      %3220 = vmatmul.mubr.f32.gmra.mrb[0].mxu0 %v3090
      %v3221 = vpop.f32.mrb[0].mxu0
      %v3222 = vadd.f32 0.0, %v3221
      %v3223 = vpop.f32.mrb[0].mxu0
      %3224 = vmatprep.mubr.f32.mxu0 0.0
      %3225 = vmatmul.mubr.f32.gmra.mrb[0].mxu0 %v3093
      %v3226 = vpop.f32.mrb[0].mxu0
      %v3227 = vadd.f32 0.0, %v3226
      %v3228 = vpop.f32.mrb[0].mxu0
      %3229 = vmatprep.mubr.f32.mxu0 0.0
      %3230 = vmatmul.mubr.f32.gmra.mrb[0].mxu0 %v3096
      %v3231 = vpop.f32.mrb[0].mxu0
      %v3232 = vadd.f32 0.0, %v3231
      %v3233 = vpop.f32.mrb[0].mxu0
      %3234 = vmatprep.mubr.f32.mxu0 0.0
      %3235 = vmatmul.mubr.f32.gmra.mrb[0].mxu0 %v3099
      %v3236 = vpop.f32.mrb[0].mxu0
      %v3237 = vadd.f32 0.0, %v3236
      %v3238 = vpop.f32.mrb[0].mxu0
      %3239 = vmatprep.mubr.f32.mxu0 0.0
      %3240 = vmatmul.mubr.f32.gmra.mrb[0].mxu0 %v3102
      %v3241 = vpop.f32.mrb[0].mxu0
      %v3242 = vadd.f32 0.0, %v3241
      %v3243 = vpop.f32.mrb[0].mxu0
      %3244 = vmatprep.mubr.f32.mxu0 0.0
      %3245 = vmatmul.mubr.f32.gmra.mrb[0].mxu0 %v3105
      %v3246 = vpop.f32.mrb[0].mxu0
      %v3247 = vadd.f32 0.0, %v3246
      %v3248 = vpop.f32.mrb[0].mxu0
      %3249 = vmatprep.mubr.f32.mxu0 0.0
      %3250 = vmatmul.mubr.f32.gmra.mrb[0].mxu0 %v3108
      %v3251 = vpop.f32.mrb[0].mxu0
      %v3252 = vadd.f32 0.0, %v3251
      %v3253 = vpop.f32.mrb[0].mxu0
      %3254 = vdwg.mxu0
      %v3256 = vsel %vm2597, %v2990, 0
      %v3259 = vsel %vm2597, %v2991, 0
      %v3262 = vsel %vm2597, %v2992, 0
      %v3265 = vsel %vm2597, %v2993, 0
      %v3268 = vsel %vm2597, %v2994, 0
      %v3271 = vsel %vm2597, %v2995, 0
      %v3274 = vsel %vm2597, %v2996, 0
      %v3277 = vsel %vm2597, %v2997, 0
      %v3280 = vsel %vm2597, %v2998, 0
      %v3283 = vsel %vm2597, %v2999, 0
      %v3286 = vsel %vm2597, %v3000, 0
      %v3289 = vsel %vm2597, %v3001, 0
      %v3292 = vsel %vm2597, %v3002, 0
      %v3295 = vsel %vm2597, %v3003, 0
      %v3298 = vsel %vm2597, %v3004, 0
      %v3301 = vsel %vm2597, %v3005, 0
      %3303 = vmatprep.subr.mxu0 0.0
      %3304 = vmatpush1.msra.mxu0 %v218
      %3305 = vmatprep.subr.mxu0 0.0
      %3306 = vmatpush1.msra.mxu0 %v219
      %3307 = vmatprep.subr.mxu0 0.0
      %3308 = vmatpush1.msra.mxu0 %v220
      %3309 = vmatprep.subr.mxu0 0.0
      %3310 = vmatpush1.msra.mxu0 %v221
      %3311 = vmatprep.subr.mxu0 0.0
      %3312 = vmatpush1.msra.mxu0 0.0
      %3313 = vmatprep.subr.mxu0 0.0
      %3314 = vmatpush1.msra.mxu0 0.0
      %3315 = vmatprep.subr.mxu0 0.0
      %3316 = vmatpush1.msra.mxu0 0.0
      %3317 = vmatprep.subr.mxu0 0.0
      %3318 = vmatpush1.msra.mxu0 0.0
      %3319 = vmatprep.subr.mxu0 0.0
      %3320 = vmatpush1.msra.mxu0 0.0
      %3321 = vmatprep.subr.mxu0 0.0
      %3322 = vmatpush1.msra.mxu0 0.0
      %3323 = vmatprep.subr.mxu0 0.0
      %3324 = vmatpush1.msra.mxu0 0.0
      %3325 = vmatprep.subr.mxu0 0.0
      %3326 = vmatpush1.msra.mxu0 0.0
      %3327 = vmatprep.subr.mxu0 0.0
      %3328 = vmatpush1.msra.mxu0 0.0
      %3329 = vmatprep.subr.mxu0 0.0
      %3330 = vmatpush1.msra.mxu0 0.0
      %3331 = vmatprep.subr.mxu0 0.0
      %3332 = vmatpush1.msra.mxu0 0.0
      %3333 = vmatprep.subr.mxu0 0.0
      %3334 = vmatpush1.msra.mxu0 0.0
      %3335 = vmatprep.subr.mxu0 0.0
      %3336 = vmatpush1.msra.mxu0 0.0
      %3337 = vmatprep.subr.mxu0 0.0
      %3338 = vmatpush1.msra.mxu0 0.0
      %3339 = vmatprep.subr.mxu0 0.0
      %3340 = vmatpush1.msra.mxu0 0.0
      %3341 = vmatprep.subr.mxu0 0.0
      %3342 = vmatpush1.msra.mxu0 0.0
      %3343 = vmatprep.subr.mxu0 0.0
      %3344 = vmatpush1.msra.mxu0 0.0
      %3345 = vmatprep.subr.mxu0 0.0
      %3346 = vmatpush1.msra.mxu0 0.0
      %3347 = vmatprep.subr.mxu0 0.0
      %3348 = vmatpush1.msra.mxu0 0.0
      %3349 = vmatprep.subr.mxu0 0.0
      %3350 = vmatpush1.msra.mxu0 0.0
      %3351 = vmatprep.subr.mxu0 0.0
      %3352 = vmatpush1.msra.mxu0 0.0
      %3353 = vmatprep.subr.mxu0 0.0
      %3354 = vmatpush1.msra.mxu0 0.0
      %3355 = vmatprep.subr.mxu0 0.0
      %3356 = vmatpush1.msra.mxu0 0.0
      %3357 = vmatprep.subr.mxu0 0.0
      %3358 = vmatpush1.msra.mxu0 0.0
      %3359 = vmatprep.subr.mxu0 0.0
      %3360 = vmatpush1.msra.mxu0 0.0
      %3361 = vmatprep.subr.mxu0 0.0
      %3362 = vmatpush1.msra.mxu0 0.0
      %3363 = vmatprep.subr.mxu0 0.0
      %3364 = vmatpush1.msra.mxu0 0.0
      %3365 = vmatprep.subr.mxu0 0.0
      %3366 = vmatpush1.msra.mxu0 0.0
      %3367 = vmatprep.mubr.f32.mxu0 0.0
      %3368 = vmatmul.mubr.f32.gmra.mrb[0].mxu0 %v3256
      %v3369 = vpop.f32.mrb[0].mxu0
      %v3370 = vadd.f32 %v3177, %v3369
      %v3371 = vpop.f32.mrb[0].mxu0
      %3372 = vmatprep.mubr.f32.mxu0 0.0
      %3373 = vmatmul.mubr.f32.gmra.mrb[0].mxu0 %v3259
      %v3374 = vpop.f32.mrb[0].mxu0
      %v3375 = vadd.f32 %v3182, %v3374
      %v3376 = vpop.f32.mrb[0].mxu0
      %3377 = vmatprep.mubr.f32.mxu0 0.0
      %3378 = vmatmul.mubr.f32.gmra.mrb[0].mxu0 %v3262
      %v3379 = vpop.f32.mrb[0].mxu0
      %v3380 = vadd.f32 %v3187, %v3379
      %v3381 = vpop.f32.mrb[0].mxu0
      %3382 = vmatprep.mubr.f32.mxu0 0.0
      %3383 = vmatmul.mubr.f32.gmra.mrb[0].mxu0 %v3265
      %v3384 = vpop.f32.mrb[0].mxu0
      %v3385 = vadd.f32 %v3192, %v3384
      %v3386 = vpop.f32.mrb[0].mxu0
      %3387 = vmatprep.mubr.f32.mxu0 0.0
      %3388 = vmatmul.mubr.f32.gmra.mrb[0].mxu0 %v3268
      %v3389 = vpop.f32.mrb[0].mxu0
      %v3390 = vadd.f32 %v3197, %v3389
      %v3391 = vpop.f32.mrb[0].mxu0
      %3392 = vmatprep.mubr.f32.mxu0 0.0
      %3393 = vmatmul.mubr.f32.gmra.mrb[0].mxu0 %v3271
      %v3394 = vpop.f32.mrb[0].mxu0
      %v3395 = vadd.f32 %v3202, %v3394
      %v3396 = vpop.f32.mrb[0].mxu0
      %3397 = vmatprep.mubr.f32.mxu0 0.0
      %3398 = vmatmul.mubr.f32.gmra.mrb[0].mxu0 %v3274
      %v3399 = vpop.f32.mrb[0].mxu0
      %v3400 = vadd.f32 %v3207, %v3399
      %v3401 = vpop.f32.mrb[0].mxu0
      %3402 = vmatprep.mubr.f32.mxu0 0.0
      %3403 = vmatmul.mubr.f32.gmra.mrb[0].mxu0 %v3277
      %v3404 = vpop.f32.mrb[0].mxu0
      %v3405 = vadd.f32 %v3212, %v3404
      %v3406 = vpop.f32.mrb[0].mxu0
      %3407 = vmatprep.mubr.f32.mxu0 0.0
      %3408 = vmatmul.mubr.f32.gmra.mrb[0].mxu0 %v3280
      %v3409 = vpop.f32.mrb[0].mxu0
      %v3410 = vadd.f32 %v3217, %v3409
      %v3411 = vpop.f32.mrb[0].mxu0
      %3412 = vmatprep.mubr.f32.mxu0 0.0
      %3413 = vmatmul.mubr.f32.gmra.mrb[0].mxu0 %v3283
      %v3414 = vpop.f32.mrb[0].mxu0
      %v3415 = vadd.f32 %v3222, %v3414
      %v3416 = vpop.f32.mrb[0].mxu0
      %3417 = vmatprep.mubr.f32.mxu0 0.0
      %3418 = vmatmul.mubr.f32.gmra.mrb[0].mxu0 %v3286
      %v3419 = vpop.f32.mrb[0].mxu0
      %v3420 = vadd.f32 %v3227, %v3419
      %v3421 = vpop.f32.mrb[0].mxu0
      %3422 = vmatprep.mubr.f32.mxu0 0.0
      %3423 = vmatmul.mubr.f32.gmra.mrb[0].mxu0 %v3289
      %v3424 = vpop.f32.mrb[0].mxu0
      %v3425 = vadd.f32 %v3232, %v3424
      %v3426 = vpop.f32.mrb[0].mxu0
      %3427 = vmatprep.mubr.f32.mxu0 0.0
      %3428 = vmatmul.mubr.f32.gmra.mrb[0].mxu0 %v3292
      %v3429 = vpop.f32.mrb[0].mxu0
      %v3430 = vadd.f32 %v3237, %v3429
      %v3431 = vpop.f32.mrb[0].mxu0
      %3432 = vmatprep.mubr.f32.mxu0 0.0
      %3433 = vmatmul.mubr.f32.gmra.mrb[0].mxu0 %v3295
      %v3434 = vpop.f32.mrb[0].mxu0
      %v3435 = vadd.f32 %v3242, %v3434
      %v3436 = vpop.f32.mrb[0].mxu0
      %3437 = vmatprep.mubr.f32.mxu0 0.0
      %3438 = vmatmul.mubr.f32.gmra.mrb[0].mxu0 %v3298
      %v3439 = vpop.f32.mrb[0].mxu0
      %v3440 = vadd.f32 %v3247, %v3439
      %v3441 = vpop.f32.mrb[0].mxu0
      %3442 = vmatprep.mubr.f32.mxu0 0.0
      %3443 = vmatmul.mubr.f32.gmra.mrb[0].mxu0 %v3301
      %v3444 = vpop.f32.mrb[0].mxu0
      %v3445 = vadd.f32 %v3252, %v3444
      %v3446 = vpop.f32.mrb[0].mxu0
      %3447 = vdwg.mxu0
      %v3448 = vlaneseq
      %v3449 = vshrl.u32 %v3448, 7
      %v3450 = vsub.s32 5, %v3449
      %v3451 = vrot.slane %v217, %v3450
      %v3452 = vadd.f32 %v3370, %v3451
      %v3453 = vadd.f32 %v3375, %v3451
      %v3454 = vadd.f32 %v3380, %v3451
      %v3455 = vadd.f32 %v3385, %v3451
      %v3456 = vadd.f32 %v3390, %v3451
      %v3457 = vadd.f32 %v3395, %v3451
      %v3458 = vadd.f32 %v3400, %v3451
      %v3459 = vadd.f32 %v3405, %v3451
      %v3460 = vadd.f32 %v3410, %v3451
      %v3461 = vadd.f32 %v3415, %v3451
      %v3462 = vadd.f32 %v3420, %v3451
      %v3463 = vadd.f32 %v3425, %v3451
      %v3464 = vadd.f32 %v3430, %v3451
      %v3465 = vadd.f32 %v3435, %v3451
      %v3466 = vadd.f32 %v3440, %v3451
      %v3467 = vadd.f32 %v3445, %v3451
      %v3468 = vmax.f32 %v3452, 0.0
      %v3469 = vmax.f32 %v3453, 0.0
      %v3470 = vmax.f32 %v3454, 0.0
      %v3471 = vmax.f32 %v3455, 0.0
      %v3472 = vmax.f32 %v3456, 0.0
      %v3473 = vmax.f32 %v3457, 0.0
      %v3474 = vmax.f32 %v3458, 0.0
      %v3475 = vmax.f32 %v3459, 0.0
      %v3476 = vmax.f32 %v3460, 0.0
      %v3477 = vmax.f32 %v3461, 0.0
      %v3478 = vmax.f32 %v3462, 0.0
      %v3479 = vmax.f32 %v3463, 0.0
      %v3480 = vmax.f32 %v3464, 0.0
      %v3481 = vmax.f32 %v3465, 0.0
      %v3482 = vmax.f32 %v3466, 0.0
      %v3483 = vmax.f32 %v3467, 0.0
      %v3484 = vlaneseq
      %v3485 = vshrl.u32 %v3484, 7
      %v3486 = vsub.s32 6, %v3485
      %v3487 = vrot.slane %v217, %v3486
      %vm3488 = vcmask 80896
      %v3490 = vsel %vm3488, %v3468, 0
      %v3493 = vsel %vm3488, %v3469, 0
      %v3496 = vsel %vm3488, %v3470, 0
      %v3499 = vsel %vm3488, %v3471, 0
      %v3502 = vsel %vm3488, %v3472, 0
      %v3505 = vsel %vm3488, %v3473, 0
      %v3508 = vsel %vm3488, %v3474, 0
      %v3511 = vsel %vm3488, %v3475, 0
      %v3514 = vsel %vm3488, %v3476, 0
      %v3517 = vsel %vm3488, %v3477, 0
      %v3520 = vsel %vm3488, %v3478, 0
      %v3523 = vsel %vm3488, %v3479, 0
      %v3526 = vsel %vm3488, %v3480, 0
      %v3529 = vsel %vm3488, %v3481, 0
      %v3532 = vsel %vm3488, %v3482, 0
      %v3535 = vsel %vm3488, %v3483, 0
      %vm3537 = vcmask 1041408
      %v3539 = vsel %vm3537, %v227, 0
      %3541 = vmatprep.subr.mxu0 0.0
      %3542 = vmatpush1.msra.mxu0 %v226
      %3543 = vmatprep.subr.mxu0 0.0
      %3544 = vmatpush1.msra.mxu0 %v3539
      %3545 = vmatprep.subr.mxu0 0.0
      %3546 = vmatpush1.msra.mxu0 0.0
      %3547 = vmatprep.subr.mxu0 0.0
      %3548 = vmatpush1.msra.mxu0 0.0
      %3549 = vmatprep.subr.mxu0 0.0
      %3550 = vmatpush1.msra.mxu0 0.0
      %3551 = vmatprep.subr.mxu0 0.0
      %3552 = vmatpush1.msra.mxu0 0.0
      %3553 = vmatprep.subr.mxu0 0.0
      %3554 = vmatpush1.msra.mxu0 0.0
      %3555 = vmatprep.subr.mxu0 0.0
      %3556 = vmatpush1.msra.mxu0 0.0
      %3557 = vmatprep.subr.mxu0 0.0
      %3558 = vmatpush1.msra.mxu0 0.0
      %3559 = vmatprep.subr.mxu0 0.0
      %3560 = vmatpush1.msra.mxu0 0.0
      %3561 = vmatprep.subr.mxu0 0.0
      %3562 = vmatpush1.msra.mxu0 0.0
      %3563 = vmatprep.subr.mxu0 0.0
      %3564 = vmatpush1.msra.mxu0 0.0
      %3565 = vmatprep.subr.mxu0 0.0
      %3566 = vmatpush1.msra.mxu0 0.0
      %3567 = vmatprep.subr.mxu0 0.0
      %3568 = vmatpush1.msra.mxu0 0.0
      %3569 = vmatprep.subr.mxu0 0.0
      %3570 = vmatpush1.msra.mxu0 0.0
      %3571 = vmatprep.subr.mxu0 0.0
      %3572 = vmatpush1.msra.mxu0 0.0
      %3573 = vmatprep.subr.mxu0 0.0
      %3574 = vmatpush1.msra.mxu0 0.0
      %3575 = vmatprep.subr.mxu0 0.0
      %3576 = vmatpush1.msra.mxu0 0.0
      %3577 = vmatprep.subr.mxu0 0.0
      %3578 = vmatpush1.msra.mxu0 0.0
      %3579 = vmatprep.subr.mxu0 0.0
      %3580 = vmatpush1.msra.mxu0 0.0
      %3581 = vmatprep.subr.mxu0 0.0
      %3582 = vmatpush1.msra.mxu0 0.0
      %3583 = vmatprep.subr.mxu0 0.0
      %3584 = vmatpush1.msra.mxu0 0.0
      %3585 = vmatprep.subr.mxu0 0.0
      %3586 = vmatpush1.msra.mxu0 0.0
      %3587 = vmatprep.subr.mxu0 0.0
      %3588 = vmatpush1.msra.mxu0 0.0
      %3589 = vmatprep.subr.mxu0 0.0
      %3590 = vmatpush1.msra.mxu0 0.0
      %3591 = vmatprep.subr.mxu0 0.0
      %3592 = vmatpush1.msra.mxu0 0.0
      %3593 = vmatprep.subr.mxu0 0.0
      %3594 = vmatpush1.msra.mxu0 0.0
      %3595 = vmatprep.subr.mxu0 0.0
      %3596 = vmatpush1.msra.mxu0 0.0
      %3597 = vmatprep.subr.mxu0 0.0
      %3598 = vmatpush1.msra.mxu0 0.0
      %3599 = vmatprep.subr.mxu0 0.0
      %3600 = vmatpush1.msra.mxu0 0.0
      %3601 = vmatprep.subr.mxu0 0.0
      %3602 = vmatpush1.msra.mxu0 0.0
      %3603 = vmatprep.subr.mxu0 0.0
      %3604 = vmatpush1.msra.mxu0 0.0
      %3605 = vmatprep.mubr.f32.mxu0 0.0
      %3606 = vmatmul.mubr.f32.gmra.mrb[0].mxu0 %v3490
      %v3607 = vpop.f32.mrb[0].mxu0
      %v3608 = vadd.f32 %v3487, %v3607
      %v3609 = vpop.f32.mrb[0].mxu0
      %3610 = vmatprep.mubr.f32.mxu0 0.0
      %3611 = vmatmul.mubr.f32.gmra.mrb[0].mxu0 %v3493
      %v3612 = vpop.f32.mrb[0].mxu0
      %v3613 = vadd.f32 %v3487, %v3612
      %v3614 = vpop.f32.mrb[0].mxu0
      %3615 = vmatprep.mubr.f32.mxu0 0.0
      %3616 = vmatmul.mubr.f32.gmra.mrb[0].mxu0 %v3496
      %v3617 = vpop.f32.mrb[0].mxu0
      %v3618 = vadd.f32 %v3487, %v3617
      %v3619 = vpop.f32.mrb[0].mxu0
      %3620 = vmatprep.mubr.f32.mxu0 0.0
      %3621 = vmatmul.mubr.f32.gmra.mrb[0].mxu0 %v3499
      %v3622 = vpop.f32.mrb[0].mxu0
      %v3623 = vadd.f32 %v3487, %v3622
      %v3624 = vpop.f32.mrb[0].mxu0
      %3625 = vmatprep.mubr.f32.mxu0 0.0
      %3626 = vmatmul.mubr.f32.gmra.mrb[0].mxu0 %v3502
      %v3627 = vpop.f32.mrb[0].mxu0
      %v3628 = vadd.f32 %v3487, %v3627
      %v3629 = vpop.f32.mrb[0].mxu0
      %3630 = vmatprep.mubr.f32.mxu0 0.0
      %3631 = vmatmul.mubr.f32.gmra.mrb[0].mxu0 %v3505
      %v3632 = vpop.f32.mrb[0].mxu0
      %v3633 = vadd.f32 %v3487, %v3632
      %v3634 = vpop.f32.mrb[0].mxu0
      %3635 = vmatprep.mubr.f32.mxu0 0.0
      %3636 = vmatmul.mubr.f32.gmra.mrb[0].mxu0 %v3508
      %v3637 = vpop.f32.mrb[0].mxu0
      %v3638 = vadd.f32 %v3487, %v3637
      %v3639 = vpop.f32.mrb[0].mxu0
      %3640 = vmatprep.mubr.f32.mxu0 0.0
      %3641 = vmatmul.mubr.f32.gmra.mrb[0].mxu0 %v3511
      %v3642 = vpop.f32.mrb[0].mxu0
      %v3643 = vadd.f32 %v3487, %v3642
      %v3644 = vpop.f32.mrb[0].mxu0
      %3645 = vmatprep.mubr.f32.mxu0 0.0
      %3646 = vmatmul.mubr.f32.gmra.mrb[0].mxu0 %v3514
      %v3647 = vpop.f32.mrb[0].mxu0
      %v3648 = vadd.f32 %v3487, %v3647
      %v3649 = vpop.f32.mrb[0].mxu0
      %3650 = vmatprep.mubr.f32.mxu0 0.0
      %3651 = vmatmul.mubr.f32.gmra.mrb[0].mxu0 %v3517
      %v3652 = vpop.f32.mrb[0].mxu0
      %v3653 = vadd.f32 %v3487, %v3652
      %v3654 = vpop.f32.mrb[0].mxu0
      %3655 = vmatprep.mubr.f32.mxu0 0.0
      %3656 = vmatmul.mubr.f32.gmra.mrb[0].mxu0 %v3520
      %v3657 = vpop.f32.mrb[0].mxu0
      %v3658 = vadd.f32 %v3487, %v3657
      %v3659 = vpop.f32.mrb[0].mxu0
      %3660 = vmatprep.mubr.f32.mxu0 0.0
      %3661 = vmatmul.mubr.f32.gmra.mrb[0].mxu0 %v3523
      %v3662 = vpop.f32.mrb[0].mxu0
      %v3663 = vadd.f32 %v3487, %v3662
      %v3664 = vpop.f32.mrb[0].mxu0
      %3665 = vmatprep.mubr.f32.mxu0 0.0
      %3666 = vmatmul.mubr.f32.gmra.mrb[0].mxu0 %v3526
      %v3667 = vpop.f32.mrb[0].mxu0
      %v3668 = vadd.f32 %v3487, %v3667
      %v3669 = vpop.f32.mrb[0].mxu0
      %3670 = vmatprep.mubr.f32.mxu0 0.0
      %3671 = vmatmul.mubr.f32.gmra.mrb[0].mxu0 %v3529
      %v3672 = vpop.f32.mrb[0].mxu0
      %v3673 = vadd.f32 %v3487, %v3672
      %v3674 = vpop.f32.mrb[0].mxu0
      %3675 = vmatprep.mubr.f32.mxu0 0.0
      %3676 = vmatmul.mubr.f32.gmra.mrb[0].mxu0 %v3532
      %v3677 = vpop.f32.mrb[0].mxu0
      %v3678 = vadd.f32 %v3487, %v3677
      %v3679 = vpop.f32.mrb[0].mxu0
      %3680 = vmatprep.mubr.f32.mxu0 0.0
      %3681 = vmatmul.mubr.f32.gmra.mrb[0].mxu0 %v3535
      %v3682 = vpop.f32.mrb[0].mxu0
      %v3683 = vadd.f32 %v3487, %v3682
      %v3684 = vpop.f32.mrb[0].mxu0
      %3685 = vdwg.mxu0
      %vm3686 = vcmask 195584
      %v3687 = vsel %vm3686, %v3608, -inf
      %3688 = vmax.xlane.f32.xlu0 %v3687
      %v3689 = vpop.xlane.xlu0 %3688
      %v3690 = vsel %vm3686, %v3613, -inf
      %3691 = vmax.xlane.f32.xlu0 %v3690
      %v3692 = vpop.xlane.xlu0 %3691
      %v3693 = vsel %vm3686, %v3618, -inf
      %3694 = vmax.xlane.f32.xlu0 %v3693
      %v3695 = vpop.xlane.xlu0 %3694
      %v3696 = vsel %vm3686, %v3623, -inf
      %3697 = vmax.xlane.f32.xlu0 %v3696
      %v3698 = vpop.xlane.xlu0 %3697
      %v3699 = vsel %vm3686, %v3628, -inf
      %3700 = vmax.xlane.f32.xlu0 %v3699
      %v3701 = vpop.xlane.xlu0 %3700
      %v3702 = vsel %vm3686, %v3633, -inf
      %3703 = vmax.xlane.f32.xlu0 %v3702
      %v3704 = vpop.xlane.xlu0 %3703
      %v3705 = vsel %vm3686, %v3638, -inf
      %3706 = vmax.xlane.f32.xlu0 %v3705
      %v3707 = vpop.xlane.xlu0 %3706
      %v3708 = vsel %vm3686, %v3643, -inf
      %3709 = vmax.xlane.f32.xlu0 %v3708
      %v3710 = vpop.xlane.xlu0 %3709
      %v3711 = vsel %vm3686, %v3648, -inf
      %3712 = vmax.xlane.f32.xlu0 %v3711
      %v3713 = vpop.xlane.xlu0 %3712
      %v3714 = vsel %vm3686, %v3653, -inf
      %3715 = vmax.xlane.f32.xlu0 %v3714
      %v3716 = vpop.xlane.xlu0 %3715
      %v3717 = vsel %vm3686, %v3658, -inf
      %3718 = vmax.xlane.f32.xlu0 %v3717
      %v3719 = vpop.xlane.xlu0 %3718
      %v3720 = vsel %vm3686, %v3663, -inf
      %3721 = vmax.xlane.f32.xlu0 %v3720
      %v3722 = vpop.xlane.xlu0 %3721
      %v3723 = vsel %vm3686, %v3668, -inf
      %3724 = vmax.xlane.f32.xlu0 %v3723
      %v3725 = vpop.xlane.xlu0 %3724
      %v3726 = vsel %vm3686, %v3673, -inf
      %3727 = vmax.xlane.f32.xlu0 %v3726
      %v3728 = vpop.xlane.xlu0 %3727
      %v3729 = vsel %vm3686, %v3678, -inf
      %3730 = vmax.xlane.f32.xlu0 %v3729
      %v3731 = vpop.xlane.xlu0 %3730
      %v3732 = vsel %vm3686, %v3683, -inf
      %3733 = vmax.xlane.f32.xlu0 %v3732
      %v3734 = vpop.xlane.xlu0 %3733
      %v3735 = vsub.f32 %v3608, %v3689
      %v3736 = vsub.f32 %v3613, %v3692
      %v3737 = vsub.f32 %v3618, %v3695
      %v3738 = vsub.f32 %v3623, %v3698
      %v3739 = vsub.f32 %v3628, %v3701
      %v3740 = vsub.f32 %v3633, %v3704
      %v3741 = vsub.f32 %v3638, %v3707
      %v3742 = vsub.f32 %v3643, %v3710
      %v3743 = vsub.f32 %v3648, %v3713
      %v3744 = vsub.f32 %v3653, %v3716
      %v3745 = vsub.f32 %v3658, %v3719
      %v3746 = vsub.f32 %v3663, %v3722
      %v3747 = vsub.f32 %v3668, %v3725
      %v3748 = vsub.f32 %v3673, %v3728
      %v3749 = vsub.f32 %v3678, %v3731
      %v3750 = vsub.f32 %v3683, %v3734
      %v3751 = vmul.f32 %v3735, 1.442695
      %v3752 = vpow.pop %v3751
      %v3753 = vmul.f32 %v3736, 1.442695
      %v3754 = vpow.pop %v3753
      %v3755 = vmul.f32 %v3737, 1.442695
      %v3756 = vpow.pop %v3755
      %v3757 = vmul.f32 %v3738, 1.442695
      %v3758 = vpow.pop %v3757
      %v3759 = vmul.f32 %v3739, 1.442695
      %v3760 = vpow.pop %v3759
      %v3761 = vmul.f32 %v3740, 1.442695
      %v3762 = vpow.pop %v3761
      %v3763 = vmul.f32 %v3741, 1.442695
      %v3764 = vpow.pop %v3763
      %v3765 = vmul.f32 %v3742, 1.442695
      %v3766 = vpow.pop %v3765
      %v3767 = vmul.f32 %v3743, 1.442695
      %v3768 = vpow.pop %v3767
      %v3769 = vmul.f32 %v3744, 1.442695
      %v3770 = vpow.pop %v3769
      %v3771 = vmul.f32 %v3745, 1.442695
      %v3772 = vpow.pop %v3771
      %v3773 = vmul.f32 %v3746, 1.442695
      %v3774 = vpow.pop %v3773
      %v3775 = vmul.f32 %v3747, 1.442695
      %v3776 = vpow.pop %v3775
      %v3777 = vmul.f32 %v3748, 1.442695
      %v3778 = vpow.pop %v3777
      %v3779 = vmul.f32 %v3749, 1.442695
      %v3780 = vpow.pop %v3779
      %v3781 = vmul.f32 %v3750, 1.442695
      %v3782 = vpow.pop %v3781
      %v3783 = vsel %vm3686, %v3752, 0.0
      %3784 = vadd.xlane.f32.xlu0 %v3783
      %v3785 = vpop.xlane.xlu0 %3784
      %v3786 = vsel %vm3686, %v3754, 0.0
      %3787 = vadd.xlane.f32.xlu0 %v3786
      %v3788 = vpop.xlane.xlu0 %3787
      %v3789 = vsel %vm3686, %v3756, 0.0
      %3790 = vadd.xlane.f32.xlu0 %v3789
      %v3791 = vpop.xlane.xlu0 %3790
      %v3792 = vsel %vm3686, %v3758, 0.0
      %3793 = vadd.xlane.f32.xlu0 %v3792
      %v3794 = vpop.xlane.xlu0 %3793
      %v3795 = vsel %vm3686, %v3760, 0.0
      %3796 = vadd.xlane.f32.xlu0 %v3795
      %v3797 = vpop.xlane.xlu0 %3796
      %v3798 = vsel %vm3686, %v3762, 0.0
      %3799 = vadd.xlane.f32.xlu0 %v3798
      %v3800 = vpop.xlane.xlu0 %3799
      %v3801 = vsel %vm3686, %v3764, 0.0
      %3802 = vadd.xlane.f32.xlu0 %v3801
      %v3803 = vpop.xlane.xlu0 %3802
      %v3804 = vsel %vm3686, %v3766, 0.0
      %3805 = vadd.xlane.f32.xlu0 %v3804
      %v3806 = vpop.xlane.xlu0 %3805
      %v3807 = vsel %vm3686, %v3768, 0.0
      %3808 = vadd.xlane.f32.xlu0 %v3807
      %v3809 = vpop.xlane.xlu0 %3808
      %v3810 = vsel %vm3686, %v3770, 0.0
      %3811 = vadd.xlane.f32.xlu0 %v3810
      %v3812 = vpop.xlane.xlu0 %3811
      %v3813 = vsel %vm3686, %v3772, 0.0
      %3814 = vadd.xlane.f32.xlu0 %v3813
      %v3815 = vpop.xlane.xlu0 %3814
      %v3816 = vsel %vm3686, %v3774, 0.0
      %3817 = vadd.xlane.f32.xlu0 %v3816
      %v3818 = vpop.xlane.xlu0 %3817
      %v3819 = vsel %vm3686, %v3776, 0.0
      %3820 = vadd.xlane.f32.xlu0 %v3819
      %v3821 = vpop.xlane.xlu0 %3820
      %v3822 = vsel %vm3686, %v3778, 0.0
      %3823 = vadd.xlane.f32.xlu0 %v3822
      %v3824 = vpop.xlane.xlu0 %3823
      %v3825 = vsel %vm3686, %v3780, 0.0
      %3826 = vadd.xlane.f32.xlu0 %v3825
      %v3827 = vpop.xlane.xlu0 %3826
      %v3828 = vsel %vm3686, %v3782, 0.0
      %3829 = vadd.xlane.f32.xlu0 %v3828
      %v3830 = vpop.xlane.xlu0 %3829
      %v3831 = vlog2.pop %v3785
      %v3832 = vmul.f32 %v3831, 0.6931472
      %v3833 = vlog2.pop %v3788
      %v3834 = vmul.f32 %v3833, 0.6931472
      %v3835 = vlog2.pop %v3791
      %v3836 = vmul.f32 %v3835, 0.6931472
      %v3837 = vlog2.pop %v3794
      %v3838 = vmul.f32 %v3837, 0.6931472
      %v3839 = vlog2.pop %v3797
      %v3840 = vmul.f32 %v3839, 0.6931472
      %v3841 = vlog2.pop %v3800
      %v3842 = vmul.f32 %v3841, 0.6931472
      %v3843 = vlog2.pop %v3803
      %v3844 = vmul.f32 %v3843, 0.6931472
      %v3845 = vlog2.pop %v3806
      %v3846 = vmul.f32 %v3845, 0.6931472
      %v3847 = vlog2.pop %v3809
      %v3848 = vmul.f32 %v3847, 0.6931472
      %v3849 = vlog2.pop %v3812
      %v3850 = vmul.f32 %v3849, 0.6931472
      %v3851 = vlog2.pop %v3815
      %v3852 = vmul.f32 %v3851, 0.6931472
      %v3853 = vlog2.pop %v3818
      %v3854 = vmul.f32 %v3853, 0.6931472
      %v3855 = vlog2.pop %v3821
      %v3856 = vmul.f32 %v3855, 0.6931472
      %v3857 = vlog2.pop %v3824
      %v3858 = vmul.f32 %v3857, 0.6931472
      %v3859 = vlog2.pop %v3827
      %v3860 = vmul.f32 %v3859, 0.6931472
      %v3861 = vlog2.pop %v3830
      %v3862 = vmul.f32 %v3861, 0.6931472
      %v3863 = vsub.f32 %v3735, %v3832
      %v3864 = vsub.f32 %v3736, %v3834
      %v3865 = vsub.f32 %v3737, %v3836
      %v3866 = vsub.f32 %v3738, %v3838
      %v3867 = vsub.f32 %v3739, %v3840
      %v3868 = vsub.f32 %v3740, %v3842
      %v3869 = vsub.f32 %v3741, %v3844
      %v3870 = vsub.f32 %v3742, %v3846
      %v3871 = vsub.f32 %v3743, %v3848
      %v3872 = vsub.f32 %v3744, %v3850
      %v3873 = vsub.f32 %v3745, %v3852
      %v3874 = vsub.f32 %v3746, %v3854
      %v3875 = vsub.f32 %v3747, %v3856
      %v3876 = vsub.f32 %v3748, %v3858
      %v3877 = vsub.f32 %v3749, %v3860
      %v3878 = vsub.f32 %v3750, %v3862
      %3879 = vst.msk [vmem:[%s199] sm:$0xff] %vm3686, %v3863
      %3880 = vst.msk [vmem:[%s199 + $0x8] sm:$0xff] %vm3686, %v3864
      %3881 = vst.msk [vmem:[%s199 + $0x10] sm:$0xff] %vm3686, %v3865
      %3882 = vst.msk [vmem:[%s199 + $0x18] sm:$0xff] %vm3686, %v3866
      %3883 = vst.msk [vmem:[%s199 + $0x20] sm:$0xff] %vm3686, %v3867
      %3884 = vst.msk [vmem:[%s199 + $0x28] sm:$0xff] %vm3686, %v3868
      %3885 = vst.msk [vmem:[%s199 + $0x30] sm:$0xff] %vm3686, %v3869
      %3886 = vst.msk [vmem:[%s199 + $0x38] sm:$0xff] %vm3686, %v3870
      %3887 = vst.msk [vmem:[%s199 + $0x40] sm:$0xff] %vm3686, %v3871
      %3888 = vst.msk [vmem:[%s199 + $0x48] sm:$0xff] %vm3686, %v3872
      %3889 = vst.msk [vmem:[%s199 + $0x50] sm:$0xff] %vm3686, %v3873
      %3890 = vst.msk [vmem:[%s199 + $0x58] sm:$0xff] %vm3686, %v3874
      %3891 = vst.msk [vmem:[%s199 + $0x60] sm:$0xff] %vm3686, %v3875
      %3892 = vst.msk [vmem:[%s199 + $0x68] sm:$0xff] %vm3686, %v3876
      %3893 = vst.msk [vmem:[%s199 + $0x70] sm:$0xff] %vm3686, %v3877
      %3894 = vst.msk [vmem:[%s199 + $0x78] sm:$0xff] %vm3686, %v3878
      %s3895 = smul.u32 16, %s15
      %p3896 = scmp.lt.s32.totalorder %s3895, 31
      %s3897 = scalar_select %p3896, %s3895, 31
      %s3898 = smul.addr %s3897, 8
      %s3899 = scalar_lea.vmem %s4, %s3898
      // Predicated region
      $region37: #{gen_arrive_forward.1} parent=35 // pred_check
        %p3900 = pneg %p122
      $region38: #{gen_arrive_forward.1} parent=35 // pred_check_branch
        %3902 = sbr.rel (%p3900) target = $region40
      $region39: #{gen_arrive_forward.1} parent=35 // pred_region
        %s3903 = smul.u32 16, %s15
      $region40: #{gen_arrive_forward.1} parent=35 // pred_fallthru
        _
    $region36: #{gen_arrive_forward.1} parent=5 // pred_fallthru
      _
    %p3904 = scmp.le.s32.totalorder 2, %s10
    // Predicated region
    $region41: #{gen_arrive_forward.1} parent=5 // pred_check
      %p3905 = pneg %p3904
    $region42: #{gen_arrive_forward.1} parent=5 // pred_check_branch
      %3907 = sbr.rel (%p3905) target = $region44
    $region43: #{gen_arrive_forward.1} parent=5 // pred_region
      %s3908 = ssub.s32 %s10, 2
      // Predicated region
      $region45: #{gen_arrive_forward.1} parent=43 // pred_check
        %p3909 = pneg %p128
      $region46: #{gen_arrive_forward.1} parent=43 // pred_check_branch
        %3911 = sbr.rel (%p3909) target = $region48
      $region47: #{gen_arrive_forward.1} parent=43 // pred_region
        %s3912 = smul.u32 16, %s16
        %p3913 = scmp.lt.s32.totalorder %s3912, 31
        %s3914 = scalar_select %p3913, %s3912, 31
        %s3915 = smul.addr %s3914, 8
        %s3916 = scalar_lea.vmem %s4, %s3915
      $region48: #{gen_arrive_forward.1} parent=43 // pred_fallthru
        _
    $region44: #{gen_arrive_forward.1} parent=5 // pred_fallthru
      _
  $region6: #{gen_arrive_forward.1} parent=0 // loop_footer
    %s14 = sadd.s32 1, %s10
  $region7: #{gen_arrive_forward.1} parent=0 // loop_footer_branch
    %9 = sbr.rel target = $region3
  $region8: #{gen_arrive_forward.1} parent=0 // loop_exit
    _

</llo_original>
